<compile_context>
chip_gen: v6e
topology: v6e:2x2x1
jax: 0.10.0
libtpu: 0.0.40
codegen_flags: <defaults>
</compile_context>

<pallas_src>
import functools

import jax
import jax.numpy as jnp
import numpy as np
from jax import lax
from jax.experimental import pallas as pl
from jax.experimental.pallas import tpu as pltpu


def _lrelu(x):
    # nn.LeakyReLU default negative_slope = 0.01
    return jnp.where(x >= 0, x, 0.01 * x)


def widedeep_kernel(
        # batched inputs
        xw_ref, xd_ref, xr_ref, len_ref,
        # wide branch
        v2d_ref, v2dsq_ref, gmat_ref, waff_ref, baff_ref,
        # deep branch
        w1_ref, b1_ref, w2_ref, b2_ref, w3_ref, b3_ref,
        # rnn fc
        wf_ref, bf_ref,
        # GRU (fused): layer-0 input gates, block-diag recurrent, layer-1 input gates
        wih0_ref, bi0_ref, wrec_ref, brec_ref, wih1_ref, bi1n_ref,
        # regression head (concat == sum of split matmuls)
        wrw_ref, wrd_ref, wrr_ref, br_ref,
        # output
        out_ref,
        # scratch: fused layer-0 input-gate pre-activations, (S*TB, 3H)
        gi0_scr,
        *, S, TB, H):
    f32 = jnp.float32
    dot = lambda a, b: jnp.dot(a, b, preferred_element_type=f32)

    # ---------------- Wide branch: FM cross products (CPLayer) + affine ----------------
    # v2d[d, h*k + j] = V[h, d, j]; gmat[h*k + j, h] = 1 sums the k columns of each CP.
    # NOTE: a*a - dot(xw*xw, v2dsq) subtracts nearly-equal quantities under default MXU
    # (bf16-rounded) precision; fine at these sizes, revisit for large in_wide/v_wide.
    xw = xw_ref[...]
    a = dot(xw, v2d_ref[...])                                   # (TB, Hw*k)
    term = a * a - dot(xw * xw, v2dsq_ref[...])                 # v2d**2 precomputed host-side
    cp = 0.5 * dot(term, gmat_ref[...])                         # (TB, Hw)
    wide_out = dot(cp, waff_ref[...]) + baff_ref[...]           # (TB, out_wide)

    # ---------------- Deep branch: 3 Linear layers + LeakyReLU + residuals ----------------
    h = _lrelu(dot(xd_ref[...], w1_ref[...]) + b1_ref[...])
    h = _lrelu(dot(h, w2_ref[...]) + b2_ref[...] + h)
    h = _lrelu(dot(h, w3_ref[...]) + b3_ref[...] + h)           # requires out_deep == hidden_deep
    deep_out = h

    # ---------------- RNN branch: fc + LeakyReLU + 2-layer GRU with length masking ----------------
    # Batched non-recurrent projections: xr_ref rows are ordered (t, local_batch) host-side, so
    # the rnn fc and the GRU layer-0 input gates are single big matmuls written to scratch; only
    # the two fused recurrent matmuls stay on the sequential critical path.
    xt_all = _lrelu(dot(xr_ref[...], wf_ref[...]) + bf_ref[...])          # (S*TB, H)
    gi0_scr[...] = dot(xt_all, wih0_ref[...]) + bi0_ref[...]              # (S*TB, 3H); r/z biases
    #                                                                     #  fully folded, n: bih0_n

    # Hoisted loop invariants: a handful of small (<=4-vreg) weight/bias tiles, no (TB, .) bloat.
    wrec = wrec_ref[...]                                        # (2H, 6H) block-diag [Whh0 | Whh1]
    brec = brec_ref[...]                                        # (1, 6H)  [0, 0, bhh0_n, b1rz..., bhh1_n]
    wih1 = wih1_ref[...]                                        # (H, 3H)
    bi1n = bi1n_ref[...]                                        # (1, H)   bih1_n
    lens = len_ref[...]                                         # (TB, 1) int32

    H2, H3, H5 = 2 * H, 3 * H, 5 * H

    def step(t, carry):
        h0, h1 = carry
        start = t * TB
        if not isinstance(start, int) and TB % 8 == 0:
            start = pl.multiple_of(start, 8)                    # aligned sublane offset hint
        gi0 = gi0_scr[pl.ds(start, TB), :]                      # (TB, 3H)

        # One fused recurrent matmul for both layers (previous-step carries only).
        gh = dot(jnp.concatenate([h0, h1], axis=-1), wrec) + brec   # (TB, 6H)

        # GRU layer 0 (gate order r, z, n; r/z sigmoid fused over 2H lanes).
        rz0 = jax.nn.sigmoid(gi0[:, :H2] + gh[:, :H2])
        r0, z0 = rz0[:, :H], rz0[:, H:]
        n0 = jnp.tanh(gi0[:, H2:] + r0 * gh[:, H2:H3])          # gh n-slice carries bhh0_n
        h0_new = (1.0 - z0) * n0 + z0 * h0

        # TODO(synk): GRU inter-layer dropout (p=0.3) is train-mode only; eval semantics here.
        # GRU layer 1 (input = layer-0 output; one fused input-gate matmul).
        gi1 = dot(h0_new, wih1)                                 # (TB, 3H)
        rz1 = jax.nn.sigmoid(gi1[:, :H2] + gh[:, H3:H5])        # gh carries bih1_r+bhh1_r, ...z
        r1, z1 = rz1[:, :H], rz1[:, H:]
        n1 = jnp.tanh(gi1[:, H2:] + bi1n + r1 * gh[:, H5:])     # gh n-slice carries bhh1_n
        h1_new = (1.0 - z1) * n1 + z1 * h1

        # pack_padded_sequence semantics: freeze rows whose sequence already ended.
        live = t < lens                                         # (TB, 1) bool
        return (jnp.where(live, h0_new, h0), jnp.where(live, h1_new, h1))

    h0 = jnp.zeros((TB, H), f32)
    h1 = jnp.zeros((TB, H), f32)
    if S <= 32:
        # Full static unroll: lets the scheduler overlap MXU pushes with EUP sigmoid/tanh work.
        for t in range(S):
            h0, h1 = step(t, (h0, h1))
    else:
        h0, h1 = lax.fori_loop(0, S, step, (h0, h1), unroll=4)
    rnn_out = h1                                                # h_n[-1] (top GRU layer)

    # ---------------- Regression head: concat == sum of split matmuls ----------------
    out_ref[...] = (dot(wide_out, wrw_ref[...]) + dot(deep_out, wrd_ref[...])
                    + dot(rnn_out, wrr_ref[...]) + br_ref[...])


def _pick_tb(batch, seq):
    """Batch tile choice.

    * whole batch if tiny (grid=1);
    * otherwise the largest sublane-aligned divisor of B that (a) leaves >= 2 grid tiles so
      v7x's two TensorCores both get work under dimension_semantics=("parallel",), and
      (b) keeps the lane-padded (S*TB, .) xr slab + fused gi0 scratch within a conservative
      VMEM budget (each costs ~S*TB*512 B because narrow features pad to 128 lanes).
    """
    if batch < 16:
        return batch
    budget_rows = (24 << 20) // (512 * 3)           # ~3 lane-padded slabs, < v7x 32 MiB scoped
    cap = max(8, min(512, budget_rows // max(seq, 1)))
    cap = min(cap, batch // 2)                      # >= 2 tiles for dual-TC sharding
    cap -= cap % 8
    for tb in range(cap, 7, -8):
        if batch % tb == 0:
            return tb
    # TODO(synk): batches with no multiple-of-8 divisor fall back to a single (possibly large,
    # sublane-unaligned) tile; a padding path would be needed for such shapes.
    return batch


def init_params(key, in_wide, in_deep, in_rnn, v_wide, hidden_wide, hidden_deep,
                out_wide, out_deep, out_rnn):
    assert out_deep == hidden_deep, "DeepNet residual requires out_deep == hidden_deep"
    ks = iter(jax.random.split(key, 24))

    def rnd(shape, scale):
        return jax.random.normal(next(ks), shape, jnp.float32) * scale

    H = out_rnn
    return dict(
        V=rnd((hidden_wide, in_wide, v_wide), 1.0 / np.sqrt(v_wide)),
        Waff=rnd((out_wide, hidden_wide), 0.3), baff=rnd((out_wide,), 0.1),
        W1=rnd((hidden_deep, in_deep), 0.3), b1=rnd((hidden_deep,), 0.1),
        W2=rnd((hidden_deep, hidden_deep), 0.3), b2=rnd((hidden_deep,), 0.1),
        W3=rnd((out_deep, hidden_deep), 0.3), b3=rnd((out_deep,), 0.1),
        Wf=rnd((H, in_rnn), 0.3), bf=rnd((H,), 0.1),
        Wih0=rnd((3 * H, H), 0.3), Whh0=rnd((3 * H, H), 0.3),
        bih0=rnd((3 * H,), 0.1), bhh0=rnd((3 * H,), 0.1),
        Wih1=rnd((3 * H, H), 0.3), Whh1=rnd((3 * H, H), 0.3),
        bih1=rnd((3 * H,), 0.1), bhh1=rnd((3 * H,), 0.1),
        Wr=rnd((1, out_wide + out_deep + H), 0.3), br=rnd((1,), 0.1),
    )


def widedeep_forward_pallas(params, x_wide, x_deep, x_rnn, lengths):
    f32 = jnp.float32
    Hw, in_w, k = params["V"].shape
    S, B, in_r = x_rnn.shape
    H = params["Wf"].shape[0]
    out_w = params["Waff"].shape[0]
    hidden_d = params["W1"].shape[0]
    out_d = params["W3"].shape[0]
    in_d = x_deep.shape[1]
    assert out_d == hidden_d, "DeepNet residual requires out_deep == hidden_deep"

    TB = _pick_tb(B, S)
    nb = B // TB
    assert nb * TB == B

    # ----- wide branch params: V -> (in_w, Hw*k), its square, and the per-CP group-sum matrix -----
    v2d = jnp.transpose(params["V"], (1, 0, 2)).reshape(in_w, Hw * k)
    v2d_sq = v2d * v2d
    gmat = jnp.repeat(jnp.eye(Hw, dtype=f32), k, axis=0)                  # (Hw*k, Hw)

    # ----- GRU params: fused gate weights, gate order [r, z, n] along the lane axis -----
    wih0_t = params["Wih0"].T                                             # (H, 3H)
    wih1_t = params["Wih1"].T                                             # (H, 3H)
    # Block-diagonal recurrent weight: one dot(concat([h0, h1]), w_rec) covers both layers.
    w_rec = jnp.zeros((2 * H, 6 * H), f32)
    w_rec = w_rec.at[:H, :3 * H].set(params["Whh0"].T)
    w_rec = w_rec.at[H:, 3 * H:].set(params["Whh1"].T)

    def gate_b(b):        # (3H,) -> r, z, n slices
        return b[:H], b[H:2 * H], b[2 * H:]

    bih0_r, bih0_z, bih0_n = gate_b(params["bih0"])
    bhh0_r, bhh0_z, bhh0_n = gate_b(params["bhh0"])
    bih1_r, bih1_z, bih1_n = gate_b(params["bih1"])
    bhh1_r, bhh1_z, bhh1_n = gate_b(params["bhh1"])
    # Layer-0 input-gate bias (goes into the precomputed gi0 slab): r/z folded, n keeps bih0_n.
    bi0 = jnp.concatenate([bih0_r + bhh0_r, bih0_z + bhh0_z, bih0_n])[None, :]      # (1, 3H)
    # Recurrent-side bias row for the block-diagonal matmul:
    #   layer-0 r/z: 0 (already in gi0);  layer-0 n: bhh0_n (must sit inside r0 * (.));
    #   layer-1 r/z: bih1_* + bhh1_*;     layer-1 n: bhh1_n (inside r1 * (.)).
    b_rec = jnp.concatenate([jnp.zeros(2 * H, f32), bhh0_n,
                             bih1_r + bhh1_r, bih1_z + bhh1_z, bhh1_n])[None, :]    # (1, 6H)
    bi1n = bih1_n[None, :]                                                          # (1, H)

    # ----- regression head split (concat == sum of per-branch matmuls) -----
    Wr = params["Wr"]
    wrw_t = Wr[:, :out_w].T
    wrd_t = Wr[:, out_w:out_w + out_d].T
    wrr_t = Wr[:, out_w + out_d:].T

    # ----- batched inputs -----
    # RNN input rearranged per batch tile into a (S*TB, in_r) slab with rows ordered
    # (t, local_batch) so the in-kernel projection is one lane-dense matmul (no in-kernel reshape).
    xr_flat = (x_rnn.astype(f32)
               .reshape(S, nb, TB, in_r)
               .transpose(1, 0, 2, 3)
               .reshape(nb, S * TB, in_r))
    # NOTE: assumes 0 <= lengths[b] <= S (PyTorch's pack_padded_sequence requires >= 1).
    lens2d = lengths.astype(jnp.int32).reshape(B, 1)

    args = (
        x_wide.astype(f32), x_deep.astype(f32), xr_flat, lens2d,
        v2d, v2d_sq, gmat, params["Waff"].T, params["baff"][None, :],
        params["W1"].T, params["b1"][None, :],
        params["W2"].T, params["b2"][None, :],
        params["W3"].T, params["b3"][None, :],
        params["Wf"].T, params["bf"][None, :],
        wih0_t, bi0, w_rec, b_rec, wih1_t, bi1n,
        wrw_t, wrd_t, wrr_t, params["br"][None, :],
    )

    bmap = lambda b: (b, 0)          # batch-blocked 2-D operands
    w2 = lambda b: (0, 0)            # replicated 2-D weights (stay VMEM-resident across grid)
    in_specs = [
        pl.BlockSpec((TB, in_w), bmap),                            # x_wide
        pl.BlockSpec((TB, in_d), bmap),                            # x_deep
        pl.BlockSpec((None, S * TB, in_r), lambda b: (b, 0, 0)),   # x_rnn slab (tile dim squeezed)
        pl.BlockSpec((TB, 1), bmap),                               # lengths
        pl.BlockSpec((in_w, Hw * k), w2),                          # v2d
        pl.BlockSpec((in_w, Hw * k), w2),                          # v2d**2
        pl.BlockSpec((Hw * k, Hw), w2),                            # gmat
        pl.BlockSpec((Hw, out_w), w2),                             # Waff^T
        pl.BlockSpec((1, out_w), w2),                              # baff
        pl.BlockSpec((in_d, hidden_d), w2),                        # W1^T
        pl.BlockSpec((1, hidden_d), w2),
        pl.BlockSpec((hidden_d, hidden_d), w2),                    # W2^T
        pl.BlockSpec((1, hidden_d), w2),
        pl.BlockSpec((hidden_d, out_d), w2),                       # W3^T
        pl.BlockSpec((1, out_d), w2),
        pl.BlockSpec((in_r, H), w2),                               # Wf^T
        pl.BlockSpec((1, H), w2),
        pl.BlockSpec((H, 3 * H), w2),                              # Wih0^T (fused gates)
        pl.BlockSpec((1, 3 * H), w2),                              # layer-0 folded input biases
        pl.BlockSpec((2 * H, 6 * H), w2),                          # block-diag recurrent weights
        pl.BlockSpec((1, 6 * H), w2),                              # recurrent-side fused biases
        pl.BlockSpec((H, 3 * H), w2),                              # Wih1^T (fused gates)
        pl.BlockSpec((1, H), w2),                                  # bih1_n
        pl.BlockSpec((out_w, 1), w2),                              # head: wide slice of Wr^T
        pl.BlockSpec((out_d, 1), w2),                              # head: deep slice
        pl.BlockSpec((H, 1), w2),                                  # head: rnn slice
        pl.BlockSpec((1, 1), w2),                                  # head bias
    ]

    kernel = functools.partial(widedeep_kernel, S=S, TB=TB, H=H)
    return pl.pallas_call(
        kernel,
        out_shape=jax.ShapeDtypeStruct((B, 1), f32),
        grid=(nb,),
        in_specs=in_specs,
        out_specs=pl.BlockSpec((TB, 1), bmap),
        scratch_shapes=[pltpu.VMEM((S * TB, 3 * H), f32)],
        compiler_params=pltpu.CompilerParams(dimension_semantics=("parallel",)),
    )(*args)


def widedeep_forward_ref(params, x_wide, x_deep, x_rnn, lengths):
    """Pure-JAX reference mirroring the PyTorch forward (eval semantics)."""
    V = params["V"]
    Hw = V.shape[0]
    H = params["Wf"].shape[0]
    S, B, _ = x_rnn.shape

    # Wide
    cols = []
    for h in range(Hw):
        e = x_wide[:, :, None] * V[h][None, :, :]
        sos = jnp.sum(e, axis=1) ** 2
        ssq = jnp.sum(e ** 2, axis=1)
        cols.append(0.5 * jnp.sum(sos - ssq, axis=1, keepdims=True))
    cp = jnp.concatenate(cols, axis=-1)
    wide_out = cp @ params["Waff"].T + params["baff"]

    # Deep
    h = _lrelu(x_deep @ params["W1"].T + params["b1"])
    h = _lrelu(h @ params["W2"].T + params["b2"] + h)
    h = _lrelu(h @ params["W3"].T + params["b3"] + h)
    deep_out = h

    # RNN
    def cell(x, hp, Wih, Whh, bih, bhh):
        gi = x @ Wih.T + bih
        gh = hp @ Whh.T + bhh
        r = jax.nn.sigmoid(gi[:, :H] + gh[:, :H])
        z = jax.nn.sigmoid(gi[:, H:2 * H] + gh[:, H:2 * H])
        n = jnp.tanh(gi[:, 2 * H:] + r * gh[:, 2 * H:])
        return (1 - z) * n + z * hp

    h0 = jnp.zeros((B, H), jnp.float32)
    h1 = jnp.zeros((B, H), jnp.float32)
    for t in range(S):
        xt = _lrelu(x_rnn[t] @ params["Wf"].T + params["bf"])
        h0n = cell(xt, h0, params["Wih0"], params["Whh0"], params["bih0"], params["bhh0"])
        h1n = cell(h0n, h1, params["Wih1"], params["Whh1"], params["bih1"], params["bhh1"])
        m = (t < lengths).astype(jnp.float32)[:, None]
        h0 = m * h0n + (1 - m) * h0
        h1 = m * h1n + (1 - m) * h1
    rnn_out = h1

    x = jnp.concatenate([wide_out, deep_out, rnn_out], axis=-1)
    return x @ params["Wr"].T + params["br"]


if __name__ == "__main__":
    B, S = 2, 8
    in_wide, v_wide, hidden_wide, out_wide = 8, 4, 16, 8
    in_deep, hidden_deep, out_deep = 16, 32, 32     # DeepNet residual needs out_deep == hidden_deep
    in_rnn, out_rnn = 8, 16

    key = jax.random.PRNGKey(0)
    kp, kw, kd, kr = jax.random.split(key, 4)
    params = init_params(kp, in_wide, in_deep, in_rnn, v_wide, hidden_wide,
                         hidden_deep, out_wide, out_deep, out_rnn)

    x_wide = jax.random.normal(kw, (B, in_wide), jnp.float32)
    x_deep = jax.random.normal(kd, (B, in_deep), jnp.float32)
    x_rnn = jax.random.normal(kr, (S, B, in_rnn), jnp.float32)
    lengths = jnp.array([8, 5], dtype=jnp.int32)    # descending, as pack_padded_sequence requires
    assert int(lengths.min()) >= 1 and int(lengths.max()) <= S

    out = widedeep_forward_pallas(params, x_wide, x_deep, x_rnn, lengths)
    out = jax.block_until_ready(out)
    assert out.shape == (B, 1)

    ref = widedeep_forward_ref(params, x_wide, x_deep, x_rnn, lengths)
    np.testing.assert_allclose(np.asarray(out), np.asarray(ref), rtol=2e-3, atol=2e-3)

    print("KERNEL_OK")
</pallas_src>

<mosaic_0001>
module attributes {stable_mosaic.version = 11 : i64} {
  func.func @widedeep_kernel(%arg0: i32, %arg1: memref<2x8xf32, #tpu.memory_space<vmem>>, %arg2: memref<2x16xf32, #tpu.memory_space<vmem>>, %arg3: memref<1x16x8xf32, #tpu.memory_space<vmem>>, %arg4: memref<2x1xi32, #tpu.memory_space<vmem>>, %arg5: memref<8x64xf32, #tpu.memory_space<vmem>>, %arg6: memref<8x64xf32, #tpu.memory_space<vmem>>, %arg7: memref<64x16xf32, #tpu.memory_space<vmem>>, %arg8: memref<16x8xf32, #tpu.memory_space<vmem>>, %arg9: memref<1x8xf32, #tpu.memory_space<vmem>>, %arg10: memref<16x32xf32, #tpu.memory_space<vmem>>, %arg11: memref<1x32xf32, #tpu.memory_space<vmem>>, %arg12: memref<32x32xf32, #tpu.memory_space<vmem>>, %arg13: memref<1x32xf32, #tpu.memory_space<vmem>>, %arg14: memref<32x32xf32, #tpu.memory_space<vmem>>, %arg15: memref<1x32xf32, #tpu.memory_space<vmem>>, %arg16: memref<8x16xf32, #tpu.memory_space<vmem>>, %arg17: memref<1x16xf32, #tpu.memory_space<vmem>>, %arg18: memref<16x48xf32, #tpu.memory_space<vmem>>, %arg19: memref<1x48xf32, #tpu.memory_space<vmem>>, %arg20: memref<32x96xf32, #tpu.memory_space<vmem>>, %arg21: memref<1x96xf32, #tpu.memory_space<vmem>>, %arg22: memref<16x48xf32, #tpu.memory_space<vmem>>, %arg23: memref<1x16xf32, #tpu.memory_space<vmem>>, %arg24: memref<8x1xf32, #tpu.memory_space<vmem>>, %arg25: memref<32x1xf32, #tpu.memory_space<vmem>>, %arg26: memref<16x1xf32, #tpu.memory_space<vmem>>, %arg27: memref<1x1xf32, #tpu.memory_space<vmem>>, %arg28: memref<2x1xf32, #tpu.memory_space<vmem>>, %arg29: memref<16x48xf32, #tpu.memory_space<vmem>>) attributes {dimension_semantics = [#tpu.dimension_semantics<parallel>], iteration_bounds = array<i64: 1>, scalar_prefetch = 0 : i64, scratch_operands = 1 : i64, tpu.core_type = #tpu.core_type<tc>, window_params = [{transform_indices = @transform_0, window_bounds = array<i64: 2, 8>}, {transform_indices = @transform_1, window_bounds = array<i64: 2, 16>}, {transform_indices = @transform_2, window_bounds = array<i64: 1, 16, 8>}, {transform_indices = @transform_3, window_bounds = array<i64: 2, 1>}, {pipeline_mode = #tpu.pipeline_mode<synchronous>, transform_indices = @transform_4, window_bounds = array<i64: 8, 64>}, {pipeline_mode = #tpu.pipeline_mode<synchronous>, transform_indices = @transform_5, window_bounds = array<i64: 8, 64>}, {pipeline_mode = #tpu.pipeline_mode<synchronous>, transform_indices = @transform_6, window_bounds = array<i64: 64, 16>}, {pipeline_mode = #tpu.pipeline_mode<synchronous>, transform_indices = @transform_7, window_bounds = array<i64: 16, 8>}, {pipeline_mode = #tpu.pipeline_mode<synchronous>, transform_indices = @transform_8, window_bounds = array<i64: 1, 8>}, {pipeline_mode = #tpu.pipeline_mode<synchronous>, transform_indices = @transform_9, window_bounds = array<i64: 16, 32>}, {pipeline_mode = #tpu.pipeline_mode<synchronous>, transform_indices = @transform_10, window_bounds = array<i64: 1, 32>}, {pipeline_mode = #tpu.pipeline_mode<synchronous>, transform_indices = @transform_11, window_bounds = array<i64: 32, 32>}, {pipeline_mode = #tpu.pipeline_mode<synchronous>, transform_indices = @transform_12, window_bounds = array<i64: 1, 32>}, {pipeline_mode = #tpu.pipeline_mode<synchronous>, transform_indices = @transform_13, window_bounds = array<i64: 32, 32>}, {pipeline_mode = #tpu.pipeline_mode<synchronous>, transform_indices = @transform_14, window_bounds = array<i64: 1, 32>}, {pipeline_mode = #tpu.pipeline_mode<synchronous>, transform_indices = @transform_15, window_bounds = array<i64: 8, 16>}, {pipeline_mode = #tpu.pipeline_mode<synchronous>, transform_indices = @transform_16, window_bounds = array<i64: 1, 16>}, {pipeline_mode = #tpu.pipeline_mode<synchronous>, transform_indices = @transform_17, window_bounds = array<i64: 16, 48>}, {pipeline_mode = #tpu.pipeline_mode<synchronous>, transform_indices = @transform_18, window_bounds = array<i64: 1, 48>}, {pipeline_mode = #tpu.pipeline_mode<synchronous>, transform_indices = @transform_19, window_bounds = array<i64: 32, 96>}, {pipeline_mode = #tpu.pipeline_mode<synchronous>, transform_indices = @transform_20, window_bounds = array<i64: 1, 96>}, {pipeline_mode = #tpu.pipeline_mode<synchronous>, transform_indices = @transform_21, window_bounds = array<i64: 16, 48>}, {pipeline_mode = #tpu.pipeline_mode<synchronous>, transform_indices = @transform_22, window_bounds = array<i64: 1, 16>}, {pipeline_mode = #tpu.pipeline_mode<synchronous>, transform_indices = @transform_23, window_bounds = array<i64: 8, 1>}, {pipeline_mode = #tpu.pipeline_mode<synchronous>, transform_indices = @transform_24, window_bounds = array<i64: 32, 1>}, {pipeline_mode = #tpu.pipeline_mode<synchronous>, transform_indices = @transform_25, window_bounds = array<i64: 16, 1>}, {pipeline_mode = #tpu.pipeline_mode<synchronous>, transform_indices = @transform_26, window_bounds = array<i64: 1, 1>}, {transform_indices = @transform_27, window_bounds = array<i64: 2, 1>}]} {
    %c0 = arith.constant 0 : index
    %c0_0 = arith.constant 0 : index
    %0 = vector.load %arg1[%c0, %c0_0] : memref<2x8xf32, #tpu.memory_space<vmem>>, vector<2x8xf32>
    %c0_1 = arith.constant 0 : index
    %c0_2 = arith.constant 0 : index
    %1 = vector.load %arg5[%c0_1, %c0_2] : memref<8x64xf32, #tpu.memory_space<vmem>>, vector<8x64xf32>
    %cst = arith.constant dense<0.000000e+00> : vector<2x64xf32>
    %2 = tpu.matmul %0, %1, %cst {dimension_numbers = #tpu.dot_dimension_numbers<[1], [0], [0], [1], [0, 0, 1, 1], [], []>} : vector<2x8xf32>, vector<8x64xf32>, vector<2x64xf32> -> vector<2x64xf32>
    %3 = arith.mulf %2, %2 : vector<2x64xf32>
    %4 = arith.mulf %0, %0 : vector<2x8xf32>
    %c0_3 = arith.constant 0 : index
    %c0_4 = arith.constant 0 : index
    %5 = vector.load %arg6[%c0_3, %c0_4] : memref<8x64xf32, #tpu.memory_space<vmem>>, vector<8x64xf32>
    %cst_5 = arith.constant dense<0.000000e+00> : vector<2x64xf32>
    %6 = tpu.matmul %4, %5, %cst_5 {dimension_numbers = #tpu.dot_dimension_numbers<[1], [0], [0], [1], [0, 0, 1, 1], [], []>} : vector<2x8xf32>, vector<8x64xf32>, vector<2x64xf32> -> vector<2x64xf32>
    %7 = arith.subf %3, %6 : vector<2x64xf32>
    %c0_6 = arith.constant 0 : index
    %c0_7 = arith.constant 0 : index
    %8 = vector.load %arg7[%c0_6, %c0_7] : memref<64x16xf32, #tpu.memory_space<vmem>>, vector<64x16xf32>
    %cst_8 = arith.constant dense<0.000000e+00> : vector<2x16xf32>
    %9 = tpu.matmul %7, %8, %cst_8 {dimension_numbers = #tpu.dot_dimension_numbers<[1], [0], [0], [1], [0, 0, 1, 1], [], []>} : vector<2x64xf32>, vector<64x16xf32>, vector<2x16xf32> -> vector<2x16xf32>
    %cst_9 = arith.constant 5.000000e-01 : f32
    %10 = vector.broadcast %cst_9 : f32 to vector<2x16xf32>
    %11 = arith.mulf %10, %9 : vector<2x16xf32>
    %c0_10 = arith.constant 0 : index
    %c0_11 = arith.constant 0 : index
    %12 = vector.load %arg8[%c0_10, %c0_11] : memref<16x8xf32, #tpu.memory_space<vmem>>, vector<16x8xf32>
    %cst_12 = arith.constant dense<0.000000e+00> : vector<2x8xf32>
    %13 = tpu.matmul %11, %12, %cst_12 {dimension_numbers = #tpu.dot_dimension_numbers<[1], [0], [0], [1], [0, 0, 1, 1], [], []>} : vector<2x16xf32>, vector<16x8xf32>, vector<2x8xf32> -> vector<2x8xf32>
    %c0_13 = arith.constant 0 : index
    %c0_14 = arith.constant 0 : index
    %14 = vector.load %arg9[%c0_13, %c0_14] : memref<1x8xf32, #tpu.memory_space<vmem>>, vector<1x8xf32>
    %15 = vector.broadcast %14 : vector<1x8xf32> to vector<2x8xf32>
    %16 = arith.addf %13, %15 : vector<2x8xf32>
    %c0_15 = arith.constant 0 : index
    %c0_16 = arith.constant 0 : index
    %17 = vector.load %arg2[%c0_15, %c0_16] : memref<2x16xf32, #tpu.memory_space<vmem>>, vector<2x16xf32>
    %c0_17 = arith.constant 0 : index
    %c0_18 = arith.constant 0 : index
    %18 = vector.load %arg10[%c0_17, %c0_18] : memref<16x32xf32, #tpu.memory_space<vmem>>, vector<16x32xf32>
    %cst_19 = arith.constant dense<0.000000e+00> : vector<2x32xf32>
    %19 = tpu.matmul %17, %18, %cst_19 {dimension_numbers = #tpu.dot_dimension_numbers<[1], [0], [0], [1], [0, 0, 1, 1], [], []>} : vector<2x16xf32>, vector<16x32xf32>, vector<2x32xf32> -> vector<2x32xf32>
    %c0_20 = arith.constant 0 : index
    %c0_21 = arith.constant 0 : index
    %20 = vector.load %arg11[%c0_20, %c0_21] : memref<1x32xf32, #tpu.memory_space<vmem>>, vector<1x32xf32>
    %21 = vector.broadcast %20 : vector<1x32xf32> to vector<2x32xf32>
    %22 = arith.addf %19, %21 : vector<2x32xf32>
    %cst_22 = arith.constant 0.000000e+00 : f32
    %23 = vector.broadcast %cst_22 : f32 to vector<2x32xf32>
    %24 = arith.cmpf oge, %22, %23 : vector<2x32xf32>
    %cst_23 = arith.constant 0.00999999977 : f32
    %25 = vector.broadcast %cst_23 : f32 to vector<2x32xf32>
    %26 = arith.mulf %25, %22 : vector<2x32xf32>
    %27 = arith.select %24, %22, %26 : vector<2x32xi1>, vector<2x32xf32>
    %c0_24 = arith.constant 0 : index
    %c0_25 = arith.constant 0 : index
    %28 = vector.load %arg12[%c0_24, %c0_25] : memref<32x32xf32, #tpu.memory_space<vmem>>, vector<32x32xf32>
    %cst_26 = arith.constant dense<0.000000e+00> : vector<2x32xf32>
    %29 = tpu.matmul %27, %28, %cst_26 {dimension_numbers = #tpu.dot_dimension_numbers<[1], [0], [0], [1], [0, 0, 1, 1], [], []>} : vector<2x32xf32>, vector<32x32xf32>, vector<2x32xf32> -> vector<2x32xf32>
    %c0_27 = arith.constant 0 : index
    %c0_28 = arith.constant 0 : index
    %30 = vector.load %arg13[%c0_27, %c0_28] : memref<1x32xf32, #tpu.memory_space<vmem>>, vector<1x32xf32>
    %31 = vector.broadcast %30 : vector<1x32xf32> to vector<2x32xf32>
    %32 = arith.addf %29, %31 : vector<2x32xf32>
    %33 = arith.addf %32, %27 : vector<2x32xf32>
    %cst_29 = arith.constant 0.000000e+00 : f32
    %34 = vector.broadcast %cst_29 : f32 to vector<2x32xf32>
    %35 = arith.cmpf oge, %33, %34 : vector<2x32xf32>
    %cst_30 = arith.constant 0.00999999977 : f32
    %36 = vector.broadcast %cst_30 : f32 to vector<2x32xf32>
    %37 = arith.mulf %36, %33 : vector<2x32xf32>
    %38 = arith.select %35, %33, %37 : vector<2x32xi1>, vector<2x32xf32>
    %c0_31 = arith.constant 0 : index
    %c0_32 = arith.constant 0 : index
    %39 = vector.load %arg14[%c0_31, %c0_32] : memref<32x32xf32, #tpu.memory_space<vmem>>, vector<32x32xf32>
    %cst_33 = arith.constant dense<0.000000e+00> : vector<2x32xf32>
    %40 = tpu.matmul %38, %39, %cst_33 {dimension_numbers = #tpu.dot_dimension_numbers<[1], [0], [0], [1], [0, 0, 1, 1], [], []>} : vector<2x32xf32>, vector<32x32xf32>, vector<2x32xf32> -> vector<2x32xf32>
    %c0_34 = arith.constant 0 : index
    %c0_35 = arith.constant 0 : index
    %41 = vector.load %arg15[%c0_34, %c0_35] : memref<1x32xf32, #tpu.memory_space<vmem>>, vector<1x32xf32>
    %42 = vector.broadcast %41 : vector<1x32xf32> to vector<2x32xf32>
    %43 = arith.addf %40, %42 : vector<2x32xf32>
    %44 = arith.addf %43, %38 : vector<2x32xf32>
    %cst_36 = arith.constant 0.000000e+00 : f32
    %45 = vector.broadcast %cst_36 : f32 to vector<2x32xf32>
    %46 = arith.cmpf oge, %44, %45 : vector<2x32xf32>
    %cst_37 = arith.constant 0.00999999977 : f32
    %47 = vector.broadcast %cst_37 : f32 to vector<2x32xf32>
    %48 = arith.mulf %47, %44 : vector<2x32xf32>
    %49 = arith.select %46, %44, %48 : vector<2x32xi1>, vector<2x32xf32>
    %c0_38 = arith.constant 0 : index
    %c0_39 = arith.constant 0 : index
    %c0_40 = arith.constant 0 : index
    %50 = vector.load %arg3[%c0_38, %c0_39, %c0_40] : memref<1x16x8xf32, #tpu.memory_space<vmem>>, vector<1x16x8xf32>
    %51 = vector.shape_cast %50 : vector<1x16x8xf32> to vector<16x8xf32>
    %c0_41 = arith.constant 0 : index
    %c0_42 = arith.constant 0 : index
    %52 = vector.load %arg16[%c0_41, %c0_42] : memref<8x16xf32, #tpu.memory_space<vmem>>, vector<8x16xf32>
    %cst_43 = arith.constant dense<0.000000e+00> : vector<16x16xf32>
    %53 = tpu.matmul %51, %52, %cst_43 {dimension_numbers = #tpu.dot_dimension_numbers<[1], [0], [0], [1], [0, 0, 1, 1], [], []>} : vector<16x8xf32>, vector<8x16xf32>, vector<16x16xf32> -> vector<16x16xf32>
    %c0_44 = arith.constant 0 : index
    %c0_45 = arith.constant 0 : index
    %54 = vector.load %arg17[%c0_44, %c0_45] : memref<1x16xf32, #tpu.memory_space<vmem>>, vector<1x16xf32>
    %55 = vector.broadcast %54 : vector<1x16xf32> to vector<16x16xf32>
    %56 = arith.addf %53, %55 : vector<16x16xf32>
    %cst_46 = arith.constant 0.000000e+00 : f32
    %57 = vector.broadcast %cst_46 : f32 to vector<16x16xf32>
    %58 = arith.cmpf oge, %56, %57 : vector<16x16xf32>
    %cst_47 = arith.constant 0.00999999977 : f32
    %59 = vector.broadcast %cst_47 : f32 to vector<16x16xf32>
    %60 = arith.mulf %59, %56 : vector<16x16xf32>
    %61 = arith.select %58, %56, %60 : vector<16x16xi1>, vector<16x16xf32>
    %c0_48 = arith.constant 0 : index
    %c0_49 = arith.constant 0 : index
    %62 = vector.load %arg18[%c0_48, %c0_49] : memref<16x48xf32, #tpu.memory_space<vmem>>, vector<16x48xf32>
    %cst_50 = arith.constant dense<0.000000e+00> : vector<16x48xf32>
    %63 = tpu.matmul %61, %62, %cst_50 {dimension_numbers = #tpu.dot_dimension_numbers<[1], [0], [0], [1], [0, 0, 1, 1], [], []>} : vector<16x16xf32>, vector<16x48xf32>, vector<16x48xf32> -> vector<16x48xf32>
    %c0_51 = arith.constant 0 : index
    %c0_52 = arith.constant 0 : index
    %64 = vector.load %arg19[%c0_51, %c0_52] : memref<1x48xf32, #tpu.memory_space<vmem>>, vector<1x48xf32>
    %65 = vector.broadcast %64 : vector<1x48xf32> to vector<16x48xf32>
    %66 = arith.addf %63, %65 : vector<16x48xf32>
    %c0_53 = arith.constant 0 : index
    %c0_54 = arith.constant 0 : index
    %67 = vector.load %arg29[%c0_53, %c0_54] : memref<16x48xf32, #tpu.memory_space<vmem>>, vector<16x48xf32>
    tpu.vector_store %arg29[%c0_53, %c0_54], %66 {strides = array<i32>} : memref<16x48xf32, #tpu.memory_space<vmem>>, vector<16x48xf32>,
    %c0_55 = arith.constant 0 : index
    %c0_56 = arith.constant 0 : index
    %68 = vector.load %arg20[%c0_55, %c0_56] : memref<32x96xf32, #tpu.memory_space<vmem>>, vector<32x96xf32>
    %c0_57 = arith.constant 0 : index
    %c0_58 = arith.constant 0 : index
    %69 = vector.load %arg21[%c0_57, %c0_58] : memref<1x96xf32, #tpu.memory_space<vmem>>, vector<1x96xf32>
    %c0_59 = arith.constant 0 : index
    %c0_60 = arith.constant 0 : index
    %70 = vector.load %arg22[%c0_59, %c0_60] : memref<16x48xf32, #tpu.memory_space<vmem>>, vector<16x48xf32>
    %c0_61 = arith.constant 0 : index
    %c0_62 = arith.constant 0 : index
    %71 = vector.load %arg23[%c0_61, %c0_62] : memref<1x16xf32, #tpu.memory_space<vmem>>, vector<1x16xf32>
    %c0_63 = arith.constant 0 : index
    %c0_64 = arith.constant 0 : index
    %72 = vector.load %arg4[%c0_63, %c0_64] : memref<2x1xi32, #tpu.memory_space<vmem>>, vector<2x1xi32>
    %cst_65 = arith.constant 0.000000e+00 : f32
    %73 = vector.broadcast %cst_65 : f32 to vector<2x16xf32>
    %cst_66 = arith.constant 0.000000e+00 : f32
    %74 = vector.broadcast %cst_66 : f32 to vector<2x16xf32>
    %c0_67 = arith.constant 0 : index
    %c0_68 = arith.constant 0 : index
    %75 = vector.load %arg29[%c0_67, %c0_68] : memref<16x48xf32, #tpu.memory_space<vmem>>, vector<2x48xf32>
    %76 = tpu.concatenate %73, %74 in 1 : vector<2x16xf32>, vector<2x16xf32> -> vector<2x32xf32>
    %cst_69 = arith.constant dense<0.000000e+00> : vector<2x96xf32>
    %77 = tpu.matmul %76, %68, %cst_69 {dimension_numbers = #tpu.dot_dimension_numbers<[1], [0], [0], [1], [0, 0, 1, 1], [], []>} : vector<2x32xf32>, vector<32x96xf32>, vector<2x96xf32> -> vector<2x96xf32>
    %78 = vector.broadcast %69 : vector<1x96xf32> to vector<2x96xf32>
    %79 = arith.addf %77, %78 : vector<2x96xf32>
    %80 = vector.extract_strided_slice %75 {offsets = [0, 0], sizes = [2, 32], strides = [1, 1]} : vector<2x48xf32> to vector<2x32xf32>
    %81 = vector.extract_strided_slice %79 {offsets = [0, 0], sizes = [2, 32], strides = [1, 1]} : vector<2x96xf32> to vector<2x32xf32>
    %82 = arith.addf %80, %81 : vector<2x32xf32>
    %83 = arith.negf %82 : vector<2x32xf32>
    %84 = math.exp %83 : vector<2x32xf32>
    %cst_70 = arith.constant 1.000000e+00 : f32
    %85 = vector.broadcast %cst_70 : f32 to vector<2x32xf32>
    %86 = arith.addf %85, %84 : vector<2x32xf32>
    %87 = arith.divf %85, %86 : vector<2x32xf32>
    %88 = vector.extract_strided_slice %87 {offsets = [0, 0], sizes = [2, 16], strides = [1, 1]} : vector<2x32xf32> to vector<2x16xf32>
    %89 = vector.extract_strided_slice %87 {offsets = [0, 16], sizes = [2, 16], strides = [1, 1]} : vector<2x32xf32> to vector<2x16xf32>
    %90 = vector.extract_strided_slice %75 {offsets = [0, 32], sizes = [2, 16], strides = [1, 1]} : vector<2x48xf32> to vector<2x16xf32>
    %91 = vector.extract_strided_slice %79 {offsets = [0, 32], sizes = [2, 16], strides = [1, 1]} : vector<2x96xf32> to vector<2x16xf32>
    %92 = arith.mulf %88, %91 : vector<2x16xf32>
    %93 = arith.addf %90, %92 : vector<2x16xf32>
    %94 = math.tanh %93 : vector<2x16xf32>
    %cst_71 = arith.constant 1.000000e+00 : f32
    %95 = vector.broadcast %cst_71 : f32 to vector<2x16xf32>
    %96 = arith.subf %95, %89 : vector<2x16xf32>
    %97 = arith.mulf %96, %94 : vector<2x16xf32>
    %98 = arith.mulf %89, %73 : vector<2x16xf32>
    %99 = arith.addf %97, %98 : vector<2x16xf32>
    %cst_72 = arith.constant dense<0.000000e+00> : vector<2x48xf32>
    %100 = tpu.matmul %99, %70, %cst_72 {dimension_numbers = #tpu.dot_dimension_numbers<[1], [0], [0], [1], [0, 0, 1, 1], [], []>} : vector<2x16xf32>, vector<16x48xf32>, vector<2x48xf32> -> vector<2x48xf32>
    %101 = vector.extract_strided_slice %100 {offsets = [0, 0], sizes = [2, 32], strides = [1, 1]} : vector<2x48xf32> to vector<2x32xf32>
    %102 = vector.extract_strided_slice %79 {offsets = [0, 48], sizes = [2, 32], strides = [1, 1]} : vector<2x96xf32> to vector<2x32xf32>
    %103 = arith.addf %101, %102 : vector<2x32xf32>
    %104 = arith.negf %103 : vector<2x32xf32>
    %105 = math.exp %104 : vector<2x32xf32>
    %cst_73 = arith.constant 1.000000e+00 : f32
    %106 = vector.broadcast %cst_73 : f32 to vector<2x32xf32>
    %107 = arith.addf %106, %105 : vector<2x32xf32>
    %108 = arith.divf %106, %107 : vector<2x32xf32>
    %109 = vector.extract_strided_slice %108 {offsets = [0, 0], sizes = [2, 16], strides = [1, 1]} : vector<2x32xf32> to vector<2x16xf32>
    %110 = vector.extract_strided_slice %108 {offsets = [0, 16], sizes = [2, 16], strides = [1, 1]} : vector<2x32xf32> to vector<2x16xf32>
    %111 = vector.extract_strided_slice %100 {offsets = [0, 32], sizes = [2, 16], strides = [1, 1]} : vector<2x48xf32> to vector<2x16xf32>
    %112 = vector.broadcast %71 : vector<1x16xf32> to vector<2x16xf32>
    %113 = arith.addf %111, %112 : vector<2x16xf32>
    %114 = vector.extract_strided_slice %79 {offsets = [0, 80], sizes = [2, 16], strides = [1, 1]} : vector<2x96xf32> to vector<2x16xf32>
    %115 = arith.mulf %109, %114 : vector<2x16xf32>
    %116 = arith.addf %113, %115 : vector<2x16xf32>
    %117 = math.tanh %116 : vector<2x16xf32>
    %cst_74 = arith.constant 1.000000e+00 : f32
    %118 = vector.broadcast %cst_74 : f32 to vector<2x16xf32>
    %119 = arith.subf %118, %110 : vector<2x16xf32>
    %120 = arith.mulf %119, %117 : vector<2x16xf32>
    %121 = arith.mulf %110, %74 : vector<2x16xf32>
    %122 = arith.addf %120, %121 : vector<2x16xf32>
    %c0_i32 = arith.constant 0 : i32
    %123 = vector.broadcast %c0_i32 : i32 to vector<2x1xi32>
    %124 = arith.cmpi sgt, %72, %123 : vector<2x1xi32>
    %125 = vector.shape_cast %124 : vector<2x1xi1> to vector<2x1xi1>
    %126 = vector.broadcast %125 : vector<2x1xi1> to vector<2x16xi1>
    %127 = arith.select %126, %99, %73 : vector<2x16xi1>, vector<2x16xf32>
    %128 = vector.shape_cast %124 : vector<2x1xi1> to vector<2x1xi1>
    %129 = vector.broadcast %128 : vector<2x1xi1> to vector<2x16xi1>
    %130 = arith.select %129, %122, %74 : vector<2x16xi1>, vector<2x16xf32>
    %c2 = arith.constant 2 : index
    %c0_75 = arith.constant 0 : index
    %131 = vector.load %arg29[%c2, %c0_75] : memref<16x48xf32, #tpu.memory_space<vmem>>, vector<2x48xf32>
    %132 = tpu.concatenate %127, %130 in 1 : vector<2x16xf32>, vector<2x16xf32> -> vector<2x32xf32>
    %cst_76 = arith.constant dense<0.000000e+00> : vector<2x96xf32>
    %133 = tpu.matmul %132, %68, %cst_76 {dimension_numbers = #tpu.dot_dimension_numbers<[1], [0], [0], [1], [0, 0, 1, 1], [], []>} : vector<2x32xf32>, vector<32x96xf32>, vector<2x96xf32> -> vector<2x96xf32>
    %134 = vector.broadcast %69 : vector<1x96xf32> to vector<2x96xf32>
    %135 = arith.addf %133, %134 : vector<2x96xf32>
    %136 = vector.extract_strided_slice %131 {offsets = [0, 0], sizes = [2, 32], strides = [1, 1]} : vector<2x48xf32> to vector<2x32xf32>
    %137 = vector.extract_strided_slice %135 {offsets = [0, 0], sizes = [2, 32], strides = [1, 1]} : vector<2x96xf32> to vector<2x32xf32>
    %138 = arith.addf %136, %137 : vector<2x32xf32>
    %139 = arith.negf %138 : vector<2x32xf32>
    %140 = math.exp %139 : vector<2x32xf32>
    %cst_77 = arith.constant 1.000000e+00 : f32
    %141 = vector.broadcast %cst_77 : f32 to vector<2x32xf32>
    %142 = arith.addf %141, %140 : vector<2x32xf32>
    %143 = arith.divf %141, %142 : vector<2x32xf32>
    %144 = vector.extract_strided_slice %143 {offsets = [0, 0], sizes = [2, 16], strides = [1, 1]} : vector<2x32xf32> to vector<2x16xf32>
    %145 = vector.extract_strided_slice %143 {offsets = [0, 16], sizes = [2, 16], strides = [1, 1]} : vector<2x32xf32> to vector<2x16xf32>
    %146 = vector.extract_strided_slice %131 {offsets = [0, 32], sizes = [2, 16], strides = [1, 1]} : vector<2x48xf32> to vector<2x16xf32>
    %147 = vector.extract_strided_slice %135 {offsets = [0, 32], sizes = [2, 16], strides = [1, 1]} : vector<2x96xf32> to vector<2x16xf32>
    %148 = arith.mulf %144, %147 : vector<2x16xf32>
    %149 = arith.addf %146, %148 : vector<2x16xf32>
    %150 = math.tanh %149 : vector<2x16xf32>
    %cst_78 = arith.constant 1.000000e+00 : f32
    %151 = vector.broadcast %cst_78 : f32 to vector<2x16xf32>
    %152 = arith.subf %151, %145 : vector<2x16xf32>
    %153 = arith.mulf %152, %150 : vector<2x16xf32>
    %154 = arith.mulf %145, %127 : vector<2x16xf32>
    %155 = arith.addf %153, %154 : vector<2x16xf32>
    %cst_79 = arith.constant dense<0.000000e+00> : vector<2x48xf32>
    %156 = tpu.matmul %155, %70, %cst_79 {dimension_numbers = #tpu.dot_dimension_numbers<[1], [0], [0], [1], [0, 0, 1, 1], [], []>} : vector<2x16xf32>, vector<16x48xf32>, vector<2x48xf32> -> vector<2x48xf32>
    %157 = vector.extract_strided_slice %156 {offsets = [0, 0], sizes = [2, 32], strides = [1, 1]} : vector<2x48xf32> to vector<2x32xf32>
    %158 = vector.extract_strided_slice %135 {offsets = [0, 48], sizes = [2, 32], strides = [1, 1]} : vector<2x96xf32> to vector<2x32xf32>
    %159 = arith.addf %157, %158 : vector<2x32xf32>
    %160 = arith.negf %159 : vector<2x32xf32>
    %161 = math.exp %160 : vector<2x32xf32>
    %cst_80 = arith.constant 1.000000e+00 : f32
    %162 = vector.broadcast %cst_80 : f32 to vector<2x32xf32>
    %163 = arith.addf %162, %161 : vector<2x32xf32>
    %164 = arith.divf %162, %163 : vector<2x32xf32>
    %165 = vector.extract_strided_slice %164 {offsets = [0, 0], sizes = [2, 16], strides = [1, 1]} : vector<2x32xf32> to vector<2x16xf32>
    %166 = vector.extract_strided_slice %164 {offsets = [0, 16], sizes = [2, 16], strides = [1, 1]} : vector<2x32xf32> to vector<2x16xf32>
    %167 = vector.extract_strided_slice %156 {offsets = [0, 32], sizes = [2, 16], strides = [1, 1]} : vector<2x48xf32> to vector<2x16xf32>
    %168 = vector.broadcast %71 : vector<1x16xf32> to vector<2x16xf32>
    %169 = arith.addf %167, %168 : vector<2x16xf32>
    %170 = vector.extract_strided_slice %135 {offsets = [0, 80], sizes = [2, 16], strides = [1, 1]} : vector<2x96xf32> to vector<2x16xf32>
    %171 = arith.mulf %165, %170 : vector<2x16xf32>
    %172 = arith.addf %169, %171 : vector<2x16xf32>
    %173 = math.tanh %172 : vector<2x16xf32>
    %cst_81 = arith.constant 1.000000e+00 : f32
    %174 = vector.broadcast %cst_81 : f32 to vector<2x16xf32>
    %175 = arith.subf %174, %166 : vector<2x16xf32>
    %176 = arith.mulf %175, %173 : vector<2x16xf32>
    %177 = arith.mulf %166, %130 : vector<2x16xf32>
    %178 = arith.addf %176, %177 : vector<2x16xf32>
    %c1_i32 = arith.constant 1 : i32
    %179 = vector.broadcast %c1_i32 : i32 to vector<2x1xi32>
    %180 = arith.cmpi sgt, %72, %179 : vector<2x1xi32>
    %181 = vector.shape_cast %180 : vector<2x1xi1> to vector<2x1xi1>
    %182 = vector.broadcast %181 : vector<2x1xi1> to vector<2x16xi1>
    %183 = arith.select %182, %155, %127 : vector<2x16xi1>, vector<2x16xf32>
    %184 = vector.shape_cast %180 : vector<2x1xi1> to vector<2x1xi1>
    %185 = vector.broadcast %184 : vector<2x1xi1> to vector<2x16xi1>
    %186 = arith.select %185, %178, %130 : vector<2x16xi1>, vector<2x16xf32>
    %c4 = arith.constant 4 : index
    %c0_82 = arith.constant 0 : index
    %187 = vector.load %arg29[%c4, %c0_82] : memref<16x48xf32, #tpu.memory_space<vmem>>, vector<2x48xf32>
    %188 = tpu.concatenate %183, %186 in 1 : vector<2x16xf32>, vector<2x16xf32> -> vector<2x32xf32>
    %cst_83 = arith.constant dense<0.000000e+00> : vector<2x96xf32>
    %189 = tpu.matmul %188, %68, %cst_83 {dimension_numbers = #tpu.dot_dimension_numbers<[1], [0], [0], [1], [0, 0, 1, 1], [], []>} : vector<2x32xf32>, vector<32x96xf32>, vector<2x96xf32> -> vector<2x96xf32>
    %190 = vector.broadcast %69 : vector<1x96xf32> to vector<2x96xf32>
    %191 = arith.addf %189, %190 : vector<2x96xf32>
    %192 = vector.extract_strided_slice %187 {offsets = [0, 0], sizes = [2, 32], strides = [1, 1]} : vector<2x48xf32> to vector<2x32xf32>
    %193 = vector.extract_strided_slice %191 {offsets = [0, 0], sizes = [2, 32], strides = [1, 1]} : vector<2x96xf32> to vector<2x32xf32>
    %194 = arith.addf %192, %193 : vector<2x32xf32>
    %195 = arith.negf %194 : vector<2x32xf32>
    %196 = math.exp %195 : vector<2x32xf32>
    %cst_84 = arith.constant 1.000000e+00 : f32
    %197 = vector.broadcast %cst_84 : f32 to vector<2x32xf32>
    %198 = arith.addf %197, %196 : vector<2x32xf32>
    %199 = arith.divf %197, %198 : vector<2x32xf32>
    %200 = vector.extract_strided_slice %199 {offsets = [0, 0], sizes = [2, 16], strides = [1, 1]} : vector<2x32xf32> to vector<2x16xf32>
    %201 = vector.extract_strided_slice %199 {offsets = [0, 16], sizes = [2, 16], strides = [1, 1]} : vector<2x32xf32> to vector<2x16xf32>
    %202 = vector.extract_strided_slice %187 {offsets = [0, 32], sizes = [2, 16], strides = [1, 1]} : vector<2x48xf32> to vector<2x16xf32>
    %203 = vector.extract_strided_slice %191 {offsets = [0, 32], sizes = [2, 16], strides = [1, 1]} : vector<2x96xf32> to vector<2x16xf32>
    %204 = arith.mulf %200, %203 : vector<2x16xf32>
    %205 = arith.addf %202, %204 : vector<2x16xf32>
    %206 = math.tanh %205 : vector<2x16xf32>
    %cst_85 = arith.constant 1.000000e+00 : f32
    %207 = vector.broadcast %cst_85 : f32 to vector<2x16xf32>
    %208 = arith.subf %207, %201 : vector<2x16xf32>
    %209 = arith.mulf %208, %206 : vector<2x16xf32>
    %210 = arith.mulf %201, %183 : vector<2x16xf32>
    %211 = arith.addf %209, %210 : vector<2x16xf32>
    %cst_86 = arith.constant dense<0.000000e+00> : vector<2x48xf32>
    %212 = tpu.matmul %211, %70, %cst_86 {dimension_numbers = #tpu.dot_dimension_numbers<[1], [0], [0], [1], [0, 0, 1, 1], [], []>} : vector<2x16xf32>, vector<16x48xf32>, vector<2x48xf32> -> vector<2x48xf32>
    %213 = vector.extract_strided_slice %212 {offsets = [0, 0], sizes = [2, 32], strides = [1, 1]} : vector<2x48xf32> to vector<2x32xf32>
    %214 = vector.extract_strided_slice %191 {offsets = [0, 48], sizes = [2, 32], strides = [1, 1]} : vector<2x96xf32> to vector<2x32xf32>
    %215 = arith.addf %213, %214 : vector<2x32xf32>
    %216 = arith.negf %215 : vector<2x32xf32>
    %217 = math.exp %216 : vector<2x32xf32>
    %cst_87 = arith.constant 1.000000e+00 : f32
    %218 = vector.broadcast %cst_87 : f32 to vector<2x32xf32>
    %219 = arith.addf %218, %217 : vector<2x32xf32>
    %220 = arith.divf %218, %219 : vector<2x32xf32>
    %221 = vector.extract_strided_slice %220 {offsets = [0, 0], sizes = [2, 16], strides = [1, 1]} : vector<2x32xf32> to vector<2x16xf32>
    %222 = vector.extract_strided_slice %220 {offsets = [0, 16], sizes = [2, 16], strides = [1, 1]} : vector<2x32xf32> to vector<2x16xf32>
    %223 = vector.extract_strided_slice %212 {offsets = [0, 32], sizes = [2, 16], strides = [1, 1]} : vector<2x48xf32> to vector<2x16xf32>
    %224 = vector.broadcast %71 : vector<1x16xf32> to vector<2x16xf32>
    %225 = arith.addf %223, %224 : vector<2x16xf32>
    %226 = vector.extract_strided_slice %191 {offsets = [0, 80], sizes = [2, 16], strides = [1, 1]} : vector<2x96xf32> to vector<2x16xf32>
    %227 = arith.mulf %221, %226 : vector<2x16xf32>
    %228 = arith.addf %225, %227 : vector<2x16xf32>
    %229 = math.tanh %228 : vector<2x16xf32>
    %cst_88 = arith.constant 1.000000e+00 : f32
    %230 = vector.broadcast %cst_88 : f32 to vector<2x16xf32>
    %231 = arith.subf %230, %222 : vector<2x16xf32>
    %232 = arith.mulf %231, %229 : vector<2x16xf32>
    %233 = arith.mulf %222, %186 : vector<2x16xf32>
    %234 = arith.addf %232, %233 : vector<2x16xf32>
    %c2_i32 = arith.constant 2 : i32
    %235 = vector.broadcast %c2_i32 : i32 to vector<2x1xi32>
    %236 = arith.cmpi sgt, %72, %235 : vector<2x1xi32>
    %237 = vector.shape_cast %236 : vector<2x1xi1> to vector<2x1xi1>
    %238 = vector.broadcast %237 : vector<2x1xi1> to vector<2x16xi1>
    %239 = arith.select %238, %211, %183 : vector<2x16xi1>, vector<2x16xf32>
    %240 = vector.shape_cast %236 : vector<2x1xi1> to vector<2x1xi1>
    %241 = vector.broadcast %240 : vector<2x1xi1> to vector<2x16xi1>
    %242 = arith.select %241, %234, %186 : vector<2x16xi1>, vector<2x16xf32>
    %c6 = arith.constant 6 : index
    %c0_89 = arith.constant 0 : index
    %243 = vector.load %arg29[%c6, %c0_89] : memref<16x48xf32, #tpu.memory_space<vmem>>, vector<2x48xf32>
    %244 = tpu.concatenate %239, %242 in 1 : vector<2x16xf32>, vector<2x16xf32> -> vector<2x32xf32>
    %cst_90 = arith.constant dense<0.000000e+00> : vector<2x96xf32>
    %245 = tpu.matmul %244, %68, %cst_90 {dimension_numbers = #tpu.dot_dimension_numbers<[1], [0], [0], [1], [0, 0, 1, 1], [], []>} : vector<2x32xf32>, vector<32x96xf32>, vector<2x96xf32> -> vector<2x96xf32>
    %246 = vector.broadcast %69 : vector<1x96xf32> to vector<2x96xf32>
    %247 = arith.addf %245, %246 : vector<2x96xf32>
    %248 = vector.extract_strided_slice %243 {offsets = [0, 0], sizes = [2, 32], strides = [1, 1]} : vector<2x48xf32> to vector<2x32xf32>
    %249 = vector.extract_strided_slice %247 {offsets = [0, 0], sizes = [2, 32], strides = [1, 1]} : vector<2x96xf32> to vector<2x32xf32>
    %250 = arith.addf %248, %249 : vector<2x32xf32>
    %251 = arith.negf %250 : vector<2x32xf32>
    %252 = math.exp %251 : vector<2x32xf32>
    %cst_91 = arith.constant 1.000000e+00 : f32
    %253 = vector.broadcast %cst_91 : f32 to vector<2x32xf32>
    %254 = arith.addf %253, %252 : vector<2x32xf32>
    %255 = arith.divf %253, %254 : vector<2x32xf32>
    %256 = vector.extract_strided_slice %255 {offsets = [0, 0], sizes = [2, 16], strides = [1, 1]} : vector<2x32xf32> to vector<2x16xf32>
    %257 = vector.extract_strided_slice %255 {offsets = [0, 16], sizes = [2, 16], strides = [1, 1]} : vector<2x32xf32> to vector<2x16xf32>
    %258 = vector.extract_strided_slice %243 {offsets = [0, 32], sizes = [2, 16], strides = [1, 1]} : vector<2x48xf32> to vector<2x16xf32>
    %259 = vector.extract_strided_slice %247 {offsets = [0, 32], sizes = [2, 16], strides = [1, 1]} : vector<2x96xf32> to vector<2x16xf32>
    %260 = arith.mulf %256, %259 : vector<2x16xf32>
    %261 = arith.addf %258, %260 : vector<2x16xf32>
    %262 = math.tanh %261 : vector<2x16xf32>
    %cst_92 = arith.constant 1.000000e+00 : f32
    %263 = vector.broadcast %cst_92 : f32 to vector<2x16xf32>
    %264 = arith.subf %263, %257 : vector<2x16xf32>
    %265 = arith.mulf %264, %262 : vector<2x16xf32>
    %266 = arith.mulf %257, %239 : vector<2x16xf32>
    %267 = arith.addf %265, %266 : vector<2x16xf32>
    %cst_93 = arith.constant dense<0.000000e+00> : vector<2x48xf32>
    %268 = tpu.matmul %267, %70, %cst_93 {dimension_numbers = #tpu.dot_dimension_numbers<[1], [0], [0], [1], [0, 0, 1, 1], [], []>} : vector<2x16xf32>, vector<16x48xf32>, vector<2x48xf32> -> vector<2x48xf32>
    %269 = vector.extract_strided_slice %268 {offsets = [0, 0], sizes = [2, 32], strides = [1, 1]} : vector<2x48xf32> to vector<2x32xf32>
    %270 = vector.extract_strided_slice %247 {offsets = [0, 48], sizes = [2, 32], strides = [1, 1]} : vector<2x96xf32> to vector<2x32xf32>
    %271 = arith.addf %269, %270 : vector<2x32xf32>
    %272 = arith.negf %271 : vector<2x32xf32>
    %273 = math.exp %272 : vector<2x32xf32>
    %cst_94 = arith.constant 1.000000e+00 : f32
    %274 = vector.broadcast %cst_94 : f32 to vector<2x32xf32>
    %275 = arith.addf %274, %273 : vector<2x32xf32>
    %276 = arith.divf %274, %275 : vector<2x32xf32>
    %277 = vector.extract_strided_slice %276 {offsets = [0, 0], sizes = [2, 16], strides = [1, 1]} : vector<2x32xf32> to vector<2x16xf32>
    %278 = vector.extract_strided_slice %276 {offsets = [0, 16], sizes = [2, 16], strides = [1, 1]} : vector<2x32xf32> to vector<2x16xf32>
    %279 = vector.extract_strided_slice %268 {offsets = [0, 32], sizes = [2, 16], strides = [1, 1]} : vector<2x48xf32> to vector<2x16xf32>
    %280 = vector.broadcast %71 : vector<1x16xf32> to vector<2x16xf32>
    %281 = arith.addf %279, %280 : vector<2x16xf32>
    %282 = vector.extract_strided_slice %247 {offsets = [0, 80], sizes = [2, 16], strides = [1, 1]} : vector<2x96xf32> to vector<2x16xf32>
    %283 = arith.mulf %277, %282 : vector<2x16xf32>
    %284 = arith.addf %281, %283 : vector<2x16xf32>
    %285 = math.tanh %284 : vector<2x16xf32>
    %cst_95 = arith.constant 1.000000e+00 : f32
    %286 = vector.broadcast %cst_95 : f32 to vector<2x16xf32>
    %287 = arith.subf %286, %278 : vector<2x16xf32>
    %288 = arith.mulf %287, %285 : vector<2x16xf32>
    %289 = arith.mulf %278, %242 : vector<2x16xf32>
    %290 = arith.addf %288, %289 : vector<2x16xf32>
    %c3_i32 = arith.constant 3 : i32
    %291 = vector.broadcast %c3_i32 : i32 to vector<2x1xi32>
    %292 = arith.cmpi sgt, %72, %291 : vector<2x1xi32>
    %293 = vector.shape_cast %292 : vector<2x1xi1> to vector<2x1xi1>
    %294 = vector.broadcast %293 : vector<2x1xi1> to vector<2x16xi1>
    %295 = arith.select %294, %267, %239 : vector<2x16xi1>, vector<2x16xf32>
    %296 = vector.shape_cast %292 : vector<2x1xi1> to vector<2x1xi1>
    %297 = vector.broadcast %296 : vector<2x1xi1> to vector<2x16xi1>
    %298 = arith.select %297, %290, %242 : vector<2x16xi1>, vector<2x16xf32>
    %c8 = arith.constant 8 : index
    %c0_96 = arith.constant 0 : index
    %299 = vector.load %arg29[%c8, %c0_96] : memref<16x48xf32, #tpu.memory_space<vmem>>, vector<2x48xf32>
    %300 = tpu.concatenate %295, %298 in 1 : vector<2x16xf32>, vector<2x16xf32> -> vector<2x32xf32>
    %cst_97 = arith.constant dense<0.000000e+00> : vector<2x96xf32>
    %301 = tpu.matmul %300, %68, %cst_97 {dimension_numbers = #tpu.dot_dimension_numbers<[1], [0], [0], [1], [0, 0, 1, 1], [], []>} : vector<2x32xf32>, vector<32x96xf32>, vector<2x96xf32> -> vector<2x96xf32>
    %302 = vector.broadcast %69 : vector<1x96xf32> to vector<2x96xf32>
    %303 = arith.addf %301, %302 : vector<2x96xf32>
    %304 = vector.extract_strided_slice %299 {offsets = [0, 0], sizes = [2, 32], strides = [1, 1]} : vector<2x48xf32> to vector<2x32xf32>
    %305 = vector.extract_strided_slice %303 {offsets = [0, 0], sizes = [2, 32], strides = [1, 1]} : vector<2x96xf32> to vector<2x32xf32>
    %306 = arith.addf %304, %305 : vector<2x32xf32>
    %307 = arith.negf %306 : vector<2x32xf32>
    %308 = math.exp %307 : vector<2x32xf32>
    %cst_98 = arith.constant 1.000000e+00 : f32
    %309 = vector.broadcast %cst_98 : f32 to vector<2x32xf32>
    %310 = arith.addf %309, %308 : vector<2x32xf32>
    %311 = arith.divf %309, %310 : vector<2x32xf32>
    %312 = vector.extract_strided_slice %311 {offsets = [0, 0], sizes = [2, 16], strides = [1, 1]} : vector<2x32xf32> to vector<2x16xf32>
    %313 = vector.extract_strided_slice %311 {offsets = [0, 16], sizes = [2, 16], strides = [1, 1]} : vector<2x32xf32> to vector<2x16xf32>
    %314 = vector.extract_strided_slice %299 {offsets = [0, 32], sizes = [2, 16], strides = [1, 1]} : vector<2x48xf32> to vector<2x16xf32>
    %315 = vector.extract_strided_slice %303 {offsets = [0, 32], sizes = [2, 16], strides = [1, 1]} : vector<2x96xf32> to vector<2x16xf32>
    %316 = arith.mulf %312, %315 : vector<2x16xf32>
    %317 = arith.addf %314, %316 : vector<2x16xf32>
    %318 = math.tanh %317 : vector<2x16xf32>
    %cst_99 = arith.constant 1.000000e+00 : f32
    %319 = vector.broadcast %cst_99 : f32 to vector<2x16xf32>
    %320 = arith.subf %319, %313 : vector<2x16xf32>
    %321 = arith.mulf %320, %318 : vector<2x16xf32>
    %322 = arith.mulf %313, %295 : vector<2x16xf32>
    %323 = arith.addf %321, %322 : vector<2x16xf32>
    %cst_100 = arith.constant dense<0.000000e+00> : vector<2x48xf32>
    %324 = tpu.matmul %323, %70, %cst_100 {dimension_numbers = #tpu.dot_dimension_numbers<[1], [0], [0], [1], [0, 0, 1, 1], [], []>} : vector<2x16xf32>, vector<16x48xf32>, vector<2x48xf32> -> vector<2x48xf32>
    %325 = vector.extract_strided_slice %324 {offsets = [0, 0], sizes = [2, 32], strides = [1, 1]} : vector<2x48xf32> to vector<2x32xf32>
    %326 = vector.extract_strided_slice %303 {offsets = [0, 48], sizes = [2, 32], strides = [1, 1]} : vector<2x96xf32> to vector<2x32xf32>
    %327 = arith.addf %325, %326 : vector<2x32xf32>
    %328 = arith.negf %327 : vector<2x32xf32>
    %329 = math.exp %328 : vector<2x32xf32>
    %cst_101 = arith.constant 1.000000e+00 : f32
    %330 = vector.broadcast %cst_101 : f32 to vector<2x32xf32>
    %331 = arith.addf %330, %329 : vector<2x32xf32>
    %332 = arith.divf %330, %331 : vector<2x32xf32>
    %333 = vector.extract_strided_slice %332 {offsets = [0, 0], sizes = [2, 16], strides = [1, 1]} : vector<2x32xf32> to vector<2x16xf32>
    %334 = vector.extract_strided_slice %332 {offsets = [0, 16], sizes = [2, 16], strides = [1, 1]} : vector<2x32xf32> to vector<2x16xf32>
    %335 = vector.extract_strided_slice %324 {offsets = [0, 32], sizes = [2, 16], strides = [1, 1]} : vector<2x48xf32> to vector<2x16xf32>
    %336 = vector.broadcast %71 : vector<1x16xf32> to vector<2x16xf32>
    %337 = arith.addf %335, %336 : vector<2x16xf32>
    %338 = vector.extract_strided_slice %303 {offsets = [0, 80], sizes = [2, 16], strides = [1, 1]} : vector<2x96xf32> to vector<2x16xf32>
    %339 = arith.mulf %333, %338 : vector<2x16xf32>
    %340 = arith.addf %337, %339 : vector<2x16xf32>
    %341 = math.tanh %340 : vector<2x16xf32>
    %cst_102 = arith.constant 1.000000e+00 : f32
    %342 = vector.broadcast %cst_102 : f32 to vector<2x16xf32>
    %343 = arith.subf %342, %334 : vector<2x16xf32>
    %344 = arith.mulf %343, %341 : vector<2x16xf32>
    %345 = arith.mulf %334, %298 : vector<2x16xf32>
    %346 = arith.addf %344, %345 : vector<2x16xf32>
    %c4_i32 = arith.constant 4 : i32
    %347 = vector.broadcast %c4_i32 : i32 to vector<2x1xi32>
    %348 = arith.cmpi sgt, %72, %347 : vector<2x1xi32>
    %349 = vector.shape_cast %348 : vector<2x1xi1> to vector<2x1xi1>
    %350 = vector.broadcast %349 : vector<2x1xi1> to vector<2x16xi1>
    %351 = arith.select %350, %323, %295 : vector<2x16xi1>, vector<2x16xf32>
    %352 = vector.shape_cast %348 : vector<2x1xi1> to vector<2x1xi1>
    %353 = vector.broadcast %352 : vector<2x1xi1> to vector<2x16xi1>
    %354 = arith.select %353, %346, %298 : vector<2x16xi1>, vector<2x16xf32>
    %c10 = arith.constant 10 : index
    %c0_103 = arith.constant 0 : index
    %355 = vector.load %arg29[%c10, %c0_103] : memref<16x48xf32, #tpu.memory_space<vmem>>, vector<2x48xf32>
    %356 = tpu.concatenate %351, %354 in 1 : vector<2x16xf32>, vector<2x16xf32> -> vector<2x32xf32>
    %cst_104 = arith.constant dense<0.000000e+00> : vector<2x96xf32>
    %357 = tpu.matmul %356, %68, %cst_104 {dimension_numbers = #tpu.dot_dimension_numbers<[1], [0], [0], [1], [0, 0, 1, 1], [], []>} : vector<2x32xf32>, vector<32x96xf32>, vector<2x96xf32> -> vector<2x96xf32>
    %358 = vector.broadcast %69 : vector<1x96xf32> to vector<2x96xf32>
    %359 = arith.addf %357, %358 : vector<2x96xf32>
    %360 = vector.extract_strided_slice %355 {offsets = [0, 0], sizes = [2, 32], strides = [1, 1]} : vector<2x48xf32> to vector<2x32xf32>
    %361 = vector.extract_strided_slice %359 {offsets = [0, 0], sizes = [2, 32], strides = [1, 1]} : vector<2x96xf32> to vector<2x32xf32>
    %362 = arith.addf %360, %361 : vector<2x32xf32>
    %363 = arith.negf %362 : vector<2x32xf32>
    %364 = math.exp %363 : vector<2x32xf32>
    %cst_105 = arith.constant 1.000000e+00 : f32
    %365 = vector.broadcast %cst_105 : f32 to vector<2x32xf32>
    %366 = arith.addf %365, %364 : vector<2x32xf32>
    %367 = arith.divf %365, %366 : vector<2x32xf32>
    %368 = vector.extract_strided_slice %367 {offsets = [0, 0], sizes = [2, 16], strides = [1, 1]} : vector<2x32xf32> to vector<2x16xf32>
    %369 = vector.extract_strided_slice %367 {offsets = [0, 16], sizes = [2, 16], strides = [1, 1]} : vector<2x32xf32> to vector<2x16xf32>
    %370 = vector.extract_strided_slice %355 {offsets = [0, 32], sizes = [2, 16], strides = [1, 1]} : vector<2x48xf32> to vector<2x16xf32>
    %371 = vector.extract_strided_slice %359 {offsets = [0, 32], sizes = [2, 16], strides = [1, 1]} : vector<2x96xf32> to vector<2x16xf32>
    %372 = arith.mulf %368, %371 : vector<2x16xf32>
    %373 = arith.addf %370, %372 : vector<2x16xf32>
    %374 = math.tanh %373 : vector<2x16xf32>
    %cst_106 = arith.constant 1.000000e+00 : f32
    %375 = vector.broadcast %cst_106 : f32 to vector<2x16xf32>
    %376 = arith.subf %375, %369 : vector<2x16xf32>
    %377 = arith.mulf %376, %374 : vector<2x16xf32>
    %378 = arith.mulf %369, %351 : vector<2x16xf32>
    %379 = arith.addf %377, %378 : vector<2x16xf32>
    %cst_107 = arith.constant dense<0.000000e+00> : vector<2x48xf32>
    %380 = tpu.matmul %379, %70, %cst_107 {dimension_numbers = #tpu.dot_dimension_numbers<[1], [0], [0], [1], [0, 0, 1, 1], [], []>} : vector<2x16xf32>, vector<16x48xf32>, vector<2x48xf32> -> vector<2x48xf32>
    %381 = vector.extract_strided_slice %380 {offsets = [0, 0], sizes = [2, 32], strides = [1, 1]} : vector<2x48xf32> to vector<2x32xf32>
    %382 = vector.extract_strided_slice %359 {offsets = [0, 48], sizes = [2, 32], strides = [1, 1]} : vector<2x96xf32> to vector<2x32xf32>
    %383 = arith.addf %381, %382 : vector<2x32xf32>
    %384 = arith.negf %383 : vector<2x32xf32>
    %385 = math.exp %384 : vector<2x32xf32>
    %cst_108 = arith.constant 1.000000e+00 : f32
    %386 = vector.broadcast %cst_108 : f32 to vector<2x32xf32>
    %387 = arith.addf %386, %385 : vector<2x32xf32>
    %388 = arith.divf %386, %387 : vector<2x32xf32>
    %389 = vector.extract_strided_slice %388 {offsets = [0, 0], sizes = [2, 16], strides = [1, 1]} : vector<2x32xf32> to vector<2x16xf32>
    %390 = vector.extract_strided_slice %388 {offsets = [0, 16], sizes = [2, 16], strides = [1, 1]} : vector<2x32xf32> to vector<2x16xf32>
    %391 = vector.extract_strided_slice %380 {offsets = [0, 32], sizes = [2, 16], strides = [1, 1]} : vector<2x48xf32> to vector<2x16xf32>
    %392 = vector.broadcast %71 : vector<1x16xf32> to vector<2x16xf32>
    %393 = arith.addf %391, %392 : vector<2x16xf32>
    %394 = vector.extract_strided_slice %359 {offsets = [0, 80], sizes = [2, 16], strides = [1, 1]} : vector<2x96xf32> to vector<2x16xf32>
    %395 = arith.mulf %389, %394 : vector<2x16xf32>
    %396 = arith.addf %393, %395 : vector<2x16xf32>
    %397 = math.tanh %396 : vector<2x16xf32>
    %cst_109 = arith.constant 1.000000e+00 : f32
    %398 = vector.broadcast %cst_109 : f32 to vector<2x16xf32>
    %399 = arith.subf %398, %390 : vector<2x16xf32>
    %400 = arith.mulf %399, %397 : vector<2x16xf32>
    %401 = arith.mulf %390, %354 : vector<2x16xf32>
    %402 = arith.addf %400, %401 : vector<2x16xf32>
    %c5_i32 = arith.constant 5 : i32
    %403 = vector.broadcast %c5_i32 : i32 to vector<2x1xi32>
    %404 = arith.cmpi sgt, %72, %403 : vector<2x1xi32>
    %405 = vector.shape_cast %404 : vector<2x1xi1> to vector<2x1xi1>
    %406 = vector.broadcast %405 : vector<2x1xi1> to vector<2x16xi1>
    %407 = arith.select %406, %379, %351 : vector<2x16xi1>, vector<2x16xf32>
    %408 = vector.shape_cast %404 : vector<2x1xi1> to vector<2x1xi1>
    %409 = vector.broadcast %408 : vector<2x1xi1> to vector<2x16xi1>
    %410 = arith.select %409, %402, %354 : vector<2x16xi1>, vector<2x16xf32>
    %c12 = arith.constant 12 : index
    %c0_110 = arith.constant 0 : index
    %411 = vector.load %arg29[%c12, %c0_110] : memref<16x48xf32, #tpu.memory_space<vmem>>, vector<2x48xf32>
    %412 = tpu.concatenate %407, %410 in 1 : vector<2x16xf32>, vector<2x16xf32> -> vector<2x32xf32>
    %cst_111 = arith.constant dense<0.000000e+00> : vector<2x96xf32>
    %413 = tpu.matmul %412, %68, %cst_111 {dimension_numbers = #tpu.dot_dimension_numbers<[1], [0], [0], [1], [0, 0, 1, 1], [], []>} : vector<2x32xf32>, vector<32x96xf32>, vector<2x96xf32> -> vector<2x96xf32>
    %414 = vector.broadcast %69 : vector<1x96xf32> to vector<2x96xf32>
    %415 = arith.addf %413, %414 : vector<2x96xf32>
    %416 = vector.extract_strided_slice %411 {offsets = [0, 0], sizes = [2, 32], strides = [1, 1]} : vector<2x48xf32> to vector<2x32xf32>
    %417 = vector.extract_strided_slice %415 {offsets = [0, 0], sizes = [2, 32], strides = [1, 1]} : vector<2x96xf32> to vector<2x32xf32>
    %418 = arith.addf %416, %417 : vector<2x32xf32>
    %419 = arith.negf %418 : vector<2x32xf32>
    %420 = math.exp %419 : vector<2x32xf32>
    %cst_112 = arith.constant 1.000000e+00 : f32
    %421 = vector.broadcast %cst_112 : f32 to vector<2x32xf32>
    %422 = arith.addf %421, %420 : vector<2x32xf32>
    %423 = arith.divf %421, %422 : vector<2x32xf32>
    %424 = vector.extract_strided_slice %423 {offsets = [0, 0], sizes = [2, 16], strides = [1, 1]} : vector<2x32xf32> to vector<2x16xf32>
    %425 = vector.extract_strided_slice %423 {offsets = [0, 16], sizes = [2, 16], strides = [1, 1]} : vector<2x32xf32> to vector<2x16xf32>
    %426 = vector.extract_strided_slice %411 {offsets = [0, 32], sizes = [2, 16], strides = [1, 1]} : vector<2x48xf32> to vector<2x16xf32>
    %427 = vector.extract_strided_slice %415 {offsets = [0, 32], sizes = [2, 16], strides = [1, 1]} : vector<2x96xf32> to vector<2x16xf32>
    %428 = arith.mulf %424, %427 : vector<2x16xf32>
    %429 = arith.addf %426, %428 : vector<2x16xf32>
    %430 = math.tanh %429 : vector<2x16xf32>
    %cst_113 = arith.constant 1.000000e+00 : f32
    %431 = vector.broadcast %cst_113 : f32 to vector<2x16xf32>
    %432 = arith.subf %431, %425 : vector<2x16xf32>
    %433 = arith.mulf %432, %430 : vector<2x16xf32>
    %434 = arith.mulf %425, %407 : vector<2x16xf32>
    %435 = arith.addf %433, %434 : vector<2x16xf32>
    %cst_114 = arith.constant dense<0.000000e+00> : vector<2x48xf32>
    %436 = tpu.matmul %435, %70, %cst_114 {dimension_numbers = #tpu.dot_dimension_numbers<[1], [0], [0], [1], [0, 0, 1, 1], [], []>} : vector<2x16xf32>, vector<16x48xf32>, vector<2x48xf32> -> vector<2x48xf32>
    %437 = vector.extract_strided_slice %436 {offsets = [0, 0], sizes = [2, 32], strides = [1, 1]} : vector<2x48xf32> to vector<2x32xf32>
    %438 = vector.extract_strided_slice %415 {offsets = [0, 48], sizes = [2, 32], strides = [1, 1]} : vector<2x96xf32> to vector<2x32xf32>
    %439 = arith.addf %437, %438 : vector<2x32xf32>
    %440 = arith.negf %439 : vector<2x32xf32>
    %441 = math.exp %440 : vector<2x32xf32>
    %cst_115 = arith.constant 1.000000e+00 : f32
    %442 = vector.broadcast %cst_115 : f32 to vector<2x32xf32>
    %443 = arith.addf %442, %441 : vector<2x32xf32>
    %444 = arith.divf %442, %443 : vector<2x32xf32>
    %445 = vector.extract_strided_slice %444 {offsets = [0, 0], sizes = [2, 16], strides = [1, 1]} : vector<2x32xf32> to vector<2x16xf32>
    %446 = vector.extract_strided_slice %444 {offsets = [0, 16], sizes = [2, 16], strides = [1, 1]} : vector<2x32xf32> to vector<2x16xf32>
    %447 = vector.extract_strided_slice %436 {offsets = [0, 32], sizes = [2, 16], strides = [1, 1]} : vector<2x48xf32> to vector<2x16xf32>
    %448 = vector.broadcast %71 : vector<1x16xf32> to vector<2x16xf32>
    %449 = arith.addf %447, %448 : vector<2x16xf32>
    %450 = vector.extract_strided_slice %415 {offsets = [0, 80], sizes = [2, 16], strides = [1, 1]} : vector<2x96xf32> to vector<2x16xf32>
    %451 = arith.mulf %445, %450 : vector<2x16xf32>
    %452 = arith.addf %449, %451 : vector<2x16xf32>
    %453 = math.tanh %452 : vector<2x16xf32>
    %cst_116 = arith.constant 1.000000e+00 : f32
    %454 = vector.broadcast %cst_116 : f32 to vector<2x16xf32>
    %455 = arith.subf %454, %446 : vector<2x16xf32>
    %456 = arith.mulf %455, %453 : vector<2x16xf32>
    %457 = arith.mulf %446, %410 : vector<2x16xf32>
    %458 = arith.addf %456, %457 : vector<2x16xf32>
    %c6_i32 = arith.constant 6 : i32
    %459 = vector.broadcast %c6_i32 : i32 to vector<2x1xi32>
    %460 = arith.cmpi sgt, %72, %459 : vector<2x1xi32>
    %461 = vector.shape_cast %460 : vector<2x1xi1> to vector<2x1xi1>
    %462 = vector.broadcast %461 : vector<2x1xi1> to vector<2x16xi1>
    %463 = arith.select %462, %435, %407 : vector<2x16xi1>, vector<2x16xf32>
    %464 = vector.shape_cast %460 : vector<2x1xi1> to vector<2x1xi1>
    %465 = vector.broadcast %464 : vector<2x1xi1> to vector<2x16xi1>
    %466 = arith.select %465, %458, %410 : vector<2x16xi1>, vector<2x16xf32>
    %c14 = arith.constant 14 : index
    %c0_117 = arith.constant 0 : index
    %467 = vector.load %arg29[%c14, %c0_117] : memref<16x48xf32, #tpu.memory_space<vmem>>, vector<2x48xf32>
    %468 = tpu.concatenate %463, %466 in 1 : vector<2x16xf32>, vector<2x16xf32> -> vector<2x32xf32>
    %cst_118 = arith.constant dense<0.000000e+00> : vector<2x96xf32>
    %469 = tpu.matmul %468, %68, %cst_118 {dimension_numbers = #tpu.dot_dimension_numbers<[1], [0], [0], [1], [0, 0, 1, 1], [], []>} : vector<2x32xf32>, vector<32x96xf32>, vector<2x96xf32> -> vector<2x96xf32>
    %470 = vector.broadcast %69 : vector<1x96xf32> to vector<2x96xf32>
    %471 = arith.addf %469, %470 : vector<2x96xf32>
    %472 = vector.extract_strided_slice %467 {offsets = [0, 0], sizes = [2, 32], strides = [1, 1]} : vector<2x48xf32> to vector<2x32xf32>
    %473 = vector.extract_strided_slice %471 {offsets = [0, 0], sizes = [2, 32], strides = [1, 1]} : vector<2x96xf32> to vector<2x32xf32>
    %474 = arith.addf %472, %473 : vector<2x32xf32>
    %475 = arith.negf %474 : vector<2x32xf32>
    %476 = math.exp %475 : vector<2x32xf32>
    %cst_119 = arith.constant 1.000000e+00 : f32
    %477 = vector.broadcast %cst_119 : f32 to vector<2x32xf32>
    %478 = arith.addf %477, %476 : vector<2x32xf32>
    %479 = arith.divf %477, %478 : vector<2x32xf32>
    %480 = vector.extract_strided_slice %479 {offsets = [0, 0], sizes = [2, 16], strides = [1, 1]} : vector<2x32xf32> to vector<2x16xf32>
    %481 = vector.extract_strided_slice %479 {offsets = [0, 16], sizes = [2, 16], strides = [1, 1]} : vector<2x32xf32> to vector<2x16xf32>
    %482 = vector.extract_strided_slice %467 {offsets = [0, 32], sizes = [2, 16], strides = [1, 1]} : vector<2x48xf32> to vector<2x16xf32>
    %483 = vector.extract_strided_slice %471 {offsets = [0, 32], sizes = [2, 16], strides = [1, 1]} : vector<2x96xf32> to vector<2x16xf32>
    %484 = arith.mulf %480, %483 : vector<2x16xf32>
    %485 = arith.addf %482, %484 : vector<2x16xf32>
    %486 = math.tanh %485 : vector<2x16xf32>
    %cst_120 = arith.constant 1.000000e+00 : f32
    %487 = vector.broadcast %cst_120 : f32 to vector<2x16xf32>
    %488 = arith.subf %487, %481 : vector<2x16xf32>
    %489 = arith.mulf %488, %486 : vector<2x16xf32>
    %490 = arith.mulf %481, %463 : vector<2x16xf32>
    %491 = arith.addf %489, %490 : vector<2x16xf32>
    %cst_121 = arith.constant dense<0.000000e+00> : vector<2x48xf32>
    %492 = tpu.matmul %491, %70, %cst_121 {dimension_numbers = #tpu.dot_dimension_numbers<[1], [0], [0], [1], [0, 0, 1, 1], [], []>} : vector<2x16xf32>, vector<16x48xf32>, vector<2x48xf32> -> vector<2x48xf32>
    %493 = vector.extract_strided_slice %492 {offsets = [0, 0], sizes = [2, 32], strides = [1, 1]} : vector<2x48xf32> to vector<2x32xf32>
    %494 = vector.extract_strided_slice %471 {offsets = [0, 48], sizes = [2, 32], strides = [1, 1]} : vector<2x96xf32> to vector<2x32xf32>
    %495 = arith.addf %493, %494 : vector<2x32xf32>
    %496 = arith.negf %495 : vector<2x32xf32>
    %497 = math.exp %496 : vector<2x32xf32>
    %cst_122 = arith.constant 1.000000e+00 : f32
    %498 = vector.broadcast %cst_122 : f32 to vector<2x32xf32>
    %499 = arith.addf %498, %497 : vector<2x32xf32>
    %500 = arith.divf %498, %499 : vector<2x32xf32>
    %501 = vector.extract_strided_slice %500 {offsets = [0, 0], sizes = [2, 16], strides = [1, 1]} : vector<2x32xf32> to vector<2x16xf32>
    %502 = vector.extract_strided_slice %500 {offsets = [0, 16], sizes = [2, 16], strides = [1, 1]} : vector<2x32xf32> to vector<2x16xf32>
    %503 = vector.extract_strided_slice %492 {offsets = [0, 32], sizes = [2, 16], strides = [1, 1]} : vector<2x48xf32> to vector<2x16xf32>
    %504 = vector.broadcast %71 : vector<1x16xf32> to vector<2x16xf32>
    %505 = arith.addf %503, %504 : vector<2x16xf32>
    %506 = vector.extract_strided_slice %471 {offsets = [0, 80], sizes = [2, 16], strides = [1, 1]} : vector<2x96xf32> to vector<2x16xf32>
    %507 = arith.mulf %501, %506 : vector<2x16xf32>
    %508 = arith.addf %505, %507 : vector<2x16xf32>
    %509 = math.tanh %508 : vector<2x16xf32>
    %cst_123 = arith.constant 1.000000e+00 : f32
    %510 = vector.broadcast %cst_123 : f32 to vector<2x16xf32>
    %511 = arith.subf %510, %502 : vector<2x16xf32>
    %512 = arith.mulf %511, %509 : vector<2x16xf32>
    %513 = arith.mulf %502, %466 : vector<2x16xf32>
    %514 = arith.addf %512, %513 : vector<2x16xf32>
    %c7_i32 = arith.constant 7 : i32
    %515 = vector.broadcast %c7_i32 : i32 to vector<2x1xi32>
    %516 = arith.cmpi sgt, %72, %515 : vector<2x1xi32>
    %517 = vector.shape_cast %516 : vector<2x1xi1> to vector<2x1xi1>
    %518 = vector.broadcast %517 : vector<2x1xi1> to vector<2x16xi1>
    %519 = arith.select %518, %514, %466 : vector<2x16xi1>, vector<2x16xf32>
    %c0_124 = arith.constant 0 : index
    %c0_125 = arith.constant 0 : index
    %520 = vector.load %arg24[%c0_124, %c0_125] : memref<8x1xf32, #tpu.memory_space<vmem>>, vector<8x1xf32>
    %cst_126 = arith.constant dense<0.000000e+00> : vector<2x1xf32>
    %521 = tpu.matmul %16, %520, %cst_126 {dimension_numbers = #tpu.dot_dimension_numbers<[1], [0], [0], [1], [0, 0, 1, 1], [], []>} : vector<2x8xf32>, vector<8x1xf32>, vector<2x1xf32> -> vector<2x1xf32>
    %c0_127 = arith.constant 0 : index
    %c0_128 = arith.constant 0 : index
    %522 = vector.load %arg25[%c0_127, %c0_128] : memref<32x1xf32, #tpu.memory_space<vmem>>, vector<32x1xf32>
    %cst_129 = arith.constant dense<0.000000e+00> : vector<2x1xf32>
    %523 = tpu.matmul %49, %522, %cst_129 {dimension_numbers = #tpu.dot_dimension_numbers<[1], [0], [0], [1], [0, 0, 1, 1], [], []>} : vector<2x32xf32>, vector<32x1xf32>, vector<2x1xf32> -> vector<2x1xf32>
    %524 = arith.addf %521, %523 : vector<2x1xf32>
    %c0_130 = arith.constant 0 : index
    %c0_131 = arith.constant 0 : index
    %525 = vector.load %arg26[%c0_130, %c0_131] : memref<16x1xf32, #tpu.memory_space<vmem>>, vector<16x1xf32>
    %cst_132 = arith.constant dense<0.000000e+00> : vector<2x1xf32>
    %526 = tpu.matmul %519, %525, %cst_132 {dimension_numbers = #tpu.dot_dimension_numbers<[1], [0], [0], [1], [0, 0, 1, 1], [], []>} : vector<2x16xf32>, vector<16x1xf32>, vector<2x1xf32> -> vector<2x1xf32>
    %527 = arith.addf %524, %526 : vector<2x1xf32>
    %c0_133 = arith.constant 0 : index
    %c0_134 = arith.constant 0 : index
    %528 = vector.load %arg27[%c0_133, %c0_134] : memref<1x1xf32, #tpu.memory_space<vmem>>, vector<1x1xf32>
    %529 = vector.broadcast %528 : vector<1x1xf32> to vector<2x1xf32>
    %530 = arith.addf %527, %529 : vector<2x1xf32>
    %c0_135 = arith.constant 0 : index
    %c0_136 = arith.constant 0 : index
    %531 = vector.load %arg28[%c0_135, %c0_136] : memref<2x1xf32, #tpu.memory_space<vmem>>, vector<2x1xf32>
    tpu.vector_store %arg28[%c0_135, %c0_136], %530 {strides = array<i32>} : memref<2x1xf32, #tpu.memory_space<vmem>>, vector<2x1xf32>,
    return
  }
  func.func @transform_0(%arg0: i32) -> (i32, i32) {
    %c0_i32 = arith.constant 0 : i32
    %c0_i32_0 = arith.constant 0 : i32
    return %arg0, %c0_i32 : i32, i32
  }
  func.func @transform_1(%arg0: i32) -> (i32, i32) {
    %c0_i32 = arith.constant 0 : i32
    %c0_i32_0 = arith.constant 0 : i32
    return %arg0, %c0_i32 : i32, i32
  }
  func.func @transform_2(%arg0: i32) -> (i32, i32, i32) {
    %c0_i32 = arith.constant 0 : i32
    %c0_i32_0 = arith.constant 0 : i32
    %c0_i32_1 = arith.constant 0 : i32
    return %arg0, %c0_i32, %c0_i32_0 : i32, i32, i32
  }
  func.func @transform_3(%arg0: i32) -> (i32, i32) {
    %c0_i32 = arith.constant 0 : i32
    %c0_i32_0 = arith.constant 0 : i32
    return %arg0, %c0_i32 : i32, i32
  }
  func.func @transform_4(%arg0: i32) -> (i32, i32) {
    %c0_i32 = arith.constant 0 : i32
    %c0_i32_0 = arith.constant 0 : i32
    %c0_i32_1 = arith.constant 0 : i32
    return %c0_i32, %c0_i32_0 : i32, i32
  }
  func.func @transform_5(%arg0: i32) -> (i32, i32) {
    %c0_i32 = arith.constant 0 : i32
    %c0_i32_0 = arith.constant 0 : i32
    %c0_i32_1 = arith.constant 0 : i32
    return %c0_i32, %c0_i32_0 : i32, i32
  }
  func.func @transform_6(%arg0: i32) -> (i32, i32) {
    %c0_i32 = arith.constant 0 : i32
    %c0_i32_0 = arith.constant 0 : i32
    %c0_i32_1 = arith.constant 0 : i32
    return %c0_i32, %c0_i32_0 : i32, i32
  }
  func.func @transform_7(%arg0: i32) -> (i32, i32) {
    %c0_i32 = arith.constant 0 : i32
    %c0_i32_0 = arith.constant 0 : i32
    %c0_i32_1 = arith.constant 0 : i32
    return %c0_i32, %c0_i32_0 : i32, i32
  }
  func.func @transform_8(%arg0: i32) -> (i32, i32) {
    %c0_i32 = arith.constant 0 : i32
    %c0_i32_0 = arith.constant 0 : i32
    %c0_i32_1 = arith.constant 0 : i32
    return %c0_i32, %c0_i32_0 : i32, i32
  }
  func.func @transform_9(%arg0: i32) -> (i32, i32) {
    %c0_i32 = arith.constant 0 : i32
    %c0_i32_0 = arith.constant 0 : i32
    %c0_i32_1 = arith.constant 0 : i32
    return %c0_i32, %c0_i32_0 : i32, i32
  }
  func.func @transform_10(%arg0: i32) -> (i32, i32) {
    %c0_i32 = arith.constant 0 : i32
    %c0_i32_0 = arith.constant 0 : i32
    %c0_i32_1 = arith.constant 0 : i32
    return %c0_i32, %c0_i32_0 : i32, i32
  }
  func.func @transform_11(%arg0: i32) -> (i32, i32) {
    %c0_i32 = arith.constant 0 : i32
    %c0_i32_0 = arith.constant 0 : i32
    %c0_i32_1 = arith.constant 0 : i32
    return %c0_i32, %c0_i32_0 : i32, i32
  }
  func.func @transform_12(%arg0: i32) -> (i32, i32) {
    %c0_i32 = arith.constant 0 : i32
    %c0_i32_0 = arith.constant 0 : i32
    %c0_i32_1 = arith.constant 0 : i32
    return %c0_i32, %c0_i32_0 : i32, i32
  }
  func.func @transform_13(%arg0: i32) -> (i32, i32) {
    %c0_i32 = arith.constant 0 : i32
    %c0_i32_0 = arith.constant 0 : i32
    %c0_i32_1 = arith.constant 0 : i32
    return %c0_i32, %c0_i32_0 : i32, i32
  }
  func.func @transform_14(%arg0: i32) -> (i32, i32) {
    %c0_i32 = arith.constant 0 : i32
    %c0_i32_0 = arith.constant 0 : i32
    %c0_i32_1 = arith.constant 0 : i32
    return %c0_i32, %c0_i32_0 : i32, i32
  }
  func.func @transform_15(%arg0: i32) -> (i32, i32) {
    %c0_i32 = arith.constant 0 : i32
    %c0_i32_0 = arith.constant 0 : i32
    %c0_i32_1 = arith.constant 0 : i32
    return %c0_i32, %c0_i32_0 : i32, i32
  }
  func.func @transform_16(%arg0: i32) -> (i32, i32) {
    %c0_i32 = arith.constant 0 : i32
    %c0_i32_0 = arith.constant 0 : i32
    %c0_i32_1 = arith.constant 0 : i32
    return %c0_i32, %c0_i32_0 : i32, i32
  }
  func.func @transform_17(%arg0: i32) -> (i32, i32) {
    %c0_i32 = arith.constant 0 : i32
    %c0_i32_0 = arith.constant 0 : i32
    %c0_i32_1 = arith.constant 0 : i32
    return %c0_i32, %c0_i32_0 : i32, i32
  }
  func.func @transform_18(%arg0: i32) -> (i32, i32) {
    %c0_i32 = arith.constant 0 : i32
    %c0_i32_0 = arith.constant 0 : i32
    %c0_i32_1 = arith.constant 0 : i32
    return %c0_i32, %c0_i32_0 : i32, i32
  }
  func.func @transform_19(%arg0: i32) -> (i32, i32) {
    %c0_i32 = arith.constant 0 : i32
    %c0_i32_0 = arith.constant 0 : i32
    %c0_i32_1 = arith.constant 0 : i32
    return %c0_i32, %c0_i32_0 : i32, i32
  }
  func.func @transform_20(%arg0: i32) -> (i32, i32) {
    %c0_i32 = arith.constant 0 : i32
    %c0_i32_0 = arith.constant 0 : i32
    %c0_i32_1 = arith.constant 0 : i32
    return %c0_i32, %c0_i32_0 : i32, i32
  }
  func.func @transform_21(%arg0: i32) -> (i32, i32) {
    %c0_i32 = arith.constant 0 : i32
    %c0_i32_0 = arith.constant 0 : i32
    %c0_i32_1 = arith.constant 0 : i32
    return %c0_i32, %c0_i32_0 : i32, i32
  }
  func.func @transform_22(%arg0: i32) -> (i32, i32) {
    %c0_i32 = arith.constant 0 : i32
    %c0_i32_0 = arith.constant 0 : i32
    %c0_i32_1 = arith.constant 0 : i32
    return %c0_i32, %c0_i32_0 : i32, i32
  }
  func.func @transform_23(%arg0: i32) -> (i32, i32) {
    %c0_i32 = arith.constant 0 : i32
    %c0_i32_0 = arith.constant 0 : i32
    %c0_i32_1 = arith.constant 0 : i32
    return %c0_i32, %c0_i32_0 : i32, i32
  }
  func.func @transform_24(%arg0: i32) -> (i32, i32) {
    %c0_i32 = arith.constant 0 : i32
    %c0_i32_0 = arith.constant 0 : i32
    %c0_i32_1 = arith.constant 0 : i32
    return %c0_i32, %c0_i32_0 : i32, i32
  }
  func.func @transform_25(%arg0: i32) -> (i32, i32) {
    %c0_i32 = arith.constant 0 : i32
    %c0_i32_0 = arith.constant 0 : i32
    %c0_i32_1 = arith.constant 0 : i32
    return %c0_i32, %c0_i32_0 : i32, i32
  }
  func.func @transform_26(%arg0: i32) -> (i32, i32) {
    %c0_i32 = arith.constant 0 : i32
    %c0_i32_0 = arith.constant 0 : i32
    %c0_i32_1 = arith.constant 0 : i32
    return %c0_i32, %c0_i32_0 : i32, i32
  }
  func.func @transform_27(%arg0: i32) -> (i32, i32) {
    %c0_i32 = arith.constant 0 : i32
    %c0_i32_0 = arith.constant 0 : i32
    return %arg0, %c0_i32 : i32, i32
  }
}

</mosaic_0001>

<llo_original>
// kernel: tpu_custom_call.1
$region0: #{tpu_custom_call.1}
  #allocation0 [shape = 'u32[]', space=smem, size = 0x4, offset = 0x4, fixed_abs, tag = 'smem constant byte address 0x4 - core index']
  #allocation1 [shape = 'u32[144,128]{1,0:T(1,128)}', space=vmem, size = 0x12000, scoped, tag = 'internal scratch']
  #allocation2 [shape = 'f32[16,48]{1,0:T(8,128)}', space=vmem, size = 0x2000, scoped, tag = 'scratch operand']
  #allocation3 [shape = 'f32[1,1]{1,0:T(1,128)S(1)}', space=vmem, size = 0x200, scoped, tag = 'scoped memory for tpu_custom_call.1']
  %s0 = inlined_call_operand.vmem [shape: f32[2,8], index: 0, kind: input, shape index: {}]
  %s1 = inlined_call_operand.vmem [shape: f32[2,16], index: 1, kind: input, shape index: {}]
  %s2 = inlined_call_operand.vmem [shape: f32[1,16,8], index: 2, kind: input, shape index: {}]
  %s3 = inlined_call_operand.vmem [shape: s32[2,1], index: 3, kind: input, shape index: {}]
  %s4 = inlined_call_operand.vmem [shape: f32[8,64], index: 4, kind: input, shape index: {}]
  %s5 = inlined_call_operand.vmem [shape: f32[8,64], index: 5, kind: input, shape index: {}]
  %s6 = inlined_call_operand.vmem [shape: f32[64,16], index: 6, kind: input, shape index: {}]
  %s7 = inlined_call_operand.vmem [shape: f32[16,8], index: 7, kind: input, shape index: {}]
  %s8 = inlined_call_operand.hbm [shape: f32[1,8], index: 8, kind: input, shape index: {}]
  %s9 = inlined_call_operand.vmem [shape: f32[16,32], index: 9, kind: input, shape index: {}]
  %s10 = inlined_call_operand.vmem [shape: f32[1,32], index: 10, kind: input, shape index: {}]
  %s11 = inlined_call_operand.vmem [shape: f32[32,32], index: 11, kind: input, shape index: {}]
  %s12 = inlined_call_operand.vmem [shape: f32[1,32], index: 12, kind: input, shape index: {}]
  %s13 = inlined_call_operand.vmem [shape: f32[32,32], index: 13, kind: input, shape index: {}]
  %s14 = inlined_call_operand.vmem [shape: f32[1,32], index: 14, kind: input, shape index: {}]
  %s15 = inlined_call_operand.vmem [shape: f32[8,16], index: 15, kind: input, shape index: {}]
  %s16 = inlined_call_operand.vmem [shape: f32[1,16], index: 16, kind: input, shape index: {}]
  %s17 = inlined_call_operand.vmem [shape: f32[16,48], index: 17, kind: input, shape index: {}]
  %s18 = inlined_call_operand.vmem [shape: f32[1,48], index: 18, kind: input, shape index: {}]
  %s19 = inlined_call_operand.vmem [shape: f32[32,96], index: 19, kind: input, shape index: {}]
  %s20 = inlined_call_operand.vmem [shape: f32[1,96], index: 20, kind: input, shape index: {}]
  %s21 = inlined_call_operand.vmem [shape: f32[16,48], index: 21, kind: input, shape index: {}]
  %s22 = inlined_call_operand.vmem [shape: f32[1,16], index: 22, kind: input, shape index: {}]
  %s23 = inlined_call_operand.vmem [shape: f32[8,1], index: 23, kind: input, shape index: {}]
  %s24 = inlined_call_operand.vmem [shape: f32[32,1], index: 24, kind: input, shape index: {}]
  %s25 = inlined_call_operand.vmem [shape: f32[16,1], index: 25, kind: input, shape index: {}]
  %s26 = inlined_call_operand.<no memory space> [shape: f32[1,1], index: 26, kind: input, shape index: {}]
  %s27 = inlined_call_operand.vmem [shape: f32[2,1], index: 27, kind: output, shape index: {}]
  %s28 = sld [smem:[#allocation0]]
  $region122: #{tpu_custom_call.1} parent=0
    _
  %s30 = ssub.s32 1, %s28
  %s31 = scalar_select 0, %s30, %s28
  %v32 = vstv %s26
  %33 = vst [vmem:[#allocation3] sm:$0x1] %v32
  $region1: #{tpu_custom_call.1} parent=0
    #allocation4 [shape = 'u8[512]{0}', space=vmem, size = 0x400, scoped, tag = 'input window, operand 8, single buffered']
    #allocation5 [shape = 's32[1]{0}', space=sflag, size = 0x4, scoped, tag = 'scoped memory for tpu_custom_call.1']
    %34 = vsyncpa [#allocation5], 0
    // Predicated region
    $region2: #{tpu_custom_call.1} parent=1 // pred_check
      _
    $region3: #{tpu_custom_call.1} parent=1 // pred_check_branch
      %36 = sbr.rel (0) target = $region5
    $region4: #{tpu_custom_call.1} parent=1 // pred_region
      _
    $region5: #{tpu_custom_call.1} parent=1 // pred_fallthru
      _
    // Predicated region
    $region6: #{tpu_custom_call.1} parent=1 // pred_check
      _
    $region7: #{tpu_custom_call.1} parent=1 // pred_check_branch
      %38 = sbr.rel (0) target = $region9
    $region8: #{tpu_custom_call.1} parent=1 // pred_region
      _
    $region9: #{tpu_custom_call.1} parent=1 // pred_fallthru
      _
    // Predicated region
    $region10: #{tpu_custom_call.1} parent=1 // pred_check
      _
    $region11: #{tpu_custom_call.1} parent=1 // pred_check_branch
      %40 = sbr.rel (0) target = $region13
    $region12: #{tpu_custom_call.1} parent=1 // pred_region
      _
    $region13: #{tpu_custom_call.1} parent=1 // pred_fallthru
      _
    // Predicated region
    $region14: #{tpu_custom_call.1} parent=1 // pred_check
      _
    $region15: #{tpu_custom_call.1} parent=1 // pred_check_branch
      %42 = sbr.rel (0) target = $region17
    $region16: #{tpu_custom_call.1} parent=1 // pred_region
      _
    $region17: #{tpu_custom_call.1} parent=1 // pred_fallthru
      _
    // Predicated region
    $region18: #{tpu_custom_call.1} parent=1 // pred_check
      _
    $region19: #{tpu_custom_call.1} parent=1 // pred_check_branch
      %44 = sbr.rel (0) target = $region21
    $region20: #{tpu_custom_call.1} parent=1 // pred_region
      _
    $region21: #{tpu_custom_call.1} parent=1 // pred_fallthru
      _
    // Predicated region
    $region22: #{tpu_custom_call.1} parent=1 // pred_check
      _
    $region23: #{tpu_custom_call.1} parent=1 // pred_check_branch
      %46 = sbr.rel (0) target = $region25
    $region24: #{tpu_custom_call.1} parent=1 // pred_region
      _
    $region25: #{tpu_custom_call.1} parent=1 // pred_fallthru
      _
    // Predicated region
    $region26: #{tpu_custom_call.1} parent=1 // pred_check
      _
    $region27: #{tpu_custom_call.1} parent=1 // pred_check_branch
      %48 = sbr.rel (0) target = $region29
    $region28: #{tpu_custom_call.1} parent=1 // pred_region
      _
    $region29: #{tpu_custom_call.1} parent=1 // pred_fallthru
      _
    // Predicated region
    $region30: #{tpu_custom_call.1} parent=1 // pred_check
      _
    $region31: #{tpu_custom_call.1} parent=1 // pred_check_branch
      %50 = sbr.rel (0) target = $region33
    $region32: #{tpu_custom_call.1} parent=1 // pred_region
      _
    $region33: #{tpu_custom_call.1} parent=1 // pred_fallthru
      _
    // Predicated region
    $region34: #{tpu_custom_call.1} parent=1 // pred_check
      _
    $region35: #{tpu_custom_call.1} parent=1 // pred_check_branch
      %52 = sbr.rel (0) target = $region37
    $region36: #{tpu_custom_call.1} parent=1 // pred_region
      %s54 = ssub.s32 16, 16
      %55 = vsyncadd [#allocation5], %s54
      %s57 = sshll.u32 [#allocation4], 4
      %s58 = int_to_ptr.vmem [resolvable:$true] %s57
      %60 = dma.hbm_to_vmem [thread:$0]  %s8, 16, %s58, [#allocation5]
    $region37: #{tpu_custom_call.1} parent=1 // pred_fallthru
      _
    // Predicated region
    $region38: #{tpu_custom_call.1} parent=1 // pred_check
      _
    $region39: #{tpu_custom_call.1} parent=1 // pred_check_branch
      %62 = sbr.rel (0) target = $region41
    $region40: #{tpu_custom_call.1} parent=1 // pred_region
      _
    $region41: #{tpu_custom_call.1} parent=1 // pred_fallthru
      _
    // Predicated region
    $region42: #{tpu_custom_call.1} parent=1 // pred_check
      _
    $region43: #{tpu_custom_call.1} parent=1 // pred_check_branch
      %64 = sbr.rel (0) target = $region45
    $region44: #{tpu_custom_call.1} parent=1 // pred_region
      _
    $region45: #{tpu_custom_call.1} parent=1 // pred_fallthru
      _
    // Predicated region
    $region46: #{tpu_custom_call.1} parent=1 // pred_check
      _
    $region47: #{tpu_custom_call.1} parent=1 // pred_check_branch
      %66 = sbr.rel (0) target = $region49
    $region48: #{tpu_custom_call.1} parent=1 // pred_region
      _
    $region49: #{tpu_custom_call.1} parent=1 // pred_fallthru
      _
    // Predicated region
    $region50: #{tpu_custom_call.1} parent=1 // pred_check
      _
    $region51: #{tpu_custom_call.1} parent=1 // pred_check_branch
      %68 = sbr.rel (0) target = $region53
    $region52: #{tpu_custom_call.1} parent=1 // pred_region
      _
    $region53: #{tpu_custom_call.1} parent=1 // pred_fallthru
      _
    // Predicated region
    $region54: #{tpu_custom_call.1} parent=1 // pred_check
      _
    $region55: #{tpu_custom_call.1} parent=1 // pred_check_branch
      %70 = sbr.rel (0) target = $region57
    $region56: #{tpu_custom_call.1} parent=1 // pred_region
      _
    $region57: #{tpu_custom_call.1} parent=1 // pred_fallthru
      _
    // Predicated region
    $region58: #{tpu_custom_call.1} parent=1 // pred_check
      _
    $region59: #{tpu_custom_call.1} parent=1 // pred_check_branch
      %72 = sbr.rel (0) target = $region61
    $region60: #{tpu_custom_call.1} parent=1 // pred_region
      _
    $region61: #{tpu_custom_call.1} parent=1 // pred_fallthru
      _
    // Predicated region
    $region62: #{tpu_custom_call.1} parent=1 // pred_check
      _
    $region63: #{tpu_custom_call.1} parent=1 // pred_check_branch
      %74 = sbr.rel (0) target = $region65
    $region64: #{tpu_custom_call.1} parent=1 // pred_region
      _
    $region65: #{tpu_custom_call.1} parent=1 // pred_fallthru
      _
    // Predicated region
    $region66: #{tpu_custom_call.1} parent=1 // pred_check
      _
    $region67: #{tpu_custom_call.1} parent=1 // pred_check_branch
      %76 = sbr.rel (0) target = $region69
    $region68: #{tpu_custom_call.1} parent=1 // pred_region
      _
    $region69: #{tpu_custom_call.1} parent=1 // pred_fallthru
      _
    // Predicated region
    $region70: #{tpu_custom_call.1} parent=1 // pred_check
      _
    $region71: #{tpu_custom_call.1} parent=1 // pred_check_branch
      %78 = sbr.rel (0) target = $region73
    $region72: #{tpu_custom_call.1} parent=1 // pred_region
      _
    $region73: #{tpu_custom_call.1} parent=1 // pred_fallthru
      _
    // Predicated region
    $region74: #{tpu_custom_call.1} parent=1 // pred_check
      _
    $region75: #{tpu_custom_call.1} parent=1 // pred_check_branch
      %80 = sbr.rel (0) target = $region77
    $region76: #{tpu_custom_call.1} parent=1 // pred_region
      _
    $region77: #{tpu_custom_call.1} parent=1 // pred_fallthru
      _
    // Predicated region
    $region78: #{tpu_custom_call.1} parent=1 // pred_check
      _
    $region79: #{tpu_custom_call.1} parent=1 // pred_check_branch
      %82 = sbr.rel (0) target = $region81
    $region80: #{tpu_custom_call.1} parent=1 // pred_region
      _
    $region81: #{tpu_custom_call.1} parent=1 // pred_fallthru
      _
    // Predicated region
    $region82: #{tpu_custom_call.1} parent=1 // pred_check
      _
    $region83: #{tpu_custom_call.1} parent=1 // pred_check_branch
      %84 = sbr.rel (0) target = $region85
    $region84: #{tpu_custom_call.1} parent=1 // pred_region
      _
    $region85: #{tpu_custom_call.1} parent=1 // pred_fallthru
      _
    // Predicated region
    $region86: #{tpu_custom_call.1} parent=1 // pred_check
      _
    $region87: #{tpu_custom_call.1} parent=1 // pred_check_branch
      %86 = sbr.rel (0) target = $region89
    $region88: #{tpu_custom_call.1} parent=1 // pred_region
      _
    $region89: #{tpu_custom_call.1} parent=1 // pred_fallthru
      _
    // Predicated region
    $region90: #{tpu_custom_call.1} parent=1 // pred_check
      _
    $region91: #{tpu_custom_call.1} parent=1 // pred_check_branch
      %88 = sbr.rel (0) target = $region93
    $region92: #{tpu_custom_call.1} parent=1 // pred_region
      _
    $region93: #{tpu_custom_call.1} parent=1 // pred_fallthru
      _
    // Predicated region
    $region94: #{tpu_custom_call.1} parent=1 // pred_check
      _
    $region95: #{tpu_custom_call.1} parent=1 // pred_check_branch
      %90 = sbr.rel (0) target = $region97
    $region96: #{tpu_custom_call.1} parent=1 // pred_region
      _
    $region97: #{tpu_custom_call.1} parent=1 // pred_fallthru
      _
    // Predicated region
    $region98: #{tpu_custom_call.1} parent=1 // pred_check
      _
    $region99: #{tpu_custom_call.1} parent=1 // pred_check_branch
      %92 = sbr.rel (0) target = $region101
    $region100: #{tpu_custom_call.1} parent=1 // pred_region
      _
    $region101: #{tpu_custom_call.1} parent=1 // pred_fallthru
      _
    // Predicated region
    $region102: #{tpu_custom_call.1} parent=1 // pred_check
      _
    $region103: #{tpu_custom_call.1} parent=1 // pred_check_branch
      %94 = sbr.rel (0) target = $region105
    $region104: #{tpu_custom_call.1} parent=1 // pred_region
      _
    $region105: #{tpu_custom_call.1} parent=1 // pred_fallthru
      _
    // Predicated region
    $region106: #{tpu_custom_call.1} parent=1 // pred_check
      _
    $region107: #{tpu_custom_call.1} parent=1 // pred_check_branch
      %96 = sbr.rel (0) target = $region109
    $region108: #{tpu_custom_call.1} parent=1 // pred_region
      _
    $region109: #{tpu_custom_call.1} parent=1 // pred_fallthru
      _
    // Predicated region
    $region110: #{tpu_custom_call.1} parent=1 // pred_check
      _
    $region111: #{tpu_custom_call.1} parent=1 // pred_check_branch
      %98 = sbr.rel (0) target = $region113
    $region112: #{tpu_custom_call.1} parent=1 // pred_region
      %99 = dma.done [#allocation5], 16
    $region113: #{tpu_custom_call.1} parent=1 // pred_fallthru
      _
    %v100 = vld [vmem:[%s0] sm:$0x3]
    %v101 = vld [vmem:[%s4] sm:$0xff]
    %vm102 = vcmask 64512
    %v104 = vsel %vm102, %v100, 0
    %106 = vmatprep.subr.mxu0 0.0
    %107 = vmatpush1.msra.mxu0 0.0
    %108 = vmatprep.subr.mxu0 0.0
    %109 = vmatpush1.msra.mxu0 0.0
    %110 = vmatprep.subr.mxu0 0.0
    %111 = vmatpush1.msra.mxu0 0.0
    %112 = vmatprep.subr.mxu0 0.0
    %113 = vmatpush1.msra.mxu0 0.0
    %114 = vmatprep.subr.mxu0 0.0
    %115 = vmatpush1.msra.mxu0 0.0
    %116 = vmatprep.subr.mxu0 0.0
    %117 = vmatpush1.msra.mxu0 0.0
    %118 = vmatprep.subr.mxu0 0.0
    %119 = vmatpush1.msra.mxu0 0.0
    %120 = vmatprep.subr.mxu0 0.0
    %121 = vmatpush1.msra.mxu0 0.0
    %122 = vmatprep.subr.mxu0 0.0
    %123 = vmatpush1.msra.mxu0 0.0
    %124 = vmatprep.subr.mxu0 0.0
    %125 = vmatpush1.msra.mxu0 0.0
    %126 = vmatprep.subr.mxu0 0.0
    %127 = vmatpush1.msra.mxu0 0.0
    %128 = vmatprep.subr.mxu0 0.0
    %129 = vmatpush1.msra.mxu0 0.0
    %130 = vmatprep.subr.mxu0 0.0
    %131 = vmatpush1.msra.mxu0 0.0
    %132 = vmatprep.subr.mxu0 0.0
    %133 = vmatpush1.msra.mxu0 0.0
    %134 = vmatprep.subr.mxu0 0.0
    %135 = vmatpush1.msra.mxu0 0.0
    %136 = vmatprep.subr.mxu0 0.0
    %137 = vmatpush1.msra.mxu0 %v101
    %138 = vmatprep.subr.mxu0 0.0
    %139 = vmatpush2.msra.mxu0 0.0
    %140 = vmatprep.subr.mxu0 0.0
    %141 = vmatpush2.msra.mxu0 0.0
    %142 = vmatprep.subr.mxu0 0.0
    %143 = vmatpush2.msra.mxu0 0.0
    %144 = vmatprep.subr.mxu0 0.0
    %145 = vmatpush2.msra.mxu0 0.0
    %146 = vmatprep.subr.mxu0 0.0
    %147 = vmatpush2.msra.mxu0 0.0
    %148 = vmatprep.subr.mxu0 0.0
    %149 = vmatpush2.msra.mxu0 0.0
    %150 = vmatprep.subr.mxu0 0.0
    %151 = vmatpush2.msra.mxu0 0.0
    %152 = vmatprep.subr.mxu0 0.0
    %153 = vmatpush2.msra.mxu0 0.0
    %154 = vmatprep.subr.mxu0 0.0
    %155 = vmatpush2.msra.mxu0 0.0
    %156 = vmatprep.subr.mxu0 0.0
    %157 = vmatpush2.msra.mxu0 0.0
    %158 = vmatprep.subr.mxu0 0.0
    %159 = vmatpush2.msra.mxu0 0.0
    %160 = vmatprep.subr.mxu0 0.0
    %161 = vmatpush2.msra.mxu0 0.0
    %162 = vmatprep.subr.mxu0 0.0
    %163 = vmatpush2.msra.mxu0 0.0
    %164 = vmatprep.subr.mxu0 0.0
    %165 = vmatpush2.msra.mxu0 0.0
    %166 = vmatprep.subr.mxu0 0.0
    %167 = vmatpush2.msra.mxu0 0.0
    %168 = vmatprep.subr.mxu0 0.0
    %169 = vmatpush2.msra.mxu0 0.0
    %170 = vmatprep.mubr.f32.mxu0 0.0
    %171 = vmatmul.mubr.f32.gmra.mxu0 %v104
    %v172 = vpop.f32.mrf.mxu0
    %v173 = vadd.f32 0.0, %v172
    %v174 = vpop.f32.mrf.mxu0
    %175 = vdwg.mxu0
    %v176 = vmul.f32 %v173, %v173
    %v177 = vmul.f32 %v100, %v100
    %v178 = vld [vmem:[%s5] sm:$0xff]
    %v180 = vsel %vm102, %v177, 0
    %182 = vmatprep.subr.mxu0 0.0
    %183 = vmatpush1.msra.mxu0 0.0
    %184 = vmatprep.subr.mxu0 0.0
    %185 = vmatpush1.msra.mxu0 0.0
    %186 = vmatprep.subr.mxu0 0.0
    %187 = vmatpush1.msra.mxu0 0.0
    %188 = vmatprep.subr.mxu0 0.0
    %189 = vmatpush1.msra.mxu0 0.0
    %190 = vmatprep.subr.mxu0 0.0
    %191 = vmatpush1.msra.mxu0 0.0
    %192 = vmatprep.subr.mxu0 0.0
    %193 = vmatpush1.msra.mxu0 0.0
    %194 = vmatprep.subr.mxu0 0.0
    %195 = vmatpush1.msra.mxu0 0.0
    %196 = vmatprep.subr.mxu0 0.0
    %197 = vmatpush1.msra.mxu0 0.0
    %198 = vmatprep.subr.mxu0 0.0
    %199 = vmatpush1.msra.mxu0 0.0
    %200 = vmatprep.subr.mxu0 0.0
    %201 = vmatpush1.msra.mxu0 0.0
    %202 = vmatprep.subr.mxu0 0.0
    %203 = vmatpush1.msra.mxu0 0.0
    %204 = vmatprep.subr.mxu0 0.0
    %205 = vmatpush1.msra.mxu0 0.0
    %206 = vmatprep.subr.mxu0 0.0
    %207 = vmatpush1.msra.mxu0 0.0
    %208 = vmatprep.subr.mxu0 0.0
    %209 = vmatpush1.msra.mxu0 0.0
    %210 = vmatprep.subr.mxu0 0.0
    %211 = vmatpush1.msra.mxu0 0.0
    %212 = vmatprep.subr.mxu0 0.0
    %213 = vmatpush1.msra.mxu0 %v178
    %214 = vmatprep.subr.mxu0 0.0
    %215 = vmatpush2.msra.mxu0 0.0
    %216 = vmatprep.subr.mxu0 0.0
    %217 = vmatpush2.msra.mxu0 0.0
    %218 = vmatprep.subr.mxu0 0.0
    %219 = vmatpush2.msra.mxu0 0.0
    %220 = vmatprep.subr.mxu0 0.0
    %221 = vmatpush2.msra.mxu0 0.0
    %222 = vmatprep.subr.mxu0 0.0
    %223 = vmatpush2.msra.mxu0 0.0
    %224 = vmatprep.subr.mxu0 0.0
    %225 = vmatpush2.msra.mxu0 0.0
    %226 = vmatprep.subr.mxu0 0.0
    %227 = vmatpush2.msra.mxu0 0.0
    %228 = vmatprep.subr.mxu0 0.0
    %229 = vmatpush2.msra.mxu0 0.0
    %230 = vmatprep.subr.mxu0 0.0
    %231 = vmatpush2.msra.mxu0 0.0
    %232 = vmatprep.subr.mxu0 0.0
    %233 = vmatpush2.msra.mxu0 0.0
    %234 = vmatprep.subr.mxu0 0.0
    %235 = vmatpush2.msra.mxu0 0.0
    %236 = vmatprep.subr.mxu0 0.0
    %237 = vmatpush2.msra.mxu0 0.0
    %238 = vmatprep.subr.mxu0 0.0
    %239 = vmatpush2.msra.mxu0 0.0
    %240 = vmatprep.subr.mxu0 0.0
    %241 = vmatpush2.msra.mxu0 0.0
    %242 = vmatprep.subr.mxu0 0.0
    %243 = vmatpush2.msra.mxu0 0.0
    %244 = vmatprep.subr.mxu0 0.0
    %245 = vmatpush2.msra.mxu0 0.0
    %246 = vmatprep.mubr.f32.mxu0 0.0
    %247 = vmatmul.mubr.f32.gmra.mxu0 %v180
    %v248 = vpop.f32.mrf.mxu0
    %v249 = vadd.f32 0.0, %v248
    %v250 = vpop.f32.mrf.mxu0
    %251 = vdwg.mxu0
    %v252 = vsub.f32 %v176, %v249
    %v253 = vld [vmem:[%s6] sm:$0xff]
    %v254 = vld [vmem:[%s6 + $0x8] sm:$0xff]
    %v255 = vld [vmem:[%s6 + $0x10] sm:$0xff]
    %v256 = vld [vmem:[%s6 + $0x18] sm:$0xff]
    %v257 = vld [vmem:[%s6 + $0x20] sm:$0xff]
    %v258 = vld [vmem:[%s6 + $0x28] sm:$0xff]
    %v259 = vld [vmem:[%s6 + $0x30] sm:$0xff]
    %v260 = vld [vmem:[%s6 + $0x38] sm:$0xff]
    %vm261 = vcmask 523264
    %v263 = vsel %vm261, %v252, 0
    %265 = vmatprep.subr.mxu0 0.0
    %266 = vmatpush1.msra.mxu0 0.0
    %267 = vmatprep.subr.mxu0 0.0
    %268 = vmatpush1.msra.mxu0 0.0
    %269 = vmatprep.subr.mxu0 0.0
    %270 = vmatpush1.msra.mxu0 0.0
    %271 = vmatprep.subr.mxu0 0.0
    %272 = vmatpush1.msra.mxu0 0.0
    %273 = vmatprep.subr.mxu0 0.0
    %274 = vmatpush1.msra.mxu0 0.0
    %275 = vmatprep.subr.mxu0 0.0
    %276 = vmatpush1.msra.mxu0 0.0
    %277 = vmatprep.subr.mxu0 0.0
    %278 = vmatpush1.msra.mxu0 0.0
    %279 = vmatprep.subr.mxu0 0.0
    %280 = vmatpush1.msra.mxu0 0.0
    %281 = vmatprep.subr.mxu0 0.0
    %282 = vmatpush1.msra.mxu0 %v260
    %283 = vmatprep.subr.mxu0 0.0
    %284 = vmatpush1.msra.mxu0 %v259
    %285 = vmatprep.subr.mxu0 0.0
    %286 = vmatpush1.msra.mxu0 %v258
    %287 = vmatprep.subr.mxu0 0.0
    %288 = vmatpush1.msra.mxu0 %v257
    %289 = vmatprep.subr.mxu0 0.0
    %290 = vmatpush1.msra.mxu0 %v256
    %291 = vmatprep.subr.mxu0 0.0
    %292 = vmatpush1.msra.mxu0 %v255
    %293 = vmatprep.subr.mxu0 0.0
    %294 = vmatpush1.msra.mxu0 %v254
    %295 = vmatprep.subr.mxu0 0.0
    %296 = vmatpush1.msra.mxu0 %v253
    %297 = vmatprep.subr.mxu0 0.0
    %298 = vmatpush2.msra.mxu0 0.0
    %299 = vmatprep.subr.mxu0 0.0
    %300 = vmatpush2.msra.mxu0 0.0
    %301 = vmatprep.subr.mxu0 0.0
    %302 = vmatpush2.msra.mxu0 0.0
    %303 = vmatprep.subr.mxu0 0.0
    %304 = vmatpush2.msra.mxu0 0.0
    %305 = vmatprep.subr.mxu0 0.0
    %306 = vmatpush2.msra.mxu0 0.0
    %307 = vmatprep.subr.mxu0 0.0
    %308 = vmatpush2.msra.mxu0 0.0
    %309 = vmatprep.subr.mxu0 0.0
    %310 = vmatpush2.msra.mxu0 0.0
    %311 = vmatprep.subr.mxu0 0.0
    %312 = vmatpush2.msra.mxu0 0.0
    %313 = vmatprep.subr.mxu0 0.0
    %314 = vmatpush2.msra.mxu0 0.0
    %315 = vmatprep.subr.mxu0 0.0
    %316 = vmatpush2.msra.mxu0 0.0
    %317 = vmatprep.subr.mxu0 0.0
    %318 = vmatpush2.msra.mxu0 0.0
    %319 = vmatprep.subr.mxu0 0.0
    %320 = vmatpush2.msra.mxu0 0.0
    %321 = vmatprep.subr.mxu0 0.0
    %322 = vmatpush2.msra.mxu0 0.0
    %323 = vmatprep.subr.mxu0 0.0
    %324 = vmatpush2.msra.mxu0 0.0
    %325 = vmatprep.subr.mxu0 0.0
    %326 = vmatpush2.msra.mxu0 0.0
    %327 = vmatprep.subr.mxu0 0.0
    %328 = vmatpush2.msra.mxu0 0.0
    %329 = vmatprep.mubr.f32.mxu0 0.0
    %330 = vmatmul.mubr.f32.gmra.mxu0 %v263
    %v331 = vpop.f32.mrf.mxu0
    %v332 = vadd.f32 0.0, %v331
    %v333 = vpop.f32.mrf.mxu0
    %334 = vdwg.mxu0
    %v335 = vmul.f32 %v332, 0.5
    %v336 = vld [vmem:[%s7] sm:$0xff]
    %v337 = vld [vmem:[%s7 + $0x8] sm:$0xff]
    %v338 = vld [vmem:[#allocation4] sm:$0x1]
    %v340 = vlaneseq
    %v341 = vshrl.u32 %v340, 7
    %v342 = vsub.s32 0, %v341
    %v343 = vrot.slane %v338, %v342
    %vm345 = vcmask 130048
    %v347 = vsel %vm345, %v335, 0
    %349 = vmatprep.subr.mxu0 0.0
    %350 = vmatpush1.msra.mxu0 0.0
    %351 = vmatprep.subr.mxu0 0.0
    %352 = vmatpush1.msra.mxu0 0.0
    %353 = vmatprep.subr.mxu0 0.0
    %354 = vmatpush1.msra.mxu0 0.0
    %355 = vmatprep.subr.mxu0 0.0
    %356 = vmatpush1.msra.mxu0 0.0
    %357 = vmatprep.subr.mxu0 0.0
    %358 = vmatpush1.msra.mxu0 0.0
    %359 = vmatprep.subr.mxu0 0.0
    %360 = vmatpush1.msra.mxu0 0.0
    %361 = vmatprep.subr.mxu0 0.0
    %362 = vmatpush1.msra.mxu0 0.0
    %363 = vmatprep.subr.mxu0 0.0
    %364 = vmatpush1.msra.mxu0 0.0
    %365 = vmatprep.subr.mxu0 0.0
    %366 = vmatpush1.msra.mxu0 0.0
    %367 = vmatprep.subr.mxu0 0.0
    %368 = vmatpush1.msra.mxu0 0.0
    %369 = vmatprep.subr.mxu0 0.0
    %370 = vmatpush1.msra.mxu0 0.0
    %371 = vmatprep.subr.mxu0 0.0
    %372 = vmatpush1.msra.mxu0 0.0
    %373 = vmatprep.subr.mxu0 0.0
    %374 = vmatpush1.msra.mxu0 0.0
    %375 = vmatprep.subr.mxu0 0.0
    %376 = vmatpush1.msra.mxu0 0.0
    %377 = vmatprep.subr.mxu0 0.0
    %378 = vmatpush1.msra.mxu0 %v337
    %379 = vmatprep.subr.mxu0 0.0
    %380 = vmatpush1.msra.mxu0 %v336
    %381 = vmatprep.subr.mxu0 0.0
    %382 = vmatpush2.msra.mxu0 0.0
    %383 = vmatprep.subr.mxu0 0.0
    %384 = vmatpush2.msra.mxu0 0.0
    %385 = vmatprep.subr.mxu0 0.0
    %386 = vmatpush2.msra.mxu0 0.0
    %387 = vmatprep.subr.mxu0 0.0
    %388 = vmatpush2.msra.mxu0 0.0
    %389 = vmatprep.subr.mxu0 0.0
    %390 = vmatpush2.msra.mxu0 0.0
    %391 = vmatprep.subr.mxu0 0.0
    %392 = vmatpush2.msra.mxu0 0.0
    %393 = vmatprep.subr.mxu0 0.0
    %394 = vmatpush2.msra.mxu0 0.0
    %395 = vmatprep.subr.mxu0 0.0
    %396 = vmatpush2.msra.mxu0 0.0
    %397 = vmatprep.subr.mxu0 0.0
    %398 = vmatpush2.msra.mxu0 0.0
    %399 = vmatprep.subr.mxu0 0.0
    %400 = vmatpush2.msra.mxu0 0.0
    %401 = vmatprep.subr.mxu0 0.0
    %402 = vmatpush2.msra.mxu0 0.0
    %403 = vmatprep.subr.mxu0 0.0
    %404 = vmatpush2.msra.mxu0 0.0
    %405 = vmatprep.subr.mxu0 0.0
    %406 = vmatpush2.msra.mxu0 0.0
    %407 = vmatprep.subr.mxu0 0.0
    %408 = vmatpush2.msra.mxu0 0.0
    %409 = vmatprep.subr.mxu0 0.0
    %410 = vmatpush2.msra.mxu0 0.0
    %411 = vmatprep.subr.mxu0 0.0
    %412 = vmatpush2.msra.mxu0 0.0
    %413 = vmatprep.mubr.f32.mxu0 0.0
    %414 = vmatmul.mubr.f32.gmra.mxu0 %v347
    %v415 = vpop.f32.mrf.mxu0
    %v416 = vadd.f32 %v343, %v415
    %v417 = vpop.f32.mrf.mxu0
    %418 = vdwg.mxu0
    %v419 = vld [vmem:[%s1] sm:$0x3]
    %v420 = vld [vmem:[%s9] sm:$0xff]
    %v421 = vld [vmem:[%s9 + $0x8] sm:$0xff]
    %v422 = vld [vmem:[%s10] sm:$0x1]
    %v424 = vlaneseq
    %v425 = vshrl.u32 %v424, 7
    %v426 = vsub.s32 0, %v425
    %v427 = vrot.slane %v422, %v426
    %v430 = vsel %vm345, %v419, 0
    %432 = vmatprep.subr.mxu0 0.0
    %433 = vmatpush1.msra.mxu0 0.0
    %434 = vmatprep.subr.mxu0 0.0
    %435 = vmatpush1.msra.mxu0 0.0
    %436 = vmatprep.subr.mxu0 0.0
    %437 = vmatpush1.msra.mxu0 0.0
    %438 = vmatprep.subr.mxu0 0.0
    %439 = vmatpush1.msra.mxu0 0.0
    %440 = vmatprep.subr.mxu0 0.0
    %441 = vmatpush1.msra.mxu0 0.0
    %442 = vmatprep.subr.mxu0 0.0
    %443 = vmatpush1.msra.mxu0 0.0
    %444 = vmatprep.subr.mxu0 0.0
    %445 = vmatpush1.msra.mxu0 0.0
    %446 = vmatprep.subr.mxu0 0.0
    %447 = vmatpush1.msra.mxu0 0.0
    %448 = vmatprep.subr.mxu0 0.0
    %449 = vmatpush1.msra.mxu0 0.0
    %450 = vmatprep.subr.mxu0 0.0
    %451 = vmatpush1.msra.mxu0 0.0
    %452 = vmatprep.subr.mxu0 0.0
    %453 = vmatpush1.msra.mxu0 0.0
    %454 = vmatprep.subr.mxu0 0.0
    %455 = vmatpush1.msra.mxu0 0.0
    %456 = vmatprep.subr.mxu0 0.0
    %457 = vmatpush1.msra.mxu0 0.0
    %458 = vmatprep.subr.mxu0 0.0
    %459 = vmatpush1.msra.mxu0 0.0
    %460 = vmatprep.subr.mxu0 0.0
    %461 = vmatpush1.msra.mxu0 %v421
    %462 = vmatprep.subr.mxu0 0.0
    %463 = vmatpush1.msra.mxu0 %v420
    %464 = vmatprep.subr.mxu0 0.0
    %465 = vmatpush2.msra.mxu0 0.0
    %466 = vmatprep.subr.mxu0 0.0
    %467 = vmatpush2.msra.mxu0 0.0
    %468 = vmatprep.subr.mxu0 0.0
    %469 = vmatpush2.msra.mxu0 0.0
    %470 = vmatprep.subr.mxu0 0.0
    %471 = vmatpush2.msra.mxu0 0.0
    %472 = vmatprep.subr.mxu0 0.0
    %473 = vmatpush2.msra.mxu0 0.0
    %474 = vmatprep.subr.mxu0 0.0
    %475 = vmatpush2.msra.mxu0 0.0
    %476 = vmatprep.subr.mxu0 0.0
    %477 = vmatpush2.msra.mxu0 0.0
    %478 = vmatprep.subr.mxu0 0.0
    %479 = vmatpush2.msra.mxu0 0.0
    %480 = vmatprep.subr.mxu0 0.0
    %481 = vmatpush2.msra.mxu0 0.0
    %482 = vmatprep.subr.mxu0 0.0
    %483 = vmatpush2.msra.mxu0 0.0
    %484 = vmatprep.subr.mxu0 0.0
    %485 = vmatpush2.msra.mxu0 0.0
    %486 = vmatprep.subr.mxu0 0.0
    %487 = vmatpush2.msra.mxu0 0.0
    %488 = vmatprep.subr.mxu0 0.0
    %489 = vmatpush2.msra.mxu0 0.0
    %490 = vmatprep.subr.mxu0 0.0
    %491 = vmatpush2.msra.mxu0 0.0
    %492 = vmatprep.subr.mxu0 0.0
    %493 = vmatpush2.msra.mxu0 0.0
    %494 = vmatprep.subr.mxu0 0.0
    %495 = vmatpush2.msra.mxu0 0.0
    %496 = vmatprep.mubr.f32.mxu0 0.0
    %497 = vmatmul.mubr.f32.gmra.mxu0 %v430
    %v498 = vpop.f32.mrf.mxu0
    %v499 = vadd.f32 %v427, %v498
    %v500 = vpop.f32.mrf.mxu0
    %501 = vdwg.mxu0
    %vm502 = vcmp.ge.f32.partialorder %v499, 0.0
    %v503 = vmul.f32 %v499, 0.01
    %v504 = vsel %vm502, %v499, %v503
    %v505 = vld [vmem:[%s11] sm:$0xff]
    %v506 = vld [vmem:[%s11 + $0x8] sm:$0xff]
    %v507 = vld [vmem:[%s11 + $0x10] sm:$0xff]
    %v508 = vld [vmem:[%s11 + $0x18] sm:$0xff]
    %v509 = vld [vmem:[%s12] sm:$0x1]
    %v511 = vlaneseq
    %v512 = vshrl.u32 %v511, 7
    %v513 = vsub.s32 0, %v512
    %v514 = vrot.slane %v509, %v513
    %vm516 = vcmask 261120
    %v518 = vsel %vm516, %v504, 0
    %520 = vmatprep.subr.mxu0 0.0
    %521 = vmatpush1.msra.mxu0 0.0
    %522 = vmatprep.subr.mxu0 0.0
    %523 = vmatpush1.msra.mxu0 0.0
    %524 = vmatprep.subr.mxu0 0.0
    %525 = vmatpush1.msra.mxu0 0.0
    %526 = vmatprep.subr.mxu0 0.0
    %527 = vmatpush1.msra.mxu0 0.0
    %528 = vmatprep.subr.mxu0 0.0
    %529 = vmatpush1.msra.mxu0 0.0
    %530 = vmatprep.subr.mxu0 0.0
    %531 = vmatpush1.msra.mxu0 0.0
    %532 = vmatprep.subr.mxu0 0.0
    %533 = vmatpush1.msra.mxu0 0.0
    %534 = vmatprep.subr.mxu0 0.0
    %535 = vmatpush1.msra.mxu0 0.0
    %536 = vmatprep.subr.mxu0 0.0
    %537 = vmatpush1.msra.mxu0 0.0
    %538 = vmatprep.subr.mxu0 0.0
    %539 = vmatpush1.msra.mxu0 0.0
    %540 = vmatprep.subr.mxu0 0.0
    %541 = vmatpush1.msra.mxu0 0.0
    %542 = vmatprep.subr.mxu0 0.0
    %543 = vmatpush1.msra.mxu0 0.0
    %544 = vmatprep.subr.mxu0 0.0
    %545 = vmatpush1.msra.mxu0 %v508
    %546 = vmatprep.subr.mxu0 0.0
    %547 = vmatpush1.msra.mxu0 %v507
    %548 = vmatprep.subr.mxu0 0.0
    %549 = vmatpush1.msra.mxu0 %v506
    %550 = vmatprep.subr.mxu0 0.0
    %551 = vmatpush1.msra.mxu0 %v505
    %552 = vmatprep.subr.mxu0 0.0
    %553 = vmatpush2.msra.mxu0 0.0
    %554 = vmatprep.subr.mxu0 0.0
    %555 = vmatpush2.msra.mxu0 0.0
    %556 = vmatprep.subr.mxu0 0.0
    %557 = vmatpush2.msra.mxu0 0.0
    %558 = vmatprep.subr.mxu0 0.0
    %559 = vmatpush2.msra.mxu0 0.0
    %560 = vmatprep.subr.mxu0 0.0
    %561 = vmatpush2.msra.mxu0 0.0
    %562 = vmatprep.subr.mxu0 0.0
    %563 = vmatpush2.msra.mxu0 0.0
    %564 = vmatprep.subr.mxu0 0.0
    %565 = vmatpush2.msra.mxu0 0.0
    %566 = vmatprep.subr.mxu0 0.0
    %567 = vmatpush2.msra.mxu0 0.0
    %568 = vmatprep.subr.mxu0 0.0
    %569 = vmatpush2.msra.mxu0 0.0
    %570 = vmatprep.subr.mxu0 0.0
    %571 = vmatpush2.msra.mxu0 0.0
    %572 = vmatprep.subr.mxu0 0.0
    %573 = vmatpush2.msra.mxu0 0.0
    %574 = vmatprep.subr.mxu0 0.0
    %575 = vmatpush2.msra.mxu0 0.0
    %576 = vmatprep.subr.mxu0 0.0
    %577 = vmatpush2.msra.mxu0 0.0
    %578 = vmatprep.subr.mxu0 0.0
    %579 = vmatpush2.msra.mxu0 0.0
    %580 = vmatprep.subr.mxu0 0.0
    %581 = vmatpush2.msra.mxu0 0.0
    %582 = vmatprep.subr.mxu0 0.0
    %583 = vmatpush2.msra.mxu0 0.0
    %584 = vmatprep.mubr.f32.mxu0 0.0
    %585 = vmatmul.mubr.f32.gmra.mxu0 %v518
    %v586 = vpop.f32.mrf.mxu0
    %v587 = vadd.f32 %v514, %v586
    %v588 = vpop.f32.mrf.mxu0
    %589 = vdwg.mxu0
    %v590 = vadd.f32 %v587, %v504
    %vm591 = vcmp.ge.f32.partialorder %v590, 0.0
    %v592 = vmul.f32 %v590, 0.01
    %v593 = vsel %vm591, %v590, %v592
    %v594 = vld [vmem:[%s13] sm:$0xff]
    %v595 = vld [vmem:[%s13 + $0x8] sm:$0xff]
    %v596 = vld [vmem:[%s13 + $0x10] sm:$0xff]
    %v597 = vld [vmem:[%s13 + $0x18] sm:$0xff]
    %v598 = vld [vmem:[%s14] sm:$0x1]
    %v600 = vlaneseq
    %v601 = vshrl.u32 %v600, 7
    %v602 = vsub.s32 0, %v601
    %v603 = vrot.slane %v598, %v602
    %v606 = vsel %vm516, %v593, 0
    %608 = vmatprep.subr.mxu0 0.0
    %609 = vmatpush1.msra.mxu0 0.0
    %610 = vmatprep.subr.mxu0 0.0
    %611 = vmatpush1.msra.mxu0 0.0
    %612 = vmatprep.subr.mxu0 0.0
    %613 = vmatpush1.msra.mxu0 0.0
    %614 = vmatprep.subr.mxu0 0.0
    %615 = vmatpush1.msra.mxu0 0.0
    %616 = vmatprep.subr.mxu0 0.0
    %617 = vmatpush1.msra.mxu0 0.0
    %618 = vmatprep.subr.mxu0 0.0
    %619 = vmatpush1.msra.mxu0 0.0
    %620 = vmatprep.subr.mxu0 0.0
    %621 = vmatpush1.msra.mxu0 0.0
    %622 = vmatprep.subr.mxu0 0.0
    %623 = vmatpush1.msra.mxu0 0.0
    %624 = vmatprep.subr.mxu0 0.0
    %625 = vmatpush1.msra.mxu0 0.0
    %626 = vmatprep.subr.mxu0 0.0
    %627 = vmatpush1.msra.mxu0 0.0
    %628 = vmatprep.subr.mxu0 0.0
    %629 = vmatpush1.msra.mxu0 0.0
    %630 = vmatprep.subr.mxu0 0.0
    %631 = vmatpush1.msra.mxu0 0.0
    %632 = vmatprep.subr.mxu0 0.0
    %633 = vmatpush1.msra.mxu0 %v597
    %634 = vmatprep.subr.mxu0 0.0
    %635 = vmatpush1.msra.mxu0 %v596
    %636 = vmatprep.subr.mxu0 0.0
    %637 = vmatpush1.msra.mxu0 %v595
    %638 = vmatprep.subr.mxu0 0.0
    %639 = vmatpush1.msra.mxu0 %v594
    %640 = vmatprep.subr.mxu0 0.0
    %641 = vmatpush2.msra.mxu0 0.0
    %642 = vmatprep.subr.mxu0 0.0
    %643 = vmatpush2.msra.mxu0 0.0
    %644 = vmatprep.subr.mxu0 0.0
    %645 = vmatpush2.msra.mxu0 0.0
    %646 = vmatprep.subr.mxu0 0.0
    %647 = vmatpush2.msra.mxu0 0.0
    %648 = vmatprep.subr.mxu0 0.0
    %649 = vmatpush2.msra.mxu0 0.0
    %650 = vmatprep.subr.mxu0 0.0
    %651 = vmatpush2.msra.mxu0 0.0
    %652 = vmatprep.subr.mxu0 0.0
    %653 = vmatpush2.msra.mxu0 0.0
    %654 = vmatprep.subr.mxu0 0.0
    %655 = vmatpush2.msra.mxu0 0.0
    %656 = vmatprep.subr.mxu0 0.0
    %657 = vmatpush2.msra.mxu0 0.0
    %658 = vmatprep.subr.mxu0 0.0
    %659 = vmatpush2.msra.mxu0 0.0
    %660 = vmatprep.subr.mxu0 0.0
    %661 = vmatpush2.msra.mxu0 0.0
    %662 = vmatprep.subr.mxu0 0.0
    %663 = vmatpush2.msra.mxu0 0.0
    %664 = vmatprep.subr.mxu0 0.0
    %665 = vmatpush2.msra.mxu0 0.0
    %666 = vmatprep.subr.mxu0 0.0
    %667 = vmatpush2.msra.mxu0 0.0
    %668 = vmatprep.subr.mxu0 0.0
    %669 = vmatpush2.msra.mxu0 0.0
    %670 = vmatprep.subr.mxu0 0.0
    %671 = vmatpush2.msra.mxu0 0.0
    %672 = vmatprep.mubr.f32.mxu0 0.0
    %673 = vmatmul.mubr.f32.gmra.mxu0 %v606
    %v674 = vpop.f32.mrf.mxu0
    %v675 = vadd.f32 %v603, %v674
    %v676 = vpop.f32.mrf.mxu0
    %677 = vdwg.mxu0
    %v678 = vadd.f32 %v675, %v593
    %vm679 = vcmp.ge.f32.partialorder %v678, 0.0
    %v680 = vmul.f32 %v678, 0.01
    %v681 = vsel %vm679, %v678, %v680
    %v682 = vld [vmem:[%s2] sm:$0xff]
    %v683 = vld [vmem:[%s2 + $0x8] sm:$0xff]
    %v684 = vld [vmem:[%s15] sm:$0xff]
    %v685 = vld [vmem:[%s16] sm:$0x1]
    %v687 = vlaneseq
    %v688 = vshrl.u32 %v687, 7
    %v689 = vsub.s32 0, %v688
    %v690 = vrot.slane %v685, %v689
    %v693 = vsel %vm102, %v682, 0
    %v696 = vsel %vm102, %v683, 0
    %698 = vmatprep.subr.mxu0 0.0
    %699 = vmatpush1.msra.mxu0 0.0
    %700 = vmatprep.subr.mxu0 0.0
    %701 = vmatpush1.msra.mxu0 0.0
    %702 = vmatprep.subr.mxu0 0.0
    %703 = vmatpush1.msra.mxu0 0.0
    %704 = vmatprep.subr.mxu0 0.0
    %705 = vmatpush1.msra.mxu0 0.0
    %706 = vmatprep.subr.mxu0 0.0
    %707 = vmatpush1.msra.mxu0 0.0
    %708 = vmatprep.subr.mxu0 0.0
    %709 = vmatpush1.msra.mxu0 0.0
    %710 = vmatprep.subr.mxu0 0.0
    %711 = vmatpush1.msra.mxu0 0.0
    %712 = vmatprep.subr.mxu0 0.0
    %713 = vmatpush1.msra.mxu0 0.0
    %714 = vmatprep.subr.mxu0 0.0
    %715 = vmatpush1.msra.mxu0 0.0
    %716 = vmatprep.subr.mxu0 0.0
    %717 = vmatpush1.msra.mxu0 0.0
    %718 = vmatprep.subr.mxu0 0.0
    %719 = vmatpush1.msra.mxu0 0.0
    %720 = vmatprep.subr.mxu0 0.0
    %721 = vmatpush1.msra.mxu0 0.0
    %722 = vmatprep.subr.mxu0 0.0
    %723 = vmatpush1.msra.mxu0 0.0
    %724 = vmatprep.subr.mxu0 0.0
    %725 = vmatpush1.msra.mxu0 0.0
    %726 = vmatprep.subr.mxu0 0.0
    %727 = vmatpush1.msra.mxu0 0.0
    %728 = vmatprep.subr.mxu0 0.0
    %729 = vmatpush1.msra.mxu0 %v684
    %730 = vmatprep.subr.mxu0 0.0
    %731 = vmatpush2.msra.mxu0 0.0
    %732 = vmatprep.subr.mxu0 0.0
    %733 = vmatpush2.msra.mxu0 0.0
    %734 = vmatprep.subr.mxu0 0.0
    %735 = vmatpush2.msra.mxu0 0.0
    %736 = vmatprep.subr.mxu0 0.0
    %737 = vmatpush2.msra.mxu0 0.0
    %738 = vmatprep.subr.mxu0 0.0
    %739 = vmatpush2.msra.mxu0 0.0
    %740 = vmatprep.subr.mxu0 0.0
    %741 = vmatpush2.msra.mxu0 0.0
    %742 = vmatprep.subr.mxu0 0.0
    %743 = vmatpush2.msra.mxu0 0.0
    %744 = vmatprep.subr.mxu0 0.0
    %745 = vmatpush2.msra.mxu0 0.0
    %746 = vmatprep.subr.mxu0 0.0
    %747 = vmatpush2.msra.mxu0 0.0
    %748 = vmatprep.subr.mxu0 0.0
    %749 = vmatpush2.msra.mxu0 0.0
    %750 = vmatprep.subr.mxu0 0.0
    %751 = vmatpush2.msra.mxu0 0.0
    %752 = vmatprep.subr.mxu0 0.0
    %753 = vmatpush2.msra.mxu0 0.0
    %754 = vmatprep.subr.mxu0 0.0
    %755 = vmatpush2.msra.mxu0 0.0
    %756 = vmatprep.subr.mxu0 0.0
    %757 = vmatpush2.msra.mxu0 0.0
    %758 = vmatprep.subr.mxu0 0.0
    %759 = vmatpush2.msra.mxu0 0.0
    %760 = vmatprep.subr.mxu0 0.0
    %761 = vmatpush2.msra.mxu0 0.0
    %762 = vmatprep.mubr.f32.mxu0 0.0
    %763 = vmatmul.mubr.f32.gmra.mxu0 %v693
    %v764 = vpop.f32.mrf.mxu0
    %v765 = vadd.f32 %v690, %v764
    %v766 = vpop.f32.mrf.mxu0
    %767 = vmatprep.mubr.f32.mxu0 0.0
    %768 = vmatmul.mubr.f32.gmra.mxu0 %v696
    %v769 = vpop.f32.mrf.mxu0
    %v770 = vadd.f32 %v690, %v769
    %v771 = vpop.f32.mrf.mxu0
    %772 = vdwg.mxu0
    %vm773 = vcmp.ge.f32.partialorder %v765, 0.0
    %vm774 = vcmp.ge.f32.partialorder %v770, 0.0
    %v775 = vmul.f32 %v765, 0.01
    %v776 = vmul.f32 %v770, 0.01
    %v777 = vsel %vm773, %v765, %v775
    %v778 = vsel %vm774, %v770, %v776
    %v779 = vld [vmem:[%s17] sm:$0xff]
    %v780 = vld [vmem:[%s17 + $0x8] sm:$0xff]
    %v781 = vld [vmem:[%s18] sm:$0x1]
    %v783 = vlaneseq
    %v784 = vshrl.u32 %v783, 7
    %v785 = vsub.s32 0, %v784
    %v786 = vrot.slane %v781, %v785
    %v789 = vsel %vm345, %v777, 0
    %v792 = vsel %vm345, %v778, 0
    %794 = vmatprep.subr.mxu0 0.0
    %795 = vmatpush1.msra.mxu0 0.0
    %796 = vmatprep.subr.mxu0 0.0
    %797 = vmatpush1.msra.mxu0 0.0
    %798 = vmatprep.subr.mxu0 0.0
    %799 = vmatpush1.msra.mxu0 0.0
    %800 = vmatprep.subr.mxu0 0.0
    %801 = vmatpush1.msra.mxu0 0.0
    %802 = vmatprep.subr.mxu0 0.0
    %803 = vmatpush1.msra.mxu0 0.0
    %804 = vmatprep.subr.mxu0 0.0
    %805 = vmatpush1.msra.mxu0 0.0
    %806 = vmatprep.subr.mxu0 0.0
    %807 = vmatpush1.msra.mxu0 0.0
    %808 = vmatprep.subr.mxu0 0.0
    %809 = vmatpush1.msra.mxu0 0.0
    %810 = vmatprep.subr.mxu0 0.0
    %811 = vmatpush1.msra.mxu0 0.0
    %812 = vmatprep.subr.mxu0 0.0
    %813 = vmatpush1.msra.mxu0 0.0
    %814 = vmatprep.subr.mxu0 0.0
    %815 = vmatpush1.msra.mxu0 0.0
    %816 = vmatprep.subr.mxu0 0.0
    %817 = vmatpush1.msra.mxu0 0.0
    %818 = vmatprep.subr.mxu0 0.0
    %819 = vmatpush1.msra.mxu0 0.0
    %820 = vmatprep.subr.mxu0 0.0
    %821 = vmatpush1.msra.mxu0 0.0
    %822 = vmatprep.subr.mxu0 0.0
    %823 = vmatpush1.msra.mxu0 %v780
    %824 = vmatprep.subr.mxu0 0.0
    %825 = vmatpush1.msra.mxu0 %v779
    %826 = vmatprep.subr.mxu0 0.0
    %827 = vmatpush2.msra.mxu0 0.0
    %828 = vmatprep.subr.mxu0 0.0
    %829 = vmatpush2.msra.mxu0 0.0
    %830 = vmatprep.subr.mxu0 0.0
    %831 = vmatpush2.msra.mxu0 0.0
    %832 = vmatprep.subr.mxu0 0.0
    %833 = vmatpush2.msra.mxu0 0.0
    %834 = vmatprep.subr.mxu0 0.0
    %835 = vmatpush2.msra.mxu0 0.0
    %836 = vmatprep.subr.mxu0 0.0
    %837 = vmatpush2.msra.mxu0 0.0
    %838 = vmatprep.subr.mxu0 0.0
    %839 = vmatpush2.msra.mxu0 0.0
    %840 = vmatprep.subr.mxu0 0.0
    %841 = vmatpush2.msra.mxu0 0.0
    %842 = vmatprep.subr.mxu0 0.0
    %843 = vmatpush2.msra.mxu0 0.0
    %844 = vmatprep.subr.mxu0 0.0
    %845 = vmatpush2.msra.mxu0 0.0
    %846 = vmatprep.subr.mxu0 0.0
    %847 = vmatpush2.msra.mxu0 0.0
    %848 = vmatprep.subr.mxu0 0.0
    %849 = vmatpush2.msra.mxu0 0.0
    %850 = vmatprep.subr.mxu0 0.0
    %851 = vmatpush2.msra.mxu0 0.0
    %852 = vmatprep.subr.mxu0 0.0
    %853 = vmatpush2.msra.mxu0 0.0
    %854 = vmatprep.subr.mxu0 0.0
    %855 = vmatpush2.msra.mxu0 0.0
    %856 = vmatprep.subr.mxu0 0.0
    %857 = vmatpush2.msra.mxu0 0.0
    %858 = vmatprep.mubr.f32.mxu0 0.0
    %859 = vmatmul.mubr.f32.gmra.mxu0 %v789
    %v860 = vpop.f32.mrf.mxu0
    %v861 = vadd.f32 %v786, %v860
    %v862 = vpop.f32.mrf.mxu0
    %863 = vmatprep.mubr.f32.mxu0 0.0
    %864 = vmatmul.mubr.f32.gmra.mxu0 %v792
    %v865 = vpop.f32.mrf.mxu0
    %v866 = vadd.f32 %v786, %v865
    %v867 = vpop.f32.mrf.mxu0
    %868 = vdwg.mxu0
    %vm869 = vcmask 392192
    %870 = vst.msk [vmem:[#allocation2] sm:$0xff] %vm869, %v861
    %871 = vst.msk [vmem:[#allocation2 + $0x8] sm:$0xff] %vm869, %v866
    %v872 = vld [vmem:[%s19] sm:$0xff]
    %v873 = vld [vmem:[%s19 + $0x8] sm:$0xff]
    %v874 = vld [vmem:[%s19 + $0x10] sm:$0xff]
    %v875 = vld [vmem:[%s19 + $0x18] sm:$0xff]
    %v876 = vld [vmem:[%s20] sm:$0x1]
    %v877 = vld [vmem:[%s21] sm:$0xff]
    %v878 = vld [vmem:[%s21 + $0x8] sm:$0xff]
    %v879 = vld [vmem:[%s22] sm:$0x1]
    %v880 = vld [vmem:[%s3] sm:$0x3]
    %v881 = vld [vmem:[#allocation2] sm:$0x3]
    %v883 = vlaneseq
    %v884 = vshrl.u32 %v883, 7
    %v885 = vsub.s32 0, %v884
    %v886 = vrot.slane %v876, %v885
    %v889 = vsel %vm516, 0.0, 0
    %891 = vmatprep.subr.mxu0 0.0
    %892 = vmatpush1.msra.mxu0 0.0
    %893 = vmatprep.subr.mxu0 0.0
    %894 = vmatpush1.msra.mxu0 0.0
    %895 = vmatprep.subr.mxu0 0.0
    %896 = vmatpush1.msra.mxu0 0.0
    %897 = vmatprep.subr.mxu0 0.0
    %898 = vmatpush1.msra.mxu0 0.0
    %899 = vmatprep.subr.mxu0 0.0
    %900 = vmatpush1.msra.mxu0 0.0
    %901 = vmatprep.subr.mxu0 0.0
    %902 = vmatpush1.msra.mxu0 0.0
    %903 = vmatprep.subr.mxu0 0.0
    %904 = vmatpush1.msra.mxu0 0.0
    %905 = vmatprep.subr.mxu0 0.0
    %906 = vmatpush1.msra.mxu0 0.0
    %907 = vmatprep.subr.mxu0 0.0
    %908 = vmatpush1.msra.mxu0 0.0
    %909 = vmatprep.subr.mxu0 0.0
    %910 = vmatpush1.msra.mxu0 0.0
    %911 = vmatprep.subr.mxu0 0.0
    %912 = vmatpush1.msra.mxu0 0.0
    %913 = vmatprep.subr.mxu0 0.0
    %914 = vmatpush1.msra.mxu0 0.0
    %915 = vmatprep.subr.mxu0 0.0
    %916 = vmatpush1.msra.mxu0 %v875
    %917 = vmatprep.subr.mxu0 0.0
    %918 = vmatpush1.msra.mxu0 %v874
    %919 = vmatprep.subr.mxu0 0.0
    %920 = vmatpush1.msra.mxu0 %v873
    %921 = vmatprep.subr.mxu0 0.0
    %922 = vmatpush1.msra.mxu0 %v872
    %923 = vmatprep.subr.mxu0 0.0
    %924 = vmatpush2.msra.mxu0 0.0
    %925 = vmatprep.subr.mxu0 0.0
    %926 = vmatpush2.msra.mxu0 0.0
    %927 = vmatprep.subr.mxu0 0.0
    %928 = vmatpush2.msra.mxu0 0.0
    %929 = vmatprep.subr.mxu0 0.0
    %930 = vmatpush2.msra.mxu0 0.0
    %931 = vmatprep.subr.mxu0 0.0
    %932 = vmatpush2.msra.mxu0 0.0
    %933 = vmatprep.subr.mxu0 0.0
    %934 = vmatpush2.msra.mxu0 0.0
    %935 = vmatprep.subr.mxu0 0.0
    %936 = vmatpush2.msra.mxu0 0.0
    %937 = vmatprep.subr.mxu0 0.0
    %938 = vmatpush2.msra.mxu0 0.0
    %939 = vmatprep.subr.mxu0 0.0
    %940 = vmatpush2.msra.mxu0 0.0
    %941 = vmatprep.subr.mxu0 0.0
    %942 = vmatpush2.msra.mxu0 0.0
    %943 = vmatprep.subr.mxu0 0.0
    %944 = vmatpush2.msra.mxu0 0.0
    %945 = vmatprep.subr.mxu0 0.0
    %946 = vmatpush2.msra.mxu0 0.0
    %947 = vmatprep.subr.mxu0 0.0
    %948 = vmatpush2.msra.mxu0 0.0
    %949 = vmatprep.subr.mxu0 0.0
    %950 = vmatpush2.msra.mxu0 0.0
    %951 = vmatprep.subr.mxu0 0.0
    %952 = vmatpush2.msra.mxu0 0.0
    %953 = vmatprep.subr.mxu0 0.0
    %954 = vmatpush2.msra.mxu0 0.0
    %955 = vmatprep.mubr.f32.mxu0 0.0
    %956 = vmatmul.mubr.f32.gmra.mxu0 %v889
    %v957 = vpop.f32.mrf.mxu0
    %v958 = vadd.f32 %v886, %v957
    %v959 = vpop.f32.mrf.mxu0
    %960 = vdwg.mxu0
    %v961 = vadd.f32 %v881, %v958
    %v962 = vxor.u32 %v961, 2147483648
    %v963 = vmul.f32 %v962, 1.442695
    %v964 = vpow.pop %v963
    %v965 = vadd.f32 %v964, 1.0
    %v966 = vrcp.pop %v965
    %v967 = vmul.f32 1.0, %v966
    %969 = vrot.lane.b32.xlu0 %v958, 96
    %v970 = vpop.permute.xlu0 %969
    %v972 = vmul.f32 %v967, %v970
    %974 = vrot.lane.b32.xlu0 %v972, 32
    %v975 = vpop.permute.xlu0 %974
    %v977 = vadd.f32 %v881, %v975
    %v978 = vtanh.pop %v977
    %v979 = vsub.f32 1.0, %v967
    %981 = vrot.lane.b32.xlu0 %v978, 112
    %v982 = vpop.permute.xlu0 %981
    %v984 = vmul.f32 %v979, %v982
    %v985 = vmul.f32 %v967, 0.0
    %v986 = vadd.f32 %v984, %v985
    %988 = vrot.lane.b32.xlu0 %v986, 112
    %v989 = vpop.permute.xlu0 %988
    %v990 = vsel %vm345, %v989, 0
    %992 = vmatprep.subr.mxu0 0.0
    %993 = vmatpush1.msra.mxu0 0.0
    %994 = vmatprep.subr.mxu0 0.0
    %995 = vmatpush1.msra.mxu0 0.0
    %996 = vmatprep.subr.mxu0 0.0
    %997 = vmatpush1.msra.mxu0 0.0
    %998 = vmatprep.subr.mxu0 0.0
    %999 = vmatpush1.msra.mxu0 0.0
    %1000 = vmatprep.subr.mxu0 0.0
    %1001 = vmatpush1.msra.mxu0 0.0
    %1002 = vmatprep.subr.mxu0 0.0
    %1003 = vmatpush1.msra.mxu0 0.0
    %1004 = vmatprep.subr.mxu0 0.0
    %1005 = vmatpush1.msra.mxu0 0.0
    %1006 = vmatprep.subr.mxu0 0.0
    %1007 = vmatpush1.msra.mxu0 0.0
    %1008 = vmatprep.subr.mxu0 0.0
    %1009 = vmatpush1.msra.mxu0 0.0
    %1010 = vmatprep.subr.mxu0 0.0
    %1011 = vmatpush1.msra.mxu0 0.0
    %1012 = vmatprep.subr.mxu0 0.0
    %1013 = vmatpush1.msra.mxu0 0.0
    %1014 = vmatprep.subr.mxu0 0.0
    %1015 = vmatpush1.msra.mxu0 0.0
    %1016 = vmatprep.subr.mxu0 0.0
    %1017 = vmatpush1.msra.mxu0 0.0
    %1018 = vmatprep.subr.mxu0 0.0
    %1019 = vmatpush1.msra.mxu0 0.0
    %1020 = vmatprep.subr.mxu0 0.0
    %1021 = vmatpush1.msra.mxu0 %v878
    %1022 = vmatprep.subr.mxu0 0.0
    %1023 = vmatpush1.msra.mxu0 %v877
    %1024 = vmatprep.subr.mxu0 0.0
    %1025 = vmatpush2.msra.mxu0 0.0
    %1026 = vmatprep.subr.mxu0 0.0
    %1027 = vmatpush2.msra.mxu0 0.0
    %1028 = vmatprep.subr.mxu0 0.0
    %1029 = vmatpush2.msra.mxu0 0.0
    %1030 = vmatprep.subr.mxu0 0.0
    %1031 = vmatpush2.msra.mxu0 0.0
    %1032 = vmatprep.subr.mxu0 0.0
    %1033 = vmatpush2.msra.mxu0 0.0
    %1034 = vmatprep.subr.mxu0 0.0
    %1035 = vmatpush2.msra.mxu0 0.0
    %1036 = vmatprep.subr.mxu0 0.0
    %1037 = vmatpush2.msra.mxu0 0.0
    %1038 = vmatprep.subr.mxu0 0.0
    %1039 = vmatpush2.msra.mxu0 0.0
    %1040 = vmatprep.subr.mxu0 0.0
    %1041 = vmatpush2.msra.mxu0 0.0
    %1042 = vmatprep.subr.mxu0 0.0
    %1043 = vmatpush2.msra.mxu0 0.0
    %1044 = vmatprep.subr.mxu0 0.0
    %1045 = vmatpush2.msra.mxu0 0.0
    %1046 = vmatprep.subr.mxu0 0.0
    %1047 = vmatpush2.msra.mxu0 0.0
    %1048 = vmatprep.subr.mxu0 0.0
    %1049 = vmatpush2.msra.mxu0 0.0
    %1050 = vmatprep.subr.mxu0 0.0
    %1051 = vmatpush2.msra.mxu0 0.0
    %1052 = vmatprep.subr.mxu0 0.0
    %1053 = vmatpush2.msra.mxu0 0.0
    %1054 = vmatprep.subr.mxu0 0.0
    %1055 = vmatpush2.msra.mxu0 0.0
    %1056 = vmatprep.mubr.f32.mxu0 0.0
    %1057 = vmatmul.mubr.f32.gmra.mxu0 %v990
    %v1058 = vpop.f32.mrf.mxu0
    %v1059 = vadd.f32 0.0, %v1058
    %v1060 = vpop.f32.mrf.mxu0
    %1061 = vdwg.mxu0
    %1062 = vrot.lane.b32.xlu0 %v958, 80
    %v1063 = vpop.permute.xlu0 %1062
    %v1065 = vadd.f32 %v1059, %v1063
    %v1066 = vxor.u32 %v1065, 2147483648
    %v1067 = vmul.f32 %v1066, 1.442695
    %v1068 = vpow.pop %v1067
    %v1069 = vadd.f32 %v1068, 1.0
    %v1070 = vrcp.pop %v1069
    %v1071 = vmul.f32 1.0, %v1070
    %v1073 = vlaneseq
    %v1074 = vshrl.u32 %v1073, 7
    %v1075 = vsub.s32 0, %v1074
    %v1076 = vrot.slane %v879, %v1075
    %1077 = vrot.lane.b32.xlu0 %v1076, 32
    %v1078 = vpop.permute.xlu0 %1077
    %v1080 = vadd.f32 %v1059, %v1078
    %1081 = vrot.lane.b32.xlu0 %v958, 48
    %v1082 = vpop.permute.xlu0 %1081
    %v1084 = vmul.f32 %v1071, %v1082
    %1086 = vrot.lane.b32.xlu0 %v1084, 32
    %v1087 = vpop.permute.xlu0 %1086
    %v1089 = vadd.f32 %v1080, %v1087
    %v1090 = vtanh.pop %v1089
    %v1091 = vsub.f32 1.0, %v1071
    %1093 = vrot.lane.b32.xlu0 %v1090, 112
    %v1094 = vpop.permute.xlu0 %1093
    %v1096 = vmul.f32 %v1091, %v1094
    %v1097 = vmul.f32 %v1071, 0.0
    %v1098 = vadd.f32 %v1096, %v1097
    %vm1099 = vcmp.gt.s32.totalorder %v880, 0
    %v1100 = vsel %vm1099, 1, 0
    %1101 = vset.pattern.permute.xlu0 0
    %1102 = vperm.xlu0 %1101, %v1100
    %v1103 = vpop.permute.xlu0 %1102
    %vm1104 = vcmp.eq.s32.totalorder %v1103, 1
    %v1105 = vsel %vm1104, %v986, 0.0
    %v1106 = vsel %vm1104, %v1098, 0.0
    %v1107 = vld [vmem:[#allocation2 + $0x2] sm:$0x3]
    %1109 = vrot.lane.b32.xlu0 %v1105, 112
    %v1110 = vpop.permute.xlu0 %1109
    %v1112 = vsel %vm345, %v1110, %v1106
    %v1114 = vsel %vm516, %v1112, 0
    %1116 = vmatprep.subr.mxu0 0.0
    %1117 = vmatpush1.msra.mxu0 0.0
    %1118 = vmatprep.subr.mxu0 0.0
    %1119 = vmatpush1.msra.mxu0 0.0
    %1120 = vmatprep.subr.mxu0 0.0
    %1121 = vmatpush1.msra.mxu0 0.0
    %1122 = vmatprep.subr.mxu0 0.0
    %1123 = vmatpush1.msra.mxu0 0.0
    %1124 = vmatprep.subr.mxu0 0.0
    %1125 = vmatpush1.msra.mxu0 0.0
    %1126 = vmatprep.subr.mxu0 0.0
    %1127 = vmatpush1.msra.mxu0 0.0
    %1128 = vmatprep.subr.mxu0 0.0
    %1129 = vmatpush1.msra.mxu0 0.0
    %1130 = vmatprep.subr.mxu0 0.0
    %1131 = vmatpush1.msra.mxu0 0.0
    %1132 = vmatprep.subr.mxu0 0.0
    %1133 = vmatpush1.msra.mxu0 0.0
    %1134 = vmatprep.subr.mxu0 0.0
    %1135 = vmatpush1.msra.mxu0 0.0
    %1136 = vmatprep.subr.mxu0 0.0
    %1137 = vmatpush1.msra.mxu0 0.0
    %1138 = vmatprep.subr.mxu0 0.0
    %1139 = vmatpush1.msra.mxu0 0.0
    %1140 = vmatprep.subr.mxu0 0.0
    %1141 = vmatpush1.msra.mxu0 %v875
    %1142 = vmatprep.subr.mxu0 0.0
    %1143 = vmatpush1.msra.mxu0 %v874
    %1144 = vmatprep.subr.mxu0 0.0
    %1145 = vmatpush1.msra.mxu0 %v873
    %1146 = vmatprep.subr.mxu0 0.0
    %1147 = vmatpush1.msra.mxu0 %v872
    %1148 = vmatprep.subr.mxu0 0.0
    %1149 = vmatpush2.msra.mxu0 0.0
    %1150 = vmatprep.subr.mxu0 0.0
    %1151 = vmatpush2.msra.mxu0 0.0
    %1152 = vmatprep.subr.mxu0 0.0
    %1153 = vmatpush2.msra.mxu0 0.0
    %1154 = vmatprep.subr.mxu0 0.0
    %1155 = vmatpush2.msra.mxu0 0.0
    %1156 = vmatprep.subr.mxu0 0.0
    %1157 = vmatpush2.msra.mxu0 0.0
    %1158 = vmatprep.subr.mxu0 0.0
    %1159 = vmatpush2.msra.mxu0 0.0
    %1160 = vmatprep.subr.mxu0 0.0
    %1161 = vmatpush2.msra.mxu0 0.0
    %1162 = vmatprep.subr.mxu0 0.0
    %1163 = vmatpush2.msra.mxu0 0.0
    %1164 = vmatprep.subr.mxu0 0.0
    %1165 = vmatpush2.msra.mxu0 0.0
    %1166 = vmatprep.subr.mxu0 0.0
    %1167 = vmatpush2.msra.mxu0 0.0
    %1168 = vmatprep.subr.mxu0 0.0
    %1169 = vmatpush2.msra.mxu0 0.0
    %1170 = vmatprep.subr.mxu0 0.0
    %1171 = vmatpush2.msra.mxu0 0.0
    %1172 = vmatprep.subr.mxu0 0.0
    %1173 = vmatpush2.msra.mxu0 0.0
    %1174 = vmatprep.subr.mxu0 0.0
    %1175 = vmatpush2.msra.mxu0 0.0
    %1176 = vmatprep.subr.mxu0 0.0
    %1177 = vmatpush2.msra.mxu0 0.0
    %1178 = vmatprep.subr.mxu0 0.0
    %1179 = vmatpush2.msra.mxu0 0.0
    %1180 = vmatprep.mubr.f32.mxu0 0.0
    %1181 = vmatmul.mubr.f32.gmra.mxu0 %v1114
    %v1182 = vpop.f32.mrf.mxu0
    %v1183 = vadd.f32 %v886, %v1182
    %v1184 = vpop.f32.mrf.mxu0
    %1185 = vdwg.mxu0
    %v1186 = vadd.f32 %v1107, %v1183
    %v1187 = vxor.u32 %v1186, 2147483648
    %v1188 = vmul.f32 %v1187, 1.442695
    %v1189 = vpow.pop %v1188
    %v1190 = vadd.f32 %v1189, 1.0
    %v1191 = vrcp.pop %v1190
    %v1192 = vmul.f32 1.0, %v1191
    %1194 = vrot.lane.b32.xlu0 %v1183, 96
    %v1195 = vpop.permute.xlu0 %1194
    %v1197 = vmul.f32 %v1192, %v1195
    %1199 = vrot.lane.b32.xlu0 %v1197, 32
    %v1200 = vpop.permute.xlu0 %1199
    %v1202 = vadd.f32 %v1107, %v1200
    %v1203 = vtanh.pop %v1202
    %v1204 = vsub.f32 1.0, %v1192
    %1206 = vrot.lane.b32.xlu0 %v1203, 112
    %v1207 = vpop.permute.xlu0 %1206
    %v1209 = vmul.f32 %v1204, %v1207
    %v1210 = vmul.f32 %v1192, %v1105
    %v1211 = vadd.f32 %v1209, %v1210
    %1213 = vrot.lane.b32.xlu0 %v1211, 112
    %v1214 = vpop.permute.xlu0 %1213
    %v1215 = vsel %vm345, %v1214, 0
    %1217 = vmatprep.subr.mxu0 0.0
    %1218 = vmatpush1.msra.mxu0 0.0
    %1219 = vmatprep.subr.mxu0 0.0
    %1220 = vmatpush1.msra.mxu0 0.0
    %1221 = vmatprep.subr.mxu0 0.0
    %1222 = vmatpush1.msra.mxu0 0.0
    %1223 = vmatprep.subr.mxu0 0.0
    %1224 = vmatpush1.msra.mxu0 0.0
    %1225 = vmatprep.subr.mxu0 0.0
    %1226 = vmatpush1.msra.mxu0 0.0
    %1227 = vmatprep.subr.mxu0 0.0
    %1228 = vmatpush1.msra.mxu0 0.0
    %1229 = vmatprep.subr.mxu0 0.0
    %1230 = vmatpush1.msra.mxu0 0.0
    %1231 = vmatprep.subr.mxu0 0.0
    %1232 = vmatpush1.msra.mxu0 0.0
    %1233 = vmatprep.subr.mxu0 0.0
    %1234 = vmatpush1.msra.mxu0 0.0
    %1235 = vmatprep.subr.mxu0 0.0
    %1236 = vmatpush1.msra.mxu0 0.0
    %1237 = vmatprep.subr.mxu0 0.0
    %1238 = vmatpush1.msra.mxu0 0.0
    %1239 = vmatprep.subr.mxu0 0.0
    %1240 = vmatpush1.msra.mxu0 0.0
    %1241 = vmatprep.subr.mxu0 0.0
    %1242 = vmatpush1.msra.mxu0 0.0
    %1243 = vmatprep.subr.mxu0 0.0
    %1244 = vmatpush1.msra.mxu0 0.0
    %1245 = vmatprep.subr.mxu0 0.0
    %1246 = vmatpush1.msra.mxu0 %v878
    %1247 = vmatprep.subr.mxu0 0.0
    %1248 = vmatpush1.msra.mxu0 %v877
    %1249 = vmatprep.subr.mxu0 0.0
    %1250 = vmatpush2.msra.mxu0 0.0
    %1251 = vmatprep.subr.mxu0 0.0
    %1252 = vmatpush2.msra.mxu0 0.0
    %1253 = vmatprep.subr.mxu0 0.0
    %1254 = vmatpush2.msra.mxu0 0.0
    %1255 = vmatprep.subr.mxu0 0.0
    %1256 = vmatpush2.msra.mxu0 0.0
    %1257 = vmatprep.subr.mxu0 0.0
    %1258 = vmatpush2.msra.mxu0 0.0
    %1259 = vmatprep.subr.mxu0 0.0
    %1260 = vmatpush2.msra.mxu0 0.0
    %1261 = vmatprep.subr.mxu0 0.0
    %1262 = vmatpush2.msra.mxu0 0.0
    %1263 = vmatprep.subr.mxu0 0.0
    %1264 = vmatpush2.msra.mxu0 0.0
    %1265 = vmatprep.subr.mxu0 0.0
    %1266 = vmatpush2.msra.mxu0 0.0
    %1267 = vmatprep.subr.mxu0 0.0
    %1268 = vmatpush2.msra.mxu0 0.0
    %1269 = vmatprep.subr.mxu0 0.0
    %1270 = vmatpush2.msra.mxu0 0.0
    %1271 = vmatprep.subr.mxu0 0.0
    %1272 = vmatpush2.msra.mxu0 0.0
    %1273 = vmatprep.subr.mxu0 0.0
    %1274 = vmatpush2.msra.mxu0 0.0
    %1275 = vmatprep.subr.mxu0 0.0
    %1276 = vmatpush2.msra.mxu0 0.0
    %1277 = vmatprep.subr.mxu0 0.0
    %1278 = vmatpush2.msra.mxu0 0.0
    %1279 = vmatprep.subr.mxu0 0.0
    %1280 = vmatpush2.msra.mxu0 0.0
    %1281 = vmatprep.mubr.f32.mxu0 0.0
    %1282 = vmatmul.mubr.f32.gmra.mxu0 %v1215
    %v1283 = vpop.f32.mrf.mxu0
    %v1284 = vadd.f32 0.0, %v1283
    %v1285 = vpop.f32.mrf.mxu0
    %1286 = vdwg.mxu0
    %1287 = vrot.lane.b32.xlu0 %v1183, 80
    %v1288 = vpop.permute.xlu0 %1287
    %v1290 = vadd.f32 %v1284, %v1288
    %v1291 = vxor.u32 %v1290, 2147483648
    %v1292 = vmul.f32 %v1291, 1.442695
    %v1293 = vpow.pop %v1292
    %v1294 = vadd.f32 %v1293, 1.0
    %v1295 = vrcp.pop %v1294
    %v1296 = vmul.f32 1.0, %v1295
    %v1297 = vadd.f32 %v1284, %v1078
    %1298 = vrot.lane.b32.xlu0 %v1183, 48
    %v1299 = vpop.permute.xlu0 %1298
    %v1301 = vmul.f32 %v1296, %v1299
    %1303 = vrot.lane.b32.xlu0 %v1301, 32
    %v1304 = vpop.permute.xlu0 %1303
    %v1306 = vadd.f32 %v1297, %v1304
    %v1307 = vtanh.pop %v1306
    %v1308 = vsub.f32 1.0, %v1296
    %1310 = vrot.lane.b32.xlu0 %v1307, 112
    %v1311 = vpop.permute.xlu0 %1310
    %v1313 = vmul.f32 %v1308, %v1311
    %v1314 = vmul.f32 %v1296, %v1106
    %v1315 = vadd.f32 %v1313, %v1314
    %vm1316 = vcmp.gt.s32.totalorder %v880, 1
    %v1317 = vsel %vm1316, 1, 0
    %1318 = vset.pattern.permute.xlu0 0
    %1319 = vperm.xlu0 %1318, %v1317
    %v1320 = vpop.permute.xlu0 %1319
    %vm1321 = vcmp.eq.s32.totalorder %v1320, 1
    %v1322 = vsel %vm1321, %v1211, %v1105
    %v1323 = vsel %vm1321, %v1315, %v1106
    %v1324 = vld [vmem:[#allocation2 + $0x4] sm:$0x3]
    %1326 = vrot.lane.b32.xlu0 %v1322, 112
    %v1327 = vpop.permute.xlu0 %1326
    %v1329 = vsel %vm345, %v1327, %v1323
    %v1331 = vsel %vm516, %v1329, 0
    %1333 = vmatprep.subr.mxu0 0.0
    %1334 = vmatpush1.msra.mxu0 0.0
    %1335 = vmatprep.subr.mxu0 0.0
    %1336 = vmatpush1.msra.mxu0 0.0
    %1337 = vmatprep.subr.mxu0 0.0
    %1338 = vmatpush1.msra.mxu0 0.0
    %1339 = vmatprep.subr.mxu0 0.0
    %1340 = vmatpush1.msra.mxu0 0.0
    %1341 = vmatprep.subr.mxu0 0.0
    %1342 = vmatpush1.msra.mxu0 0.0
    %1343 = vmatprep.subr.mxu0 0.0
    %1344 = vmatpush1.msra.mxu0 0.0
    %1345 = vmatprep.subr.mxu0 0.0
    %1346 = vmatpush1.msra.mxu0 0.0
    %1347 = vmatprep.subr.mxu0 0.0
    %1348 = vmatpush1.msra.mxu0 0.0
    %1349 = vmatprep.subr.mxu0 0.0
    %1350 = vmatpush1.msra.mxu0 0.0
    %1351 = vmatprep.subr.mxu0 0.0
    %1352 = vmatpush1.msra.mxu0 0.0
    %1353 = vmatprep.subr.mxu0 0.0
    %1354 = vmatpush1.msra.mxu0 0.0
    %1355 = vmatprep.subr.mxu0 0.0
    %1356 = vmatpush1.msra.mxu0 0.0
    %1357 = vmatprep.subr.mxu0 0.0
    %1358 = vmatpush1.msra.mxu0 %v875
    %1359 = vmatprep.subr.mxu0 0.0
    %1360 = vmatpush1.msra.mxu0 %v874
    %1361 = vmatprep.subr.mxu0 0.0
    %1362 = vmatpush1.msra.mxu0 %v873
    %1363 = vmatprep.subr.mxu0 0.0
    %1364 = vmatpush1.msra.mxu0 %v872
    %1365 = vmatprep.subr.mxu0 0.0
    %1366 = vmatpush2.msra.mxu0 0.0
    %1367 = vmatprep.subr.mxu0 0.0
    %1368 = vmatpush2.msra.mxu0 0.0
    %1369 = vmatprep.subr.mxu0 0.0
    %1370 = vmatpush2.msra.mxu0 0.0
    %1371 = vmatprep.subr.mxu0 0.0
    %1372 = vmatpush2.msra.mxu0 0.0
    %1373 = vmatprep.subr.mxu0 0.0
    %1374 = vmatpush2.msra.mxu0 0.0
    %1375 = vmatprep.subr.mxu0 0.0
    %1376 = vmatpush2.msra.mxu0 0.0
    %1377 = vmatprep.subr.mxu0 0.0
    %1378 = vmatpush2.msra.mxu0 0.0
    %1379 = vmatprep.subr.mxu0 0.0
    %1380 = vmatpush2.msra.mxu0 0.0
    %1381 = vmatprep.subr.mxu0 0.0
    %1382 = vmatpush2.msra.mxu0 0.0
    %1383 = vmatprep.subr.mxu0 0.0
    %1384 = vmatpush2.msra.mxu0 0.0
    %1385 = vmatprep.subr.mxu0 0.0
    %1386 = vmatpush2.msra.mxu0 0.0
    %1387 = vmatprep.subr.mxu0 0.0
    %1388 = vmatpush2.msra.mxu0 0.0
    %1389 = vmatprep.subr.mxu0 0.0
    %1390 = vmatpush2.msra.mxu0 0.0
    %1391 = vmatprep.subr.mxu0 0.0
    %1392 = vmatpush2.msra.mxu0 0.0
    %1393 = vmatprep.subr.mxu0 0.0
    %1394 = vmatpush2.msra.mxu0 0.0
    %1395 = vmatprep.subr.mxu0 0.0
    %1396 = vmatpush2.msra.mxu0 0.0
    %1397 = vmatprep.mubr.f32.mxu0 0.0
    %1398 = vmatmul.mubr.f32.gmra.mxu0 %v1331
    %v1399 = vpop.f32.mrf.mxu0
    %v1400 = vadd.f32 %v886, %v1399
    %v1401 = vpop.f32.mrf.mxu0
    %1402 = vdwg.mxu0
    %v1403 = vadd.f32 %v1324, %v1400
    %v1404 = vxor.u32 %v1403, 2147483648
    %v1405 = vmul.f32 %v1404, 1.442695
    %v1406 = vpow.pop %v1405
    %v1407 = vadd.f32 %v1406, 1.0
    %v1408 = vrcp.pop %v1407
    %v1409 = vmul.f32 1.0, %v1408
    %1411 = vrot.lane.b32.xlu0 %v1400, 96
    %v1412 = vpop.permute.xlu0 %1411
    %v1414 = vmul.f32 %v1409, %v1412
    %1416 = vrot.lane.b32.xlu0 %v1414, 32
    %v1417 = vpop.permute.xlu0 %1416
    %v1419 = vadd.f32 %v1324, %v1417
    %v1420 = vtanh.pop %v1419
    %v1421 = vsub.f32 1.0, %v1409
    %1423 = vrot.lane.b32.xlu0 %v1420, 112
    %v1424 = vpop.permute.xlu0 %1423
    %v1426 = vmul.f32 %v1421, %v1424
    %v1427 = vmul.f32 %v1409, %v1322
    %v1428 = vadd.f32 %v1426, %v1427
    %1430 = vrot.lane.b32.xlu0 %v1428, 112
    %v1431 = vpop.permute.xlu0 %1430
    %v1432 = vsel %vm345, %v1431, 0
    %1434 = vmatprep.subr.mxu0 0.0
    %1435 = vmatpush1.msra.mxu0 0.0
    %1436 = vmatprep.subr.mxu0 0.0
    %1437 = vmatpush1.msra.mxu0 0.0
    %1438 = vmatprep.subr.mxu0 0.0
    %1439 = vmatpush1.msra.mxu0 0.0
    %1440 = vmatprep.subr.mxu0 0.0
    %1441 = vmatpush1.msra.mxu0 0.0
    %1442 = vmatprep.subr.mxu0 0.0
    %1443 = vmatpush1.msra.mxu0 0.0
    %1444 = vmatprep.subr.mxu0 0.0
    %1445 = vmatpush1.msra.mxu0 0.0
    %1446 = vmatprep.subr.mxu0 0.0
    %1447 = vmatpush1.msra.mxu0 0.0
    %1448 = vmatprep.subr.mxu0 0.0
    %1449 = vmatpush1.msra.mxu0 0.0
    %1450 = vmatprep.subr.mxu0 0.0
    %1451 = vmatpush1.msra.mxu0 0.0
    %1452 = vmatprep.subr.mxu0 0.0
    %1453 = vmatpush1.msra.mxu0 0.0
    %1454 = vmatprep.subr.mxu0 0.0
    %1455 = vmatpush1.msra.mxu0 0.0
    %1456 = vmatprep.subr.mxu0 0.0
    %1457 = vmatpush1.msra.mxu0 0.0
    %1458 = vmatprep.subr.mxu0 0.0
    %1459 = vmatpush1.msra.mxu0 0.0
    %1460 = vmatprep.subr.mxu0 0.0
    %1461 = vmatpush1.msra.mxu0 0.0
    %1462 = vmatprep.subr.mxu0 0.0
    %1463 = vmatpush1.msra.mxu0 %v878
    %1464 = vmatprep.subr.mxu0 0.0
    %1465 = vmatpush1.msra.mxu0 %v877
    %1466 = vmatprep.subr.mxu0 0.0
    %1467 = vmatpush2.msra.mxu0 0.0
    %1468 = vmatprep.subr.mxu0 0.0
    %1469 = vmatpush2.msra.mxu0 0.0
    %1470 = vmatprep.subr.mxu0 0.0
    %1471 = vmatpush2.msra.mxu0 0.0
    %1472 = vmatprep.subr.mxu0 0.0
    %1473 = vmatpush2.msra.mxu0 0.0
    %1474 = vmatprep.subr.mxu0 0.0
    %1475 = vmatpush2.msra.mxu0 0.0
    %1476 = vmatprep.subr.mxu0 0.0
    %1477 = vmatpush2.msra.mxu0 0.0
    %1478 = vmatprep.subr.mxu0 0.0
    %1479 = vmatpush2.msra.mxu0 0.0
    %1480 = vmatprep.subr.mxu0 0.0
    %1481 = vmatpush2.msra.mxu0 0.0
    %1482 = vmatprep.subr.mxu0 0.0
    %1483 = vmatpush2.msra.mxu0 0.0
    %1484 = vmatprep.subr.mxu0 0.0
    %1485 = vmatpush2.msra.mxu0 0.0
    %1486 = vmatprep.subr.mxu0 0.0
    %1487 = vmatpush2.msra.mxu0 0.0
    %1488 = vmatprep.subr.mxu0 0.0
    %1489 = vmatpush2.msra.mxu0 0.0
    %1490 = vmatprep.subr.mxu0 0.0
    %1491 = vmatpush2.msra.mxu0 0.0
    %1492 = vmatprep.subr.mxu0 0.0
    %1493 = vmatpush2.msra.mxu0 0.0
    %1494 = vmatprep.subr.mxu0 0.0
    %1495 = vmatpush2.msra.mxu0 0.0
    %1496 = vmatprep.subr.mxu0 0.0
    %1497 = vmatpush2.msra.mxu0 0.0
    %1498 = vmatprep.mubr.f32.mxu0 0.0
    %1499 = vmatmul.mubr.f32.gmra.mxu0 %v1432
    %v1500 = vpop.f32.mrf.mxu0
    %v1501 = vadd.f32 0.0, %v1500
    %v1502 = vpop.f32.mrf.mxu0
    %1503 = vdwg.mxu0
    %1504 = vrot.lane.b32.xlu0 %v1400, 80
    %v1505 = vpop.permute.xlu0 %1504
    %v1507 = vadd.f32 %v1501, %v1505
    %v1508 = vxor.u32 %v1507, 2147483648
    %v1509 = vmul.f32 %v1508, 1.442695
    %v1510 = vpow.pop %v1509
    %v1511 = vadd.f32 %v1510, 1.0
    %v1512 = vrcp.pop %v1511
    %v1513 = vmul.f32 1.0, %v1512
    %v1514 = vadd.f32 %v1501, %v1078
    %1515 = vrot.lane.b32.xlu0 %v1400, 48
    %v1516 = vpop.permute.xlu0 %1515
    %v1518 = vmul.f32 %v1513, %v1516
    %1520 = vrot.lane.b32.xlu0 %v1518, 32
    %v1521 = vpop.permute.xlu0 %1520
    %v1523 = vadd.f32 %v1514, %v1521
    %v1524 = vtanh.pop %v1523
    %v1525 = vsub.f32 1.0, %v1513
    %1527 = vrot.lane.b32.xlu0 %v1524, 112
    %v1528 = vpop.permute.xlu0 %1527
    %v1530 = vmul.f32 %v1525, %v1528
    %v1531 = vmul.f32 %v1513, %v1323
    %v1532 = vadd.f32 %v1530, %v1531
    %vm1533 = vcmp.gt.s32.totalorder %v880, 2
    %v1534 = vsel %vm1533, 1, 0
    %1535 = vset.pattern.permute.xlu0 0
    %1536 = vperm.xlu0 %1535, %v1534
    %v1537 = vpop.permute.xlu0 %1536
    %vm1538 = vcmp.eq.s32.totalorder %v1537, 1
    %v1539 = vsel %vm1538, %v1428, %v1322
    %v1540 = vsel %vm1538, %v1532, %v1323
    %v1541 = vld [vmem:[#allocation2 + $0x6] sm:$0x3]
    %1543 = vrot.lane.b32.xlu0 %v1539, 112
    %v1544 = vpop.permute.xlu0 %1543
    %v1546 = vsel %vm345, %v1544, %v1540
    %v1548 = vsel %vm516, %v1546, 0
    %1550 = vmatprep.subr.mxu0 0.0
    %1551 = vmatpush1.msra.mxu0 0.0
    %1552 = vmatprep.subr.mxu0 0.0
    %1553 = vmatpush1.msra.mxu0 0.0
    %1554 = vmatprep.subr.mxu0 0.0
    %1555 = vmatpush1.msra.mxu0 0.0
    %1556 = vmatprep.subr.mxu0 0.0
    %1557 = vmatpush1.msra.mxu0 0.0
    %1558 = vmatprep.subr.mxu0 0.0
    %1559 = vmatpush1.msra.mxu0 0.0
    %1560 = vmatprep.subr.mxu0 0.0
    %1561 = vmatpush1.msra.mxu0 0.0
    %1562 = vmatprep.subr.mxu0 0.0
    %1563 = vmatpush1.msra.mxu0 0.0
    %1564 = vmatprep.subr.mxu0 0.0
    %1565 = vmatpush1.msra.mxu0 0.0
    %1566 = vmatprep.subr.mxu0 0.0
    %1567 = vmatpush1.msra.mxu0 0.0
    %1568 = vmatprep.subr.mxu0 0.0
    %1569 = vmatpush1.msra.mxu0 0.0
    %1570 = vmatprep.subr.mxu0 0.0
    %1571 = vmatpush1.msra.mxu0 0.0
    %1572 = vmatprep.subr.mxu0 0.0
    %1573 = vmatpush1.msra.mxu0 0.0
    %1574 = vmatprep.subr.mxu0 0.0
    %1575 = vmatpush1.msra.mxu0 %v875
    %1576 = vmatprep.subr.mxu0 0.0
    %1577 = vmatpush1.msra.mxu0 %v874
    %1578 = vmatprep.subr.mxu0 0.0
    %1579 = vmatpush1.msra.mxu0 %v873
    %1580 = vmatprep.subr.mxu0 0.0
    %1581 = vmatpush1.msra.mxu0 %v872
    %1582 = vmatprep.subr.mxu0 0.0
    %1583 = vmatpush2.msra.mxu0 0.0
    %1584 = vmatprep.subr.mxu0 0.0
    %1585 = vmatpush2.msra.mxu0 0.0
    %1586 = vmatprep.subr.mxu0 0.0
    %1587 = vmatpush2.msra.mxu0 0.0
    %1588 = vmatprep.subr.mxu0 0.0
    %1589 = vmatpush2.msra.mxu0 0.0
    %1590 = vmatprep.subr.mxu0 0.0
    %1591 = vmatpush2.msra.mxu0 0.0
    %1592 = vmatprep.subr.mxu0 0.0
    %1593 = vmatpush2.msra.mxu0 0.0
    %1594 = vmatprep.subr.mxu0 0.0
    %1595 = vmatpush2.msra.mxu0 0.0
    %1596 = vmatprep.subr.mxu0 0.0
    %1597 = vmatpush2.msra.mxu0 0.0
    %1598 = vmatprep.subr.mxu0 0.0
    %1599 = vmatpush2.msra.mxu0 0.0
    %1600 = vmatprep.subr.mxu0 0.0
    %1601 = vmatpush2.msra.mxu0 0.0
    %1602 = vmatprep.subr.mxu0 0.0
    %1603 = vmatpush2.msra.mxu0 0.0
    %1604 = vmatprep.subr.mxu0 0.0
    %1605 = vmatpush2.msra.mxu0 0.0
    %1606 = vmatprep.subr.mxu0 0.0
    %1607 = vmatpush2.msra.mxu0 0.0
    %1608 = vmatprep.subr.mxu0 0.0
    %1609 = vmatpush2.msra.mxu0 0.0
    %1610 = vmatprep.subr.mxu0 0.0
    %1611 = vmatpush2.msra.mxu0 0.0
    %1612 = vmatprep.subr.mxu0 0.0
    %1613 = vmatpush2.msra.mxu0 0.0
    %1614 = vmatprep.mubr.f32.mxu0 0.0
    %1615 = vmatmul.mubr.f32.gmra.mxu0 %v1548
    %v1616 = vpop.f32.mrf.mxu0
    %v1617 = vadd.f32 %v886, %v1616
    %v1618 = vpop.f32.mrf.mxu0
    %1619 = vdwg.mxu0
    %v1620 = vadd.f32 %v1541, %v1617
    %v1621 = vxor.u32 %v1620, 2147483648
    %v1622 = vmul.f32 %v1621, 1.442695
    %v1623 = vpow.pop %v1622
    %v1624 = vadd.f32 %v1623, 1.0
    %v1625 = vrcp.pop %v1624
    %v1626 = vmul.f32 1.0, %v1625
    %1628 = vrot.lane.b32.xlu0 %v1617, 96
    %v1629 = vpop.permute.xlu0 %1628
    %v1631 = vmul.f32 %v1626, %v1629
    %1633 = vrot.lane.b32.xlu0 %v1631, 32
    %v1634 = vpop.permute.xlu0 %1633
    %v1636 = vadd.f32 %v1541, %v1634
    %v1637 = vtanh.pop %v1636
    %v1638 = vsub.f32 1.0, %v1626
    %1640 = vrot.lane.b32.xlu0 %v1637, 112
    %v1641 = vpop.permute.xlu0 %1640
    %v1643 = vmul.f32 %v1638, %v1641
    %v1644 = vmul.f32 %v1626, %v1539
    %v1645 = vadd.f32 %v1643, %v1644
    %1647 = vrot.lane.b32.xlu0 %v1645, 112
    %v1648 = vpop.permute.xlu0 %1647
    %v1649 = vsel %vm345, %v1648, 0
    %1651 = vmatprep.subr.mxu0 0.0
    %1652 = vmatpush1.msra.mxu0 0.0
    %1653 = vmatprep.subr.mxu0 0.0
    %1654 = vmatpush1.msra.mxu0 0.0
    %1655 = vmatprep.subr.mxu0 0.0
    %1656 = vmatpush1.msra.mxu0 0.0
    %1657 = vmatprep.subr.mxu0 0.0
    %1658 = vmatpush1.msra.mxu0 0.0
    %1659 = vmatprep.subr.mxu0 0.0
    %1660 = vmatpush1.msra.mxu0 0.0
    %1661 = vmatprep.subr.mxu0 0.0
    %1662 = vmatpush1.msra.mxu0 0.0
    %1663 = vmatprep.subr.mxu0 0.0
    %1664 = vmatpush1.msra.mxu0 0.0
    %1665 = vmatprep.subr.mxu0 0.0
    %1666 = vmatpush1.msra.mxu0 0.0
    %1667 = vmatprep.subr.mxu0 0.0
    %1668 = vmatpush1.msra.mxu0 0.0
    %1669 = vmatprep.subr.mxu0 0.0
    %1670 = vmatpush1.msra.mxu0 0.0
    %1671 = vmatprep.subr.mxu0 0.0
    %1672 = vmatpush1.msra.mxu0 0.0
    %1673 = vmatprep.subr.mxu0 0.0
    %1674 = vmatpush1.msra.mxu0 0.0
    %1675 = vmatprep.subr.mxu0 0.0
    %1676 = vmatpush1.msra.mxu0 0.0
    %1677 = vmatprep.subr.mxu0 0.0
    %1678 = vmatpush1.msra.mxu0 0.0
    %1679 = vmatprep.subr.mxu0 0.0
    %1680 = vmatpush1.msra.mxu0 %v878
    %1681 = vmatprep.subr.mxu0 0.0
    %1682 = vmatpush1.msra.mxu0 %v877
    %1683 = vmatprep.subr.mxu0 0.0
    %1684 = vmatpush2.msra.mxu0 0.0
    %1685 = vmatprep.subr.mxu0 0.0
    %1686 = vmatpush2.msra.mxu0 0.0
    %1687 = vmatprep.subr.mxu0 0.0
    %1688 = vmatpush2.msra.mxu0 0.0
    %1689 = vmatprep.subr.mxu0 0.0
    %1690 = vmatpush2.msra.mxu0 0.0
    %1691 = vmatprep.subr.mxu0 0.0
    %1692 = vmatpush2.msra.mxu0 0.0
    %1693 = vmatprep.subr.mxu0 0.0
    %1694 = vmatpush2.msra.mxu0 0.0
    %1695 = vmatprep.subr.mxu0 0.0
    %1696 = vmatpush2.msra.mxu0 0.0
    %1697 = vmatprep.subr.mxu0 0.0
    %1698 = vmatpush2.msra.mxu0 0.0
    %1699 = vmatprep.subr.mxu0 0.0
    %1700 = vmatpush2.msra.mxu0 0.0
    %1701 = vmatprep.subr.mxu0 0.0
    %1702 = vmatpush2.msra.mxu0 0.0
    %1703 = vmatprep.subr.mxu0 0.0
    %1704 = vmatpush2.msra.mxu0 0.0
    %1705 = vmatprep.subr.mxu0 0.0
    %1706 = vmatpush2.msra.mxu0 0.0
    %1707 = vmatprep.subr.mxu0 0.0
    %1708 = vmatpush2.msra.mxu0 0.0
    %1709 = vmatprep.subr.mxu0 0.0
    %1710 = vmatpush2.msra.mxu0 0.0
    %1711 = vmatprep.subr.mxu0 0.0
    %1712 = vmatpush2.msra.mxu0 0.0
    %1713 = vmatprep.subr.mxu0 0.0
    %1714 = vmatpush2.msra.mxu0 0.0
    %1715 = vmatprep.mubr.f32.mxu0 0.0
    %1716 = vmatmul.mubr.f32.gmra.mxu0 %v1649
    %v1717 = vpop.f32.mrf.mxu0
    %v1718 = vadd.f32 0.0, %v1717
    %v1719 = vpop.f32.mrf.mxu0
    %1720 = vdwg.mxu0
    %1721 = vrot.lane.b32.xlu0 %v1617, 80
    %v1722 = vpop.permute.xlu0 %1721
    %v1724 = vadd.f32 %v1718, %v1722
    %v1725 = vxor.u32 %v1724, 2147483648
    %v1726 = vmul.f32 %v1725, 1.442695
    %v1727 = vpow.pop %v1726
    %v1728 = vadd.f32 %v1727, 1.0
    %v1729 = vrcp.pop %v1728
    %v1730 = vmul.f32 1.0, %v1729
    %v1731 = vadd.f32 %v1718, %v1078
    %1732 = vrot.lane.b32.xlu0 %v1617, 48
    %v1733 = vpop.permute.xlu0 %1732
    %v1735 = vmul.f32 %v1730, %v1733
    %1737 = vrot.lane.b32.xlu0 %v1735, 32
    %v1738 = vpop.permute.xlu0 %1737
    %v1740 = vadd.f32 %v1731, %v1738
    %v1741 = vtanh.pop %v1740
    %v1742 = vsub.f32 1.0, %v1730
    %1744 = vrot.lane.b32.xlu0 %v1741, 112
    %v1745 = vpop.permute.xlu0 %1744
    %v1747 = vmul.f32 %v1742, %v1745
    %v1748 = vmul.f32 %v1730, %v1540
    %v1749 = vadd.f32 %v1747, %v1748
    %vm1750 = vcmp.gt.s32.totalorder %v880, 3
    %v1751 = vsel %vm1750, 1, 0
    %1752 = vset.pattern.permute.xlu0 0
    %1753 = vperm.xlu0 %1752, %v1751
    %v1754 = vpop.permute.xlu0 %1753
    %vm1755 = vcmp.eq.s32.totalorder %v1754, 1
    %v1756 = vsel %vm1755, %v1645, %v1539
    %v1757 = vsel %vm1755, %v1749, %v1540
    %v1758 = vld [vmem:[#allocation2 + $0x8] sm:$0x3]
    %1760 = vrot.lane.b32.xlu0 %v1756, 112
    %v1761 = vpop.permute.xlu0 %1760
    %v1763 = vsel %vm345, %v1761, %v1757
    %v1765 = vsel %vm516, %v1763, 0
    %1767 = vmatprep.subr.mxu0 0.0
    %1768 = vmatpush1.msra.mxu0 0.0
    %1769 = vmatprep.subr.mxu0 0.0
    %1770 = vmatpush1.msra.mxu0 0.0
    %1771 = vmatprep.subr.mxu0 0.0
    %1772 = vmatpush1.msra.mxu0 0.0
    %1773 = vmatprep.subr.mxu0 0.0
    %1774 = vmatpush1.msra.mxu0 0.0
    %1775 = vmatprep.subr.mxu0 0.0
    %1776 = vmatpush1.msra.mxu0 0.0
    %1777 = vmatprep.subr.mxu0 0.0
    %1778 = vmatpush1.msra.mxu0 0.0
    %1779 = vmatprep.subr.mxu0 0.0
    %1780 = vmatpush1.msra.mxu0 0.0
    %1781 = vmatprep.subr.mxu0 0.0
    %1782 = vmatpush1.msra.mxu0 0.0
    %1783 = vmatprep.subr.mxu0 0.0
    %1784 = vmatpush1.msra.mxu0 0.0
    %1785 = vmatprep.subr.mxu0 0.0
    %1786 = vmatpush1.msra.mxu0 0.0
    %1787 = vmatprep.subr.mxu0 0.0
    %1788 = vmatpush1.msra.mxu0 0.0
    %1789 = vmatprep.subr.mxu0 0.0
    %1790 = vmatpush1.msra.mxu0 0.0
    %1791 = vmatprep.subr.mxu0 0.0
    %1792 = vmatpush1.msra.mxu0 %v875
    %1793 = vmatprep.subr.mxu0 0.0
    %1794 = vmatpush1.msra.mxu0 %v874
    %1795 = vmatprep.subr.mxu0 0.0
    %1796 = vmatpush1.msra.mxu0 %v873
    %1797 = vmatprep.subr.mxu0 0.0
    %1798 = vmatpush1.msra.mxu0 %v872
    %1799 = vmatprep.subr.mxu0 0.0
    %1800 = vmatpush2.msra.mxu0 0.0
    %1801 = vmatprep.subr.mxu0 0.0
    %1802 = vmatpush2.msra.mxu0 0.0
    %1803 = vmatprep.subr.mxu0 0.0
    %1804 = vmatpush2.msra.mxu0 0.0
    %1805 = vmatprep.subr.mxu0 0.0
    %1806 = vmatpush2.msra.mxu0 0.0
    %1807 = vmatprep.subr.mxu0 0.0
    %1808 = vmatpush2.msra.mxu0 0.0
    %1809 = vmatprep.subr.mxu0 0.0
    %1810 = vmatpush2.msra.mxu0 0.0
    %1811 = vmatprep.subr.mxu0 0.0
    %1812 = vmatpush2.msra.mxu0 0.0
    %1813 = vmatprep.subr.mxu0 0.0
    %1814 = vmatpush2.msra.mxu0 0.0
    %1815 = vmatprep.subr.mxu0 0.0
    %1816 = vmatpush2.msra.mxu0 0.0
    %1817 = vmatprep.subr.mxu0 0.0
    %1818 = vmatpush2.msra.mxu0 0.0
    %1819 = vmatprep.subr.mxu0 0.0
    %1820 = vmatpush2.msra.mxu0 0.0
    %1821 = vmatprep.subr.mxu0 0.0
    %1822 = vmatpush2.msra.mxu0 0.0
    %1823 = vmatprep.subr.mxu0 0.0
    %1824 = vmatpush2.msra.mxu0 0.0
    %1825 = vmatprep.subr.mxu0 0.0
    %1826 = vmatpush2.msra.mxu0 0.0
    %1827 = vmatprep.subr.mxu0 0.0
    %1828 = vmatpush2.msra.mxu0 0.0
    %1829 = vmatprep.subr.mxu0 0.0
    %1830 = vmatpush2.msra.mxu0 0.0
    %1831 = vmatprep.mubr.f32.mxu0 0.0
    %1832 = vmatmul.mubr.f32.gmra.mxu0 %v1765
    %v1833 = vpop.f32.mrf.mxu0
    %v1834 = vadd.f32 %v886, %v1833
    %v1835 = vpop.f32.mrf.mxu0
    %1836 = vdwg.mxu0
    %v1837 = vadd.f32 %v1758, %v1834
    %v1838 = vxor.u32 %v1837, 2147483648
    %v1839 = vmul.f32 %v1838, 1.442695
    %v1840 = vpow.pop %v1839
    %v1841 = vadd.f32 %v1840, 1.0
    %v1842 = vrcp.pop %v1841
    %v1843 = vmul.f32 1.0, %v1842
    %1845 = vrot.lane.b32.xlu0 %v1834, 96
    %v1846 = vpop.permute.xlu0 %1845
    %v1848 = vmul.f32 %v1843, %v1846
    %1850 = vrot.lane.b32.xlu0 %v1848, 32
    %v1851 = vpop.permute.xlu0 %1850
    %v1853 = vadd.f32 %v1758, %v1851
    %v1854 = vtanh.pop %v1853
    %v1855 = vsub.f32 1.0, %v1843
    %1857 = vrot.lane.b32.xlu0 %v1854, 112
    %v1858 = vpop.permute.xlu0 %1857
    %v1860 = vmul.f32 %v1855, %v1858
    %v1861 = vmul.f32 %v1843, %v1756
    %v1862 = vadd.f32 %v1860, %v1861
    %1864 = vrot.lane.b32.xlu0 %v1862, 112
    %v1865 = vpop.permute.xlu0 %1864
    %v1866 = vsel %vm345, %v1865, 0
    %1868 = vmatprep.subr.mxu0 0.0
    %1869 = vmatpush1.msra.mxu0 0.0
    %1870 = vmatprep.subr.mxu0 0.0
    %1871 = vmatpush1.msra.mxu0 0.0
    %1872 = vmatprep.subr.mxu0 0.0
    %1873 = vmatpush1.msra.mxu0 0.0
    %1874 = vmatprep.subr.mxu0 0.0
    %1875 = vmatpush1.msra.mxu0 0.0
    %1876 = vmatprep.subr.mxu0 0.0
    %1877 = vmatpush1.msra.mxu0 0.0
    %1878 = vmatprep.subr.mxu0 0.0
    %1879 = vmatpush1.msra.mxu0 0.0
    %1880 = vmatprep.subr.mxu0 0.0
    %1881 = vmatpush1.msra.mxu0 0.0
    %1882 = vmatprep.subr.mxu0 0.0
    %1883 = vmatpush1.msra.mxu0 0.0
    %1884 = vmatprep.subr.mxu0 0.0
    %1885 = vmatpush1.msra.mxu0 0.0
    %1886 = vmatprep.subr.mxu0 0.0
    %1887 = vmatpush1.msra.mxu0 0.0
    %1888 = vmatprep.subr.mxu0 0.0
    %1889 = vmatpush1.msra.mxu0 0.0
    %1890 = vmatprep.subr.mxu0 0.0
    %1891 = vmatpush1.msra.mxu0 0.0
    %1892 = vmatprep.subr.mxu0 0.0
    %1893 = vmatpush1.msra.mxu0 0.0
    %1894 = vmatprep.subr.mxu0 0.0
    %1895 = vmatpush1.msra.mxu0 0.0
    %1896 = vmatprep.subr.mxu0 0.0
    %1897 = vmatpush1.msra.mxu0 %v878
    %1898 = vmatprep.subr.mxu0 0.0
    %1899 = vmatpush1.msra.mxu0 %v877
    %1900 = vmatprep.subr.mxu0 0.0
    %1901 = vmatpush2.msra.mxu0 0.0
    %1902 = vmatprep.subr.mxu0 0.0
    %1903 = vmatpush2.msra.mxu0 0.0
    %1904 = vmatprep.subr.mxu0 0.0
    %1905 = vmatpush2.msra.mxu0 0.0
    %1906 = vmatprep.subr.mxu0 0.0
    %1907 = vmatpush2.msra.mxu0 0.0
    %1908 = vmatprep.subr.mxu0 0.0
    %1909 = vmatpush2.msra.mxu0 0.0
    %1910 = vmatprep.subr.mxu0 0.0
    %1911 = vmatpush2.msra.mxu0 0.0
    %1912 = vmatprep.subr.mxu0 0.0
    %1913 = vmatpush2.msra.mxu0 0.0
    %1914 = vmatprep.subr.mxu0 0.0
    %1915 = vmatpush2.msra.mxu0 0.0
    %1916 = vmatprep.subr.mxu0 0.0
    %1917 = vmatpush2.msra.mxu0 0.0
    %1918 = vmatprep.subr.mxu0 0.0
    %1919 = vmatpush2.msra.mxu0 0.0
    %1920 = vmatprep.subr.mxu0 0.0
    %1921 = vmatpush2.msra.mxu0 0.0
    %1922 = vmatprep.subr.mxu0 0.0
    %1923 = vmatpush2.msra.mxu0 0.0
    %1924 = vmatprep.subr.mxu0 0.0
    %1925 = vmatpush2.msra.mxu0 0.0
    %1926 = vmatprep.subr.mxu0 0.0
    %1927 = vmatpush2.msra.mxu0 0.0
    %1928 = vmatprep.subr.mxu0 0.0
    %1929 = vmatpush2.msra.mxu0 0.0
    %1930 = vmatprep.subr.mxu0 0.0
    %1931 = vmatpush2.msra.mxu0 0.0
    %1932 = vmatprep.mubr.f32.mxu0 0.0
    %1933 = vmatmul.mubr.f32.gmra.mxu0 %v1866
    %v1934 = vpop.f32.mrf.mxu0
    %v1935 = vadd.f32 0.0, %v1934
    %v1936 = vpop.f32.mrf.mxu0
    %1937 = vdwg.mxu0
    %1938 = vrot.lane.b32.xlu0 %v1834, 80
    %v1939 = vpop.permute.xlu0 %1938
    %v1941 = vadd.f32 %v1935, %v1939
    %v1942 = vxor.u32 %v1941, 2147483648
    %v1943 = vmul.f32 %v1942, 1.442695
    %v1944 = vpow.pop %v1943
    %v1945 = vadd.f32 %v1944, 1.0
    %v1946 = vrcp.pop %v1945
    %v1947 = vmul.f32 1.0, %v1946
    %v1948 = vadd.f32 %v1935, %v1078
    %1949 = vrot.lane.b32.xlu0 %v1834, 48
    %v1950 = vpop.permute.xlu0 %1949
    %v1952 = vmul.f32 %v1947, %v1950
    %1954 = vrot.lane.b32.xlu0 %v1952, 32
    %v1955 = vpop.permute.xlu0 %1954
    %v1957 = vadd.f32 %v1948, %v1955
    %v1958 = vtanh.pop %v1957
    %v1959 = vsub.f32 1.0, %v1947
    %1961 = vrot.lane.b32.xlu0 %v1958, 112
    %v1962 = vpop.permute.xlu0 %1961
    %v1964 = vmul.f32 %v1959, %v1962
    %v1965 = vmul.f32 %v1947, %v1757
    %v1966 = vadd.f32 %v1964, %v1965
    %vm1967 = vcmp.gt.s32.totalorder %v880, 4
    %v1968 = vsel %vm1967, 1, 0
    %1969 = vset.pattern.permute.xlu0 0
    %1970 = vperm.xlu0 %1969, %v1968
    %v1971 = vpop.permute.xlu0 %1970
    %vm1972 = vcmp.eq.s32.totalorder %v1971, 1
    %v1973 = vsel %vm1972, %v1862, %v1756
    %v1974 = vsel %vm1972, %v1966, %v1757
    %v1975 = vld [vmem:[#allocation2 + $0xa] sm:$0x3]
    %1977 = vrot.lane.b32.xlu0 %v1973, 112
    %v1978 = vpop.permute.xlu0 %1977
    %v1980 = vsel %vm345, %v1978, %v1974
    %v1982 = vsel %vm516, %v1980, 0
    %1984 = vmatprep.subr.mxu0 0.0
    %1985 = vmatpush1.msra.mxu0 0.0
    %1986 = vmatprep.subr.mxu0 0.0
    %1987 = vmatpush1.msra.mxu0 0.0
    %1988 = vmatprep.subr.mxu0 0.0
    %1989 = vmatpush1.msra.mxu0 0.0
    %1990 = vmatprep.subr.mxu0 0.0
    %1991 = vmatpush1.msra.mxu0 0.0
    %1992 = vmatprep.subr.mxu0 0.0
    %1993 = vmatpush1.msra.mxu0 0.0
    %1994 = vmatprep.subr.mxu0 0.0
    %1995 = vmatpush1.msra.mxu0 0.0
    %1996 = vmatprep.subr.mxu0 0.0
    %1997 = vmatpush1.msra.mxu0 0.0
    %1998 = vmatprep.subr.mxu0 0.0
    %1999 = vmatpush1.msra.mxu0 0.0
    %2000 = vmatprep.subr.mxu0 0.0
    %2001 = vmatpush1.msra.mxu0 0.0
    %2002 = vmatprep.subr.mxu0 0.0
    %2003 = vmatpush1.msra.mxu0 0.0
    %2004 = vmatprep.subr.mxu0 0.0
    %2005 = vmatpush1.msra.mxu0 0.0
    %2006 = vmatprep.subr.mxu0 0.0
    %2007 = vmatpush1.msra.mxu0 0.0
    %2008 = vmatprep.subr.mxu0 0.0
    %2009 = vmatpush1.msra.mxu0 %v875
    %2010 = vmatprep.subr.mxu0 0.0
    %2011 = vmatpush1.msra.mxu0 %v874
    %2012 = vmatprep.subr.mxu0 0.0
    %2013 = vmatpush1.msra.mxu0 %v873
    %2014 = vmatprep.subr.mxu0 0.0
    %2015 = vmatpush1.msra.mxu0 %v872
    %2016 = vmatprep.subr.mxu0 0.0
    %2017 = vmatpush2.msra.mxu0 0.0
    %2018 = vmatprep.subr.mxu0 0.0
    %2019 = vmatpush2.msra.mxu0 0.0
    %2020 = vmatprep.subr.mxu0 0.0
    %2021 = vmatpush2.msra.mxu0 0.0
    %2022 = vmatprep.subr.mxu0 0.0
    %2023 = vmatpush2.msra.mxu0 0.0
    %2024 = vmatprep.subr.mxu0 0.0
    %2025 = vmatpush2.msra.mxu0 0.0
    %2026 = vmatprep.subr.mxu0 0.0
    %2027 = vmatpush2.msra.mxu0 0.0
    %2028 = vmatprep.subr.mxu0 0.0
    %2029 = vmatpush2.msra.mxu0 0.0
    %2030 = vmatprep.subr.mxu0 0.0
    %2031 = vmatpush2.msra.mxu0 0.0
    %2032 = vmatprep.subr.mxu0 0.0
    %2033 = vmatpush2.msra.mxu0 0.0
    %2034 = vmatprep.subr.mxu0 0.0
    %2035 = vmatpush2.msra.mxu0 0.0
    %2036 = vmatprep.subr.mxu0 0.0
    %2037 = vmatpush2.msra.mxu0 0.0
    %2038 = vmatprep.subr.mxu0 0.0
    %2039 = vmatpush2.msra.mxu0 0.0
    %2040 = vmatprep.subr.mxu0 0.0
    %2041 = vmatpush2.msra.mxu0 0.0
    %2042 = vmatprep.subr.mxu0 0.0
    %2043 = vmatpush2.msra.mxu0 0.0
    %2044 = vmatprep.subr.mxu0 0.0
    %2045 = vmatpush2.msra.mxu0 0.0
    %2046 = vmatprep.subr.mxu0 0.0
    %2047 = vmatpush2.msra.mxu0 0.0
    %2048 = vmatprep.mubr.f32.mxu0 0.0
    %2049 = vmatmul.mubr.f32.gmra.mxu0 %v1982
    %v2050 = vpop.f32.mrf.mxu0
    %v2051 = vadd.f32 %v886, %v2050
    %v2052 = vpop.f32.mrf.mxu0
    %2053 = vdwg.mxu0
    %v2054 = vadd.f32 %v1975, %v2051
    %v2055 = vxor.u32 %v2054, 2147483648
    %v2056 = vmul.f32 %v2055, 1.442695
    %v2057 = vpow.pop %v2056
    %v2058 = vadd.f32 %v2057, 1.0
    %v2059 = vrcp.pop %v2058
    %v2060 = vmul.f32 1.0, %v2059
    %2062 = vrot.lane.b32.xlu0 %v2051, 96
    %v2063 = vpop.permute.xlu0 %2062
    %v2065 = vmul.f32 %v2060, %v2063
    %2067 = vrot.lane.b32.xlu0 %v2065, 32
    %v2068 = vpop.permute.xlu0 %2067
    %v2070 = vadd.f32 %v1975, %v2068
    %v2071 = vtanh.pop %v2070
    %v2072 = vsub.f32 1.0, %v2060
    %2074 = vrot.lane.b32.xlu0 %v2071, 112
    %v2075 = vpop.permute.xlu0 %2074
    %v2077 = vmul.f32 %v2072, %v2075
    %v2078 = vmul.f32 %v2060, %v1973
    %v2079 = vadd.f32 %v2077, %v2078
    %2081 = vrot.lane.b32.xlu0 %v2079, 112
    %v2082 = vpop.permute.xlu0 %2081
    %v2083 = vsel %vm345, %v2082, 0
    %2085 = vmatprep.subr.mxu0 0.0
    %2086 = vmatpush1.msra.mxu0 0.0
    %2087 = vmatprep.subr.mxu0 0.0
    %2088 = vmatpush1.msra.mxu0 0.0
    %2089 = vmatprep.subr.mxu0 0.0
    %2090 = vmatpush1.msra.mxu0 0.0
    %2091 = vmatprep.subr.mxu0 0.0
    %2092 = vmatpush1.msra.mxu0 0.0
    %2093 = vmatprep.subr.mxu0 0.0
    %2094 = vmatpush1.msra.mxu0 0.0
    %2095 = vmatprep.subr.mxu0 0.0
    %2096 = vmatpush1.msra.mxu0 0.0
    %2097 = vmatprep.subr.mxu0 0.0
    %2098 = vmatpush1.msra.mxu0 0.0
    %2099 = vmatprep.subr.mxu0 0.0
    %2100 = vmatpush1.msra.mxu0 0.0
    %2101 = vmatprep.subr.mxu0 0.0
    %2102 = vmatpush1.msra.mxu0 0.0
    %2103 = vmatprep.subr.mxu0 0.0
    %2104 = vmatpush1.msra.mxu0 0.0
    %2105 = vmatprep.subr.mxu0 0.0
    %2106 = vmatpush1.msra.mxu0 0.0
    %2107 = vmatprep.subr.mxu0 0.0
    %2108 = vmatpush1.msra.mxu0 0.0
    %2109 = vmatprep.subr.mxu0 0.0
    %2110 = vmatpush1.msra.mxu0 0.0
    %2111 = vmatprep.subr.mxu0 0.0
    %2112 = vmatpush1.msra.mxu0 0.0
    %2113 = vmatprep.subr.mxu0 0.0
    %2114 = vmatpush1.msra.mxu0 %v878
    %2115 = vmatprep.subr.mxu0 0.0
    %2116 = vmatpush1.msra.mxu0 %v877
    %2117 = vmatprep.subr.mxu0 0.0
    %2118 = vmatpush2.msra.mxu0 0.0
    %2119 = vmatprep.subr.mxu0 0.0
    %2120 = vmatpush2.msra.mxu0 0.0
    %2121 = vmatprep.subr.mxu0 0.0
    %2122 = vmatpush2.msra.mxu0 0.0
    %2123 = vmatprep.subr.mxu0 0.0
    %2124 = vmatpush2.msra.mxu0 0.0
    %2125 = vmatprep.subr.mxu0 0.0
    %2126 = vmatpush2.msra.mxu0 0.0
    %2127 = vmatprep.subr.mxu0 0.0
    %2128 = vmatpush2.msra.mxu0 0.0
    %2129 = vmatprep.subr.mxu0 0.0
    %2130 = vmatpush2.msra.mxu0 0.0
    %2131 = vmatprep.subr.mxu0 0.0
    %2132 = vmatpush2.msra.mxu0 0.0
    %2133 = vmatprep.subr.mxu0 0.0
    %2134 = vmatpush2.msra.mxu0 0.0
    %2135 = vmatprep.subr.mxu0 0.0
    %2136 = vmatpush2.msra.mxu0 0.0
    %2137 = vmatprep.subr.mxu0 0.0
    %2138 = vmatpush2.msra.mxu0 0.0
    %2139 = vmatprep.subr.mxu0 0.0
    %2140 = vmatpush2.msra.mxu0 0.0
    %2141 = vmatprep.subr.mxu0 0.0
    %2142 = vmatpush2.msra.mxu0 0.0
    %2143 = vmatprep.subr.mxu0 0.0
    %2144 = vmatpush2.msra.mxu0 0.0
    %2145 = vmatprep.subr.mxu0 0.0
    %2146 = vmatpush2.msra.mxu0 0.0
    %2147 = vmatprep.subr.mxu0 0.0
    %2148 = vmatpush2.msra.mxu0 0.0
    %2149 = vmatprep.mubr.f32.mxu0 0.0
    %2150 = vmatmul.mubr.f32.gmra.mxu0 %v2083
    %v2151 = vpop.f32.mrf.mxu0
    %v2152 = vadd.f32 0.0, %v2151
    %v2153 = vpop.f32.mrf.mxu0
    %2154 = vdwg.mxu0
    %2155 = vrot.lane.b32.xlu0 %v2051, 80
    %v2156 = vpop.permute.xlu0 %2155
    %v2158 = vadd.f32 %v2152, %v2156
    %v2159 = vxor.u32 %v2158, 2147483648
    %v2160 = vmul.f32 %v2159, 1.442695
    %v2161 = vpow.pop %v2160
    %v2162 = vadd.f32 %v2161, 1.0
    %v2163 = vrcp.pop %v2162
    %v2164 = vmul.f32 1.0, %v2163
    %v2165 = vadd.f32 %v2152, %v1078
    %2166 = vrot.lane.b32.xlu0 %v2051, 48
    %v2167 = vpop.permute.xlu0 %2166
    %v2169 = vmul.f32 %v2164, %v2167
    %2171 = vrot.lane.b32.xlu0 %v2169, 32
    %v2172 = vpop.permute.xlu0 %2171
    %v2174 = vadd.f32 %v2165, %v2172
    %v2175 = vtanh.pop %v2174
    %v2176 = vsub.f32 1.0, %v2164
    %2178 = vrot.lane.b32.xlu0 %v2175, 112
    %v2179 = vpop.permute.xlu0 %2178
    %v2181 = vmul.f32 %v2176, %v2179
    %v2182 = vmul.f32 %v2164, %v1974
    %v2183 = vadd.f32 %v2181, %v2182
    %vm2184 = vcmp.gt.s32.totalorder %v880, 5
    %v2185 = vsel %vm2184, 1, 0
    %2186 = vset.pattern.permute.xlu0 0
    %2187 = vperm.xlu0 %2186, %v2185
    %v2188 = vpop.permute.xlu0 %2187
    %vm2189 = vcmp.eq.s32.totalorder %v2188, 1
    %v2190 = vsel %vm2189, %v2079, %v1973
    %v2191 = vsel %vm2189, %v2183, %v1974
    %v2192 = vld [vmem:[#allocation2 + $0xc] sm:$0x3]
    %2194 = vrot.lane.b32.xlu0 %v2190, 112
    %v2195 = vpop.permute.xlu0 %2194
    %v2197 = vsel %vm345, %v2195, %v2191
    %v2199 = vsel %vm516, %v2197, 0
    %2201 = vmatprep.subr.mxu0 0.0
    %2202 = vmatpush1.msra.mxu0 0.0
    %2203 = vmatprep.subr.mxu0 0.0
    %2204 = vmatpush1.msra.mxu0 0.0
    %2205 = vmatprep.subr.mxu0 0.0
    %2206 = vmatpush1.msra.mxu0 0.0
    %2207 = vmatprep.subr.mxu0 0.0
    %2208 = vmatpush1.msra.mxu0 0.0
    %2209 = vmatprep.subr.mxu0 0.0
    %2210 = vmatpush1.msra.mxu0 0.0
    %2211 = vmatprep.subr.mxu0 0.0
    %2212 = vmatpush1.msra.mxu0 0.0
    %2213 = vmatprep.subr.mxu0 0.0
    %2214 = vmatpush1.msra.mxu0 0.0
    %2215 = vmatprep.subr.mxu0 0.0
    %2216 = vmatpush1.msra.mxu0 0.0
    %2217 = vmatprep.subr.mxu0 0.0
    %2218 = vmatpush1.msra.mxu0 0.0
    %2219 = vmatprep.subr.mxu0 0.0
    %2220 = vmatpush1.msra.mxu0 0.0
    %2221 = vmatprep.subr.mxu0 0.0
    %2222 = vmatpush1.msra.mxu0 0.0
    %2223 = vmatprep.subr.mxu0 0.0
    %2224 = vmatpush1.msra.mxu0 0.0
    %2225 = vmatprep.subr.mxu0 0.0
    %2226 = vmatpush1.msra.mxu0 %v875
    %2227 = vmatprep.subr.mxu0 0.0
    %2228 = vmatpush1.msra.mxu0 %v874
    %2229 = vmatprep.subr.mxu0 0.0
    %2230 = vmatpush1.msra.mxu0 %v873
    %2231 = vmatprep.subr.mxu0 0.0
    %2232 = vmatpush1.msra.mxu0 %v872
    %2233 = vmatprep.subr.mxu0 0.0
    %2234 = vmatpush2.msra.mxu0 0.0
    %2235 = vmatprep.subr.mxu0 0.0
    %2236 = vmatpush2.msra.mxu0 0.0
    %2237 = vmatprep.subr.mxu0 0.0
    %2238 = vmatpush2.msra.mxu0 0.0
    %2239 = vmatprep.subr.mxu0 0.0
    %2240 = vmatpush2.msra.mxu0 0.0
    %2241 = vmatprep.subr.mxu0 0.0
    %2242 = vmatpush2.msra.mxu0 0.0
    %2243 = vmatprep.subr.mxu0 0.0
    %2244 = vmatpush2.msra.mxu0 0.0
    %2245 = vmatprep.subr.mxu0 0.0
    %2246 = vmatpush2.msra.mxu0 0.0
    %2247 = vmatprep.subr.mxu0 0.0
    %2248 = vmatpush2.msra.mxu0 0.0
    %2249 = vmatprep.subr.mxu0 0.0
    %2250 = vmatpush2.msra.mxu0 0.0
    %2251 = vmatprep.subr.mxu0 0.0
    %2252 = vmatpush2.msra.mxu0 0.0
    %2253 = vmatprep.subr.mxu0 0.0
    %2254 = vmatpush2.msra.mxu0 0.0
    %2255 = vmatprep.subr.mxu0 0.0
    %2256 = vmatpush2.msra.mxu0 0.0
    %2257 = vmatprep.subr.mxu0 0.0
    %2258 = vmatpush2.msra.mxu0 0.0
    %2259 = vmatprep.subr.mxu0 0.0
    %2260 = vmatpush2.msra.mxu0 0.0
    %2261 = vmatprep.subr.mxu0 0.0
    %2262 = vmatpush2.msra.mxu0 0.0
    %2263 = vmatprep.subr.mxu0 0.0
    %2264 = vmatpush2.msra.mxu0 0.0
    %2265 = vmatprep.mubr.f32.mxu0 0.0
    %2266 = vmatmul.mubr.f32.gmra.mxu0 %v2199
    %v2267 = vpop.f32.mrf.mxu0
    %v2268 = vadd.f32 %v886, %v2267
    %v2269 = vpop.f32.mrf.mxu0
    %2270 = vdwg.mxu0
    %v2271 = vadd.f32 %v2192, %v2268
    %v2272 = vxor.u32 %v2271, 2147483648
    %v2273 = vmul.f32 %v2272, 1.442695
    %v2274 = vpow.pop %v2273
    %v2275 = vadd.f32 %v2274, 1.0
    %v2276 = vrcp.pop %v2275
    %v2277 = vmul.f32 1.0, %v2276
    %2279 = vrot.lane.b32.xlu0 %v2268, 96
    %v2280 = vpop.permute.xlu0 %2279
    %v2282 = vmul.f32 %v2277, %v2280
    %2284 = vrot.lane.b32.xlu0 %v2282, 32
    %v2285 = vpop.permute.xlu0 %2284
    %v2287 = vadd.f32 %v2192, %v2285
    %v2288 = vtanh.pop %v2287
    %v2289 = vsub.f32 1.0, %v2277
    %2291 = vrot.lane.b32.xlu0 %v2288, 112
    %v2292 = vpop.permute.xlu0 %2291
    %v2294 = vmul.f32 %v2289, %v2292
    %v2295 = vmul.f32 %v2277, %v2190
    %v2296 = vadd.f32 %v2294, %v2295
    %2298 = vrot.lane.b32.xlu0 %v2296, 112
    %v2299 = vpop.permute.xlu0 %2298
    %v2300 = vsel %vm345, %v2299, 0
    %2302 = vmatprep.subr.mxu0 0.0
    %2303 = vmatpush1.msra.mxu0 0.0
    %2304 = vmatprep.subr.mxu0 0.0
    %2305 = vmatpush1.msra.mxu0 0.0
    %2306 = vmatprep.subr.mxu0 0.0
    %2307 = vmatpush1.msra.mxu0 0.0
    %2308 = vmatprep.subr.mxu0 0.0
    %2309 = vmatpush1.msra.mxu0 0.0
    %2310 = vmatprep.subr.mxu0 0.0
    %2311 = vmatpush1.msra.mxu0 0.0
    %2312 = vmatprep.subr.mxu0 0.0
    %2313 = vmatpush1.msra.mxu0 0.0
    %2314 = vmatprep.subr.mxu0 0.0
    %2315 = vmatpush1.msra.mxu0 0.0
    %2316 = vmatprep.subr.mxu0 0.0
    %2317 = vmatpush1.msra.mxu0 0.0
    %2318 = vmatprep.subr.mxu0 0.0
    %2319 = vmatpush1.msra.mxu0 0.0
    %2320 = vmatprep.subr.mxu0 0.0
    %2321 = vmatpush1.msra.mxu0 0.0
    %2322 = vmatprep.subr.mxu0 0.0
    %2323 = vmatpush1.msra.mxu0 0.0
    %2324 = vmatprep.subr.mxu0 0.0
    %2325 = vmatpush1.msra.mxu0 0.0
    %2326 = vmatprep.subr.mxu0 0.0
    %2327 = vmatpush1.msra.mxu0 0.0
    %2328 = vmatprep.subr.mxu0 0.0
    %2329 = vmatpush1.msra.mxu0 0.0
    %2330 = vmatprep.subr.mxu0 0.0
    %2331 = vmatpush1.msra.mxu0 %v878
    %2332 = vmatprep.subr.mxu0 0.0
    %2333 = vmatpush1.msra.mxu0 %v877
    %2334 = vmatprep.subr.mxu0 0.0
    %2335 = vmatpush2.msra.mxu0 0.0
    %2336 = vmatprep.subr.mxu0 0.0
    %2337 = vmatpush2.msra.mxu0 0.0
    %2338 = vmatprep.subr.mxu0 0.0
    %2339 = vmatpush2.msra.mxu0 0.0
    %2340 = vmatprep.subr.mxu0 0.0
    %2341 = vmatpush2.msra.mxu0 0.0
    %2342 = vmatprep.subr.mxu0 0.0
    %2343 = vmatpush2.msra.mxu0 0.0
    %2344 = vmatprep.subr.mxu0 0.0
    %2345 = vmatpush2.msra.mxu0 0.0
    %2346 = vmatprep.subr.mxu0 0.0
    %2347 = vmatpush2.msra.mxu0 0.0
    %2348 = vmatprep.subr.mxu0 0.0
    %2349 = vmatpush2.msra.mxu0 0.0
    %2350 = vmatprep.subr.mxu0 0.0
    %2351 = vmatpush2.msra.mxu0 0.0
    %2352 = vmatprep.subr.mxu0 0.0
    %2353 = vmatpush2.msra.mxu0 0.0
    %2354 = vmatprep.subr.mxu0 0.0
    %2355 = vmatpush2.msra.mxu0 0.0
    %2356 = vmatprep.subr.mxu0 0.0
    %2357 = vmatpush2.msra.mxu0 0.0
    %2358 = vmatprep.subr.mxu0 0.0
    %2359 = vmatpush2.msra.mxu0 0.0
    %2360 = vmatprep.subr.mxu0 0.0
    %2361 = vmatpush2.msra.mxu0 0.0
    %2362 = vmatprep.subr.mxu0 0.0
    %2363 = vmatpush2.msra.mxu0 0.0
    %2364 = vmatprep.subr.mxu0 0.0
    %2365 = vmatpush2.msra.mxu0 0.0
    %2366 = vmatprep.mubr.f32.mxu0 0.0
    %2367 = vmatmul.mubr.f32.gmra.mxu0 %v2300
    %v2368 = vpop.f32.mrf.mxu0
    %v2369 = vadd.f32 0.0, %v2368
    %v2370 = vpop.f32.mrf.mxu0
    %2371 = vdwg.mxu0
    %2372 = vrot.lane.b32.xlu0 %v2268, 80
    %v2373 = vpop.permute.xlu0 %2372
    %v2375 = vadd.f32 %v2369, %v2373
    %v2376 = vxor.u32 %v2375, 2147483648
    %v2377 = vmul.f32 %v2376, 1.442695
    %v2378 = vpow.pop %v2377
    %v2379 = vadd.f32 %v2378, 1.0
    %v2380 = vrcp.pop %v2379
    %v2381 = vmul.f32 1.0, %v2380
    %v2382 = vadd.f32 %v2369, %v1078
    %2383 = vrot.lane.b32.xlu0 %v2268, 48
    %v2384 = vpop.permute.xlu0 %2383
    %v2386 = vmul.f32 %v2381, %v2384
    %2388 = vrot.lane.b32.xlu0 %v2386, 32
    %v2389 = vpop.permute.xlu0 %2388
    %v2391 = vadd.f32 %v2382, %v2389
    %v2392 = vtanh.pop %v2391
    %v2393 = vsub.f32 1.0, %v2381
    %2395 = vrot.lane.b32.xlu0 %v2392, 112
    %v2396 = vpop.permute.xlu0 %2395
    %v2398 = vmul.f32 %v2393, %v2396
    %v2399 = vmul.f32 %v2381, %v2191
    %v2400 = vadd.f32 %v2398, %v2399
    %vm2401 = vcmp.gt.s32.totalorder %v880, 6
    %v2402 = vsel %vm2401, 1, 0
    %2403 = vset.pattern.permute.xlu0 0
    %2404 = vperm.xlu0 %2403, %v2402
    %v2405 = vpop.permute.xlu0 %2404
    %vm2406 = vcmp.eq.s32.totalorder %v2405, 1
    %v2407 = vsel %vm2406, %v2296, %v2190
    %v2408 = vsel %vm2406, %v2400, %v2191
    %v2409 = vld [vmem:[#allocation2 + $0xe] sm:$0x3]
    %2411 = vrot.lane.b32.xlu0 %v2407, 112
    %v2412 = vpop.permute.xlu0 %2411
    %v2414 = vsel %vm345, %v2412, %v2408
    %v2416 = vsel %vm516, %v2414, 0
    %2418 = vmatprep.subr.mxu0 0.0
    %2419 = vmatpush1.msra.mxu0 0.0
    %2420 = vmatprep.subr.mxu0 0.0
    %2421 = vmatpush1.msra.mxu0 0.0
    %2422 = vmatprep.subr.mxu0 0.0
    %2423 = vmatpush1.msra.mxu0 0.0
    %2424 = vmatprep.subr.mxu0 0.0
    %2425 = vmatpush1.msra.mxu0 0.0
    %2426 = vmatprep.subr.mxu0 0.0
    %2427 = vmatpush1.msra.mxu0 0.0
    %2428 = vmatprep.subr.mxu0 0.0
    %2429 = vmatpush1.msra.mxu0 0.0
    %2430 = vmatprep.subr.mxu0 0.0
    %2431 = vmatpush1.msra.mxu0 0.0
    %2432 = vmatprep.subr.mxu0 0.0
    %2433 = vmatpush1.msra.mxu0 0.0
    %2434 = vmatprep.subr.mxu0 0.0
    %2435 = vmatpush1.msra.mxu0 0.0
    %2436 = vmatprep.subr.mxu0 0.0
    %2437 = vmatpush1.msra.mxu0 0.0
    %2438 = vmatprep.subr.mxu0 0.0
    %2439 = vmatpush1.msra.mxu0 0.0
    %2440 = vmatprep.subr.mxu0 0.0
    %2441 = vmatpush1.msra.mxu0 0.0
    %2442 = vmatprep.subr.mxu0 0.0
    %2443 = vmatpush1.msra.mxu0 %v875
    %2444 = vmatprep.subr.mxu0 0.0
    %2445 = vmatpush1.msra.mxu0 %v874
    %2446 = vmatprep.subr.mxu0 0.0
    %2447 = vmatpush1.msra.mxu0 %v873
    %2448 = vmatprep.subr.mxu0 0.0
    %2449 = vmatpush1.msra.mxu0 %v872
    %2450 = vmatprep.subr.mxu0 0.0
    %2451 = vmatpush2.msra.mxu0 0.0
    %2452 = vmatprep.subr.mxu0 0.0
    %2453 = vmatpush2.msra.mxu0 0.0
    %2454 = vmatprep.subr.mxu0 0.0
    %2455 = vmatpush2.msra.mxu0 0.0
    %2456 = vmatprep.subr.mxu0 0.0
    %2457 = vmatpush2.msra.mxu0 0.0
    %2458 = vmatprep.subr.mxu0 0.0
    %2459 = vmatpush2.msra.mxu0 0.0
    %2460 = vmatprep.subr.mxu0 0.0
    %2461 = vmatpush2.msra.mxu0 0.0
    %2462 = vmatprep.subr.mxu0 0.0
    %2463 = vmatpush2.msra.mxu0 0.0
    %2464 = vmatprep.subr.mxu0 0.0
    %2465 = vmatpush2.msra.mxu0 0.0
    %2466 = vmatprep.subr.mxu0 0.0
    %2467 = vmatpush2.msra.mxu0 0.0
    %2468 = vmatprep.subr.mxu0 0.0
    %2469 = vmatpush2.msra.mxu0 0.0
    %2470 = vmatprep.subr.mxu0 0.0
    %2471 = vmatpush2.msra.mxu0 0.0
    %2472 = vmatprep.subr.mxu0 0.0
    %2473 = vmatpush2.msra.mxu0 0.0
    %2474 = vmatprep.subr.mxu0 0.0
    %2475 = vmatpush2.msra.mxu0 0.0
    %2476 = vmatprep.subr.mxu0 0.0
    %2477 = vmatpush2.msra.mxu0 0.0
    %2478 = vmatprep.subr.mxu0 0.0
    %2479 = vmatpush2.msra.mxu0 0.0
    %2480 = vmatprep.subr.mxu0 0.0
    %2481 = vmatpush2.msra.mxu0 0.0
    %2482 = vmatprep.mubr.f32.mxu0 0.0
    %2483 = vmatmul.mubr.f32.gmra.mxu0 %v2416
    %v2484 = vpop.f32.mrf.mxu0
    %v2485 = vadd.f32 %v886, %v2484
    %v2486 = vpop.f32.mrf.mxu0
    %2487 = vdwg.mxu0
    %v2488 = vadd.f32 %v2409, %v2485
    %v2489 = vxor.u32 %v2488, 2147483648
    %v2490 = vmul.f32 %v2489, 1.442695
    %v2491 = vpow.pop %v2490
    %v2492 = vadd.f32 %v2491, 1.0
    %v2493 = vrcp.pop %v2492
    %v2494 = vmul.f32 1.0, %v2493
    %2496 = vrot.lane.b32.xlu0 %v2485, 96
    %v2497 = vpop.permute.xlu0 %2496
    %v2499 = vmul.f32 %v2494, %v2497
    %2501 = vrot.lane.b32.xlu0 %v2499, 32
    %v2502 = vpop.permute.xlu0 %2501
    %v2504 = vadd.f32 %v2409, %v2502
    %v2505 = vtanh.pop %v2504
    %v2506 = vsub.f32 1.0, %v2494
    %2508 = vrot.lane.b32.xlu0 %v2505, 112
    %v2509 = vpop.permute.xlu0 %2508
    %v2511 = vmul.f32 %v2506, %v2509
    %v2512 = vmul.f32 %v2494, %v2407
    %v2513 = vadd.f32 %v2511, %v2512
    %2515 = vrot.lane.b32.xlu0 %v2513, 112
    %v2516 = vpop.permute.xlu0 %2515
    %v2517 = vsel %vm345, %v2516, 0
    %2519 = vmatprep.subr.mxu0 0.0
    %2520 = vmatpush1.msra.mxu0 0.0
    %2521 = vmatprep.subr.mxu0 0.0
    %2522 = vmatpush1.msra.mxu0 0.0
    %2523 = vmatprep.subr.mxu0 0.0
    %2524 = vmatpush1.msra.mxu0 0.0
    %2525 = vmatprep.subr.mxu0 0.0
    %2526 = vmatpush1.msra.mxu0 0.0
    %2527 = vmatprep.subr.mxu0 0.0
    %2528 = vmatpush1.msra.mxu0 0.0
    %2529 = vmatprep.subr.mxu0 0.0
    %2530 = vmatpush1.msra.mxu0 0.0
    %2531 = vmatprep.subr.mxu0 0.0
    %2532 = vmatpush1.msra.mxu0 0.0
    %2533 = vmatprep.subr.mxu0 0.0
    %2534 = vmatpush1.msra.mxu0 0.0
    %2535 = vmatprep.subr.mxu0 0.0
    %2536 = vmatpush1.msra.mxu0 0.0
    %2537 = vmatprep.subr.mxu0 0.0
    %2538 = vmatpush1.msra.mxu0 0.0
    %2539 = vmatprep.subr.mxu0 0.0
    %2540 = vmatpush1.msra.mxu0 0.0
    %2541 = vmatprep.subr.mxu0 0.0
    %2542 = vmatpush1.msra.mxu0 0.0
    %2543 = vmatprep.subr.mxu0 0.0
    %2544 = vmatpush1.msra.mxu0 0.0
    %2545 = vmatprep.subr.mxu0 0.0
    %2546 = vmatpush1.msra.mxu0 0.0
    %2547 = vmatprep.subr.mxu0 0.0
    %2548 = vmatpush1.msra.mxu0 %v878
    %2549 = vmatprep.subr.mxu0 0.0
    %2550 = vmatpush1.msra.mxu0 %v877
    %2551 = vmatprep.subr.mxu0 0.0
    %2552 = vmatpush2.msra.mxu0 0.0
    %2553 = vmatprep.subr.mxu0 0.0
    %2554 = vmatpush2.msra.mxu0 0.0
    %2555 = vmatprep.subr.mxu0 0.0
    %2556 = vmatpush2.msra.mxu0 0.0
    %2557 = vmatprep.subr.mxu0 0.0
    %2558 = vmatpush2.msra.mxu0 0.0
    %2559 = vmatprep.subr.mxu0 0.0
    %2560 = vmatpush2.msra.mxu0 0.0
    %2561 = vmatprep.subr.mxu0 0.0
    %2562 = vmatpush2.msra.mxu0 0.0
    %2563 = vmatprep.subr.mxu0 0.0
    %2564 = vmatpush2.msra.mxu0 0.0
    %2565 = vmatprep.subr.mxu0 0.0
    %2566 = vmatpush2.msra.mxu0 0.0
    %2567 = vmatprep.subr.mxu0 0.0
    %2568 = vmatpush2.msra.mxu0 0.0
    %2569 = vmatprep.subr.mxu0 0.0
    %2570 = vmatpush2.msra.mxu0 0.0
    %2571 = vmatprep.subr.mxu0 0.0
    %2572 = vmatpush2.msra.mxu0 0.0
    %2573 = vmatprep.subr.mxu0 0.0
    %2574 = vmatpush2.msra.mxu0 0.0
    %2575 = vmatprep.subr.mxu0 0.0
    %2576 = vmatpush2.msra.mxu0 0.0
    %2577 = vmatprep.subr.mxu0 0.0
    %2578 = vmatpush2.msra.mxu0 0.0
    %2579 = vmatprep.subr.mxu0 0.0
    %2580 = vmatpush2.msra.mxu0 0.0
    %2581 = vmatprep.subr.mxu0 0.0
    %2582 = vmatpush2.msra.mxu0 0.0
    %2583 = vmatprep.mubr.f32.mxu0 0.0
    %2584 = vmatmul.mubr.f32.gmra.mxu0 %v2517
    %v2585 = vpop.f32.mrf.mxu0
    %v2586 = vadd.f32 0.0, %v2585
    %v2587 = vpop.f32.mrf.mxu0
    %2588 = vdwg.mxu0
    %2589 = vrot.lane.b32.xlu0 %v2485, 80
    %v2590 = vpop.permute.xlu0 %2589
    %v2592 = vadd.f32 %v2586, %v2590
    %v2593 = vxor.u32 %v2592, 2147483648
    %v2594 = vmul.f32 %v2593, 1.442695
    %v2595 = vpow.pop %v2594
    %v2596 = vadd.f32 %v2595, 1.0
    %v2597 = vrcp.pop %v2596
    %v2598 = vmul.f32 1.0, %v2597
    %v2599 = vadd.f32 %v2586, %v1078
    %2600 = vrot.lane.b32.xlu0 %v2485, 48
    %v2601 = vpop.permute.xlu0 %2600
    %v2603 = vmul.f32 %v2598, %v2601
    %2605 = vrot.lane.b32.xlu0 %v2603, 32
    %v2606 = vpop.permute.xlu0 %2605
    %v2608 = vadd.f32 %v2599, %v2606
    %v2609 = vtanh.pop %v2608
    %v2610 = vsub.f32 1.0, %v2598
    %2612 = vrot.lane.b32.xlu0 %v2609, 112
    %v2613 = vpop.permute.xlu0 %2612
    %v2615 = vmul.f32 %v2610, %v2613
    %v2616 = vmul.f32 %v2598, %v2408
    %v2617 = vadd.f32 %v2615, %v2616
    %vm2618 = vcmp.gt.s32.totalorder %v880, 7
    %v2619 = vsel %vm2618, 1, 0
    %2620 = vset.pattern.permute.xlu0 0
    %2621 = vperm.xlu0 %2620, %v2619
    %v2622 = vpop.permute.xlu0 %2621
    %vm2623 = vcmp.eq.s32.totalorder %v2622, 1
    %v2624 = vsel %vm2623, %v2617, %v2408
    %v2625 = vld [vmem:[%s23] sm:$0xff]
    %v2626 = vld [vmem:[%s24] sm:$0xff]
    %v2627 = vld [vmem:[%s24 + $0x8] sm:$0xff]
    %v2628 = vld [vmem:[%s24 + $0x10] sm:$0xff]
    %v2629 = vld [vmem:[%s24 + $0x18] sm:$0xff]
    %v2631 = vsel %vm516, %v681, 0
    %2633 = vmatprep.subr.mxu0 0.0
    %2634 = vmatpush1.msra.mxu0 0.0
    %2635 = vmatprep.subr.mxu0 0.0
    %2636 = vmatpush1.msra.mxu0 0.0
    %2637 = vmatprep.subr.mxu0 0.0
    %2638 = vmatpush1.msra.mxu0 0.0
    %2639 = vmatprep.subr.mxu0 0.0
    %2640 = vmatpush1.msra.mxu0 0.0
    %2641 = vmatprep.subr.mxu0 0.0
    %2642 = vmatpush1.msra.mxu0 0.0
    %2643 = vmatprep.subr.mxu0 0.0
    %2644 = vmatpush1.msra.mxu0 0.0
    %2645 = vmatprep.subr.mxu0 0.0
    %2646 = vmatpush1.msra.mxu0 0.0
    %2647 = vmatprep.subr.mxu0 0.0
    %2648 = vmatpush1.msra.mxu0 0.0
    %2649 = vmatprep.subr.mxu0 0.0
    %2650 = vmatpush1.msra.mxu0 0.0
    %2651 = vmatprep.subr.mxu0 0.0
    %2652 = vmatpush1.msra.mxu0 0.0
    %2653 = vmatprep.subr.mxu0 0.0
    %2654 = vmatpush1.msra.mxu0 0.0
    %2655 = vmatprep.subr.mxu0 0.0
    %2656 = vmatpush1.msra.mxu0 0.0
    %2657 = vmatprep.subr.mxu0 0.0
    %2658 = vmatpush1.msra.mxu0 %v2629
    %2659 = vmatprep.subr.mxu0 0.0
    %2660 = vmatpush1.msra.mxu0 %v2628
    %2661 = vmatprep.subr.mxu0 0.0
    %2662 = vmatpush1.msra.mxu0 %v2627
    %2663 = vmatprep.subr.mxu0 0.0
    %2664 = vmatpush1.msra.mxu0 %v2626
    %2665 = vmatprep.subr.mxu0 0.0
    %2666 = vmatpush2.msra.mxu0 0.0
    %2667 = vmatprep.subr.mxu0 0.0
    %2668 = vmatpush2.msra.mxu0 0.0
    %2669 = vmatprep.subr.mxu0 0.0
    %2670 = vmatpush2.msra.mxu0 0.0
    %2671 = vmatprep.subr.mxu0 0.0
    %2672 = vmatpush2.msra.mxu0 0.0
    %2673 = vmatprep.subr.mxu0 0.0
    %2674 = vmatpush2.msra.mxu0 0.0
    %2675 = vmatprep.subr.mxu0 0.0
    %2676 = vmatpush2.msra.mxu0 0.0
    %2677 = vmatprep.subr.mxu0 0.0
    %2678 = vmatpush2.msra.mxu0 0.0
    %2679 = vmatprep.subr.mxu0 0.0
    %2680 = vmatpush2.msra.mxu0 0.0
    %2681 = vmatprep.subr.mxu0 0.0
    %2682 = vmatpush2.msra.mxu0 0.0
    %2683 = vmatprep.subr.mxu0 0.0
    %2684 = vmatpush2.msra.mxu0 0.0
    %2685 = vmatprep.subr.mxu0 0.0
    %2686 = vmatpush2.msra.mxu0 0.0
    %2687 = vmatprep.subr.mxu0 0.0
    %2688 = vmatpush2.msra.mxu0 0.0
    %2689 = vmatprep.subr.mxu0 0.0
    %2690 = vmatpush2.msra.mxu0 0.0
    %2691 = vmatprep.subr.mxu0 0.0
    %2692 = vmatpush2.msra.mxu0 0.0
    %2693 = vmatprep.subr.mxu0 0.0
    %2694 = vmatpush2.msra.mxu0 0.0
    %2695 = vmatprep.subr.mxu0 0.0
    %2696 = vmatpush2.msra.mxu0 0.0
    %2697 = vmatprep.mubr.f32.mxu0 0.0
    %2698 = vmatmul.mubr.f32.gmra.mxu0 %v2631
    %v2699 = vpop.f32.mrf.mxu0
    %v2700 = vadd.f32 0.0, %v2699
    %v2701 = vpop.f32.mrf.mxu0
    %2702 = vdwg.mxu0
    %v2704 = vsel %vm102, %v416, 0
    %2706 = vmatprep.subr.mxu0 0.0
    %2707 = vmatpush1.msra.mxu0 0.0
    %2708 = vmatprep.subr.mxu0 0.0
    %2709 = vmatpush1.msra.mxu0 0.0
    %2710 = vmatprep.subr.mxu0 0.0
    %2711 = vmatpush1.msra.mxu0 0.0
    %2712 = vmatprep.subr.mxu0 0.0
    %2713 = vmatpush1.msra.mxu0 0.0
    %2714 = vmatprep.subr.mxu0 0.0
    %2715 = vmatpush1.msra.mxu0 0.0
    %2716 = vmatprep.subr.mxu0 0.0
    %2717 = vmatpush1.msra.mxu0 0.0
    %2718 = vmatprep.subr.mxu0 0.0
    %2719 = vmatpush1.msra.mxu0 0.0
    %2720 = vmatprep.subr.mxu0 0.0
    %2721 = vmatpush1.msra.mxu0 0.0
    %2722 = vmatprep.subr.mxu0 0.0
    %2723 = vmatpush1.msra.mxu0 0.0
    %2724 = vmatprep.subr.mxu0 0.0
    %2725 = vmatpush1.msra.mxu0 0.0
    %2726 = vmatprep.subr.mxu0 0.0
    %2727 = vmatpush1.msra.mxu0 0.0
    %2728 = vmatprep.subr.mxu0 0.0
    %2729 = vmatpush1.msra.mxu0 0.0
    %2730 = vmatprep.subr.mxu0 0.0
    %2731 = vmatpush1.msra.mxu0 0.0
    %2732 = vmatprep.subr.mxu0 0.0
    %2733 = vmatpush1.msra.mxu0 0.0
    %2734 = vmatprep.subr.mxu0 0.0
    %2735 = vmatpush1.msra.mxu0 0.0
    %2736 = vmatprep.subr.mxu0 0.0
    %2737 = vmatpush1.msra.mxu0 %v2625
    %2738 = vmatprep.subr.mxu0 0.0
    %2739 = vmatpush2.msra.mxu0 0.0
    %2740 = vmatprep.subr.mxu0 0.0
    %2741 = vmatpush2.msra.mxu0 0.0
    %2742 = vmatprep.subr.mxu0 0.0
    %2743 = vmatpush2.msra.mxu0 0.0
    %2744 = vmatprep.subr.mxu0 0.0
    %2745 = vmatpush2.msra.mxu0 0.0
    %2746 = vmatprep.subr.mxu0 0.0
    %2747 = vmatpush2.msra.mxu0 0.0
    %2748 = vmatprep.subr.mxu0 0.0
    %2749 = vmatpush2.msra.mxu0 0.0
    %2750 = vmatprep.subr.mxu0 0.0
    %2751 = vmatpush2.msra.mxu0 0.0
    %2752 = vmatprep.subr.mxu0 0.0
    %2753 = vmatpush2.msra.mxu0 0.0
    %2754 = vmatprep.subr.mxu0 0.0
    %2755 = vmatpush2.msra.mxu0 0.0
    %2756 = vmatprep.subr.mxu0 0.0
    %2757 = vmatpush2.msra.mxu0 0.0
    %2758 = vmatprep.subr.mxu0 0.0
    %2759 = vmatpush2.msra.mxu0 0.0
    %2760 = vmatprep.subr.mxu0 0.0
    %2761 = vmatpush2.msra.mxu0 0.0
    %2762 = vmatprep.subr.mxu0 0.0
    %2763 = vmatpush2.msra.mxu0 0.0
    %2764 = vmatprep.subr.mxu0 0.0
    %2765 = vmatpush2.msra.mxu0 0.0
    %2766 = vmatprep.subr.mxu0 0.0
    %2767 = vmatpush2.msra.mxu0 0.0
    %2768 = vmatprep.subr.mxu0 0.0
    %2769 = vmatpush2.msra.mxu0 0.0
    %2770 = vmatprep.mubr.f32.mxu0 0.0
    %2771 = vmatmul.mubr.f32.gmra.mxu0 %v2704
    %v2772 = vpop.f32.mrf.mxu0
    %v2773 = vadd.f32 %v2700, %v2772
    %v2774 = vpop.f32.mrf.mxu0
    %2775 = vdwg.mxu0
    %v2776 = vld [vmem:[%s25] sm:$0xff]
    %v2777 = vld [vmem:[%s25 + $0x8] sm:$0xff]
    %2779 = vrot.lane.b32.xlu0 %v2624, 112
    %v2780 = vpop.permute.xlu0 %2779
    %v2781 = vsel %vm345, %v2780, 0
    %2783 = vmatprep.subr.mxu0 0.0
    %2784 = vmatpush1.msra.mxu0 0.0
    %2785 = vmatprep.subr.mxu0 0.0
    %2786 = vmatpush1.msra.mxu0 0.0
    %2787 = vmatprep.subr.mxu0 0.0
    %2788 = vmatpush1.msra.mxu0 0.0
    %2789 = vmatprep.subr.mxu0 0.0
    %2790 = vmatpush1.msra.mxu0 0.0
    %2791 = vmatprep.subr.mxu0 0.0
    %2792 = vmatpush1.msra.mxu0 0.0
    %2793 = vmatprep.subr.mxu0 0.0
    %2794 = vmatpush1.msra.mxu0 0.0
    %2795 = vmatprep.subr.mxu0 0.0
    %2796 = vmatpush1.msra.mxu0 0.0
    %2797 = vmatprep.subr.mxu0 0.0
    %2798 = vmatpush1.msra.mxu0 0.0
    %2799 = vmatprep.subr.mxu0 0.0
    %2800 = vmatpush1.msra.mxu0 0.0
    %2801 = vmatprep.subr.mxu0 0.0
    %2802 = vmatpush1.msra.mxu0 0.0
    %2803 = vmatprep.subr.mxu0 0.0
    %2804 = vmatpush1.msra.mxu0 0.0
    %2805 = vmatprep.subr.mxu0 0.0
    %2806 = vmatpush1.msra.mxu0 0.0
    %2807 = vmatprep.subr.mxu0 0.0
    %2808 = vmatpush1.msra.mxu0 0.0
    %2809 = vmatprep.subr.mxu0 0.0
    %2810 = vmatpush1.msra.mxu0 0.0
    %2811 = vmatprep.subr.mxu0 0.0
    %2812 = vmatpush1.msra.mxu0 %v2777
    %2813 = vmatprep.subr.mxu0 0.0
    %2814 = vmatpush1.msra.mxu0 %v2776
    %2815 = vmatprep.subr.mxu0 0.0
    %2816 = vmatpush2.msra.mxu0 0.0
    %2817 = vmatprep.subr.mxu0 0.0
    %2818 = vmatpush2.msra.mxu0 0.0
    %2819 = vmatprep.subr.mxu0 0.0
    %2820 = vmatpush2.msra.mxu0 0.0
    %2821 = vmatprep.subr.mxu0 0.0
    %2822 = vmatpush2.msra.mxu0 0.0
    %2823 = vmatprep.subr.mxu0 0.0
    %2824 = vmatpush2.msra.mxu0 0.0
    %2825 = vmatprep.subr.mxu0 0.0
    %2826 = vmatpush2.msra.mxu0 0.0
    %2827 = vmatprep.subr.mxu0 0.0
    %2828 = vmatpush2.msra.mxu0 0.0
    %2829 = vmatprep.subr.mxu0 0.0
    %2830 = vmatpush2.msra.mxu0 0.0
    %2831 = vmatprep.subr.mxu0 0.0
    %2832 = vmatpush2.msra.mxu0 0.0
    %2833 = vmatprep.subr.mxu0 0.0
    %2834 = vmatpush2.msra.mxu0 0.0
    %2835 = vmatprep.subr.mxu0 0.0
    %2836 = vmatpush2.msra.mxu0 0.0
    %2837 = vmatprep.subr.mxu0 0.0
    %2838 = vmatpush2.msra.mxu0 0.0
    %2839 = vmatprep.subr.mxu0 0.0
    %2840 = vmatpush2.msra.mxu0 0.0
    %2841 = vmatprep.subr.mxu0 0.0
    %2842 = vmatpush2.msra.mxu0 0.0
    %2843 = vmatprep.subr.mxu0 0.0
    %2844 = vmatpush2.msra.mxu0 0.0
    %2845 = vmatprep.subr.mxu0 0.0
    %2846 = vmatpush2.msra.mxu0 0.0
    %2847 = vmatprep.mubr.f32.mxu0 0.0
    %2848 = vmatmul.mubr.f32.gmra.mxu0 %v2781
    %v2849 = vpop.f32.mrf.mxu0
    %v2850 = vadd.f32 0.0, %v2849
    %v2851 = vpop.f32.mrf.mxu0
    %2852 = vdwg.mxu0
    %v2853 = vadd.f32 %v2773, %v2850
    %v2854 = vld [vmem:[#allocation3] sm:$0x1]
    %v2856 = vlaneseq
    %v2857 = vshrl.u32 %v2856, 7
    %v2858 = vsub.s32 0, %v2857
    %v2859 = vrot.slane %v2854, %v2858
    %v2861 = vadd.f32 %v2853, %v2859
    %vm2862 = vcmask 1024
    %2863 = vst.msk [vmem:[%s27] sm:$0x3] %vm2862, %v2861
    // Predicated region
    $region114: #{tpu_custom_call.1} parent=1 // pred_check
      _
    $region115: #{tpu_custom_call.1} parent=1 // pred_check_branch
      %2865 = sbr.rel (0) target = $region117
    $region116: #{tpu_custom_call.1} parent=1 // pred_region
      _
    $region117: #{tpu_custom_call.1} parent=1 // pred_fallthru
      _
    // Predicated region
    $region118: #{tpu_custom_call.1} parent=1 // pred_check
      _
    $region119: #{tpu_custom_call.1} parent=1 // pred_check_branch
      %2867 = sbr.rel (0) target = $region121
    $region120: #{tpu_custom_call.1} parent=1 // pred_region
      _
    $region121: #{tpu_custom_call.1} parent=1 // pred_fallthru
      _
    %2868 = vsyncpa [#allocation5], 1

</llo_original>
